<compile_context>
chip_gen: v6e
topology: v6e:2x2x1
jax: 0.10.0
libtpu: 0.0.40
codegen_flags: <defaults>
</compile_context>

<pallas_src>
from functools import partial

import numpy as np
import jax
import jax.numpy as jnp
from jax import lax
from jax.experimental import pallas as pl
from jax.experimental.pallas import tpu as pltpu

NUM_GCN = 6
BN_EPS = 1e-5


# -----------------------------------------------------------------------------
# Fused kernel: refer_reduce_fc -> 6x Rs_GCN -> fc -> softmax
# One grid step processes `tb` batch elements packed along lanes.
# -----------------------------------------------------------------------------
def rsgcn_fused_kernel(x_ref, mask_ref, wr_ref, br_ref, wgtp_ref, bgtp_ref,
                       ww_ref, bw_ref, wfc3_ref, bfc_ref, out_ref,
                       *, tb, n_nodes, inter):
    x = x_ref[0].astype(jnp.float32)                          # (C_in, tb*N)

    # refer_reduce_fc: 1x1 Conv + folded BN + ReLU
    h = jnp.dot(wr_ref[...], x, preferred_element_type=jnp.float32) + br_ref[...]
    h = jnp.maximum(h, 0.0)                                   # (F, tb*N)

    # Host-precomputed 0/1 batch mask (column c = n*tb + b -> batch is c % tb).
    # Loaded once, reused across all 6 layers.  Only needed when tb > 1.
    if tb > 1:
        mask = mask_ref[...]                                  # (cols, cols) f32

    for l in range(NUM_GCN):                                  # static unroll
        # fused g / theta / phi projection: one MXU push instead of three
        # (theta rows are pre-scaled by 1/N host-side, so R is already R/N)
        proj = jnp.dot(wgtp_ref[l], h,
                       preferred_element_type=jnp.float32) + bgtp_ref[l]  # (3I, cols)
        g = proj[0 * inter:1 * inter]                         # (I, cols)
        th = proj[1 * inter:2 * inter]                        # (I, cols)
        ph = proj[2 * inter:3 * inter]                        # (I, cols)

        # R[c, c'] = sum_i theta[i, c] * phi[i, c']   (== torch theta_v @ phi_v / N)
        R = lax.dot_general(th, ph, (((0,), (0,)), ((), ())),
                            preferred_element_type=jnp.float32)
        if tb > 1:
            R = R * mask                                      # zero cross-batch terms
        # y[i, c] = sum_{c'} R[c, c'] * g[i, c']       (== torch (R/N) @ g_v, permuted)
        y = lax.dot_general(g, R, (((1,), (1,)), ((), ())),
                            preferred_element_type=jnp.float32)

        # W branch: 1x1 Conv + folded BN, then residual add
        wy = jnp.dot(ww_ref[l], y,
                     preferred_element_type=jnp.float32) + bw_ref[l]      # (F, cols)
        h = wy + h

    # Final Linear on the per-element flattened features, without reshaping h:
    #   logits[b, o] = sum_{f, n} h[f, n*tb + b] * wfc3[n, f, o]
    out_emd = out_ref.shape[1]
    logits = jnp.zeros((tb, out_emd), jnp.float32)
    for n in range(n_nodes):                                  # static unroll
        hn = h[:, n * tb:(n + 1) * tb]                        # (F, tb) contiguous slice
        logits = logits + lax.dot_general(
            hn, wfc3_ref[n], (((0,), (0,)), ((), ())),
            preferred_element_type=jnp.float32)               # (tb, OUT)
    logits = logits + bfc_ref[...]

    # softmax over dim=1
    m = jnp.max(logits, axis=-1, keepdims=True)
    e = jnp.exp(logits - m)
    out_ref[...] = (e / jnp.sum(e, axis=-1, keepdims=True)).astype(out_ref.dtype)


def _choose_tb(batch, n_nodes):
    """Largest divisor of `batch` whose packed lane width tb*n_nodes stays <= 128."""
    tb = min(batch, max(1, 128 // max(1, n_nodes)))
    while batch % tb != 0:
        tb -= 1
    return max(tb, 1)


def rsgcn_forward(x, p):
    B, c_in, n_nodes = x.shape
    feat = p["wr"].shape[0]
    inter = p["wgtp_k"].shape[1] // 3
    out_emd = p["bfc"].shape[1]

    tb = _choose_tb(B, n_nodes)
    gsteps = B // tb
    cols = tb * n_nodes

    # Wrapper-side layout plumbing (free): pack tb batch elements along lanes, n-major:
    #   xp[g, ch, n*tb + b] = x[g*tb + b, ch, n]
    xp = x.reshape(gsteps, tb, c_in, n_nodes).transpose(0, 2, 3, 1).reshape(
        gsteps, c_in, cols)

    # Host-precomputed 0/1 same-batch mask (constant block index -> DMA'd once).
    col_b = np.arange(cols) % tb
    mask = jnp.asarray((col_b[:, None] == col_b[None, :]).astype(np.float32))

    def full_spec(a):
        nd = a.ndim
        return pl.BlockSpec(a.shape, lambda i, nd=nd: (0,) * nd)

    weight_names = ("wr", "br", "wgtp_k", "bgtp_k", "ww", "bw", "wfc3", "bfc")
    weights = [p[k] for k in weight_names]

    flops_per_elem = (
        2 * feat * c_in * n_nodes
        + NUM_GCN * (2 * 3 * inter * feat * n_nodes
                     + 4 * inter * n_nodes * n_nodes
                     + 2 * feat * inter * n_nodes)
        + 2 * feat * n_nodes * out_emd)
    cost = pl.CostEstimate(
        flops=int(B * flops_per_elem),
        transcendentals=int(B * out_emd),
        bytes_accessed=int(4 * (int(x.size) + B * out_emd + int(mask.size))
                           + 4 * sum(int(w.size) for w in weights)))

    kern = partial(rsgcn_fused_kernel, tb=tb, n_nodes=n_nodes, inter=inter)

    return pl.pallas_call(
        kern,
        out_shape=jax.ShapeDtypeStruct((B, out_emd), x.dtype),
        grid=(gsteps,),
        in_specs=[pl.BlockSpec((1, c_in, cols), lambda i: (i, 0, 0)),
                  full_spec(mask)]
                 + [full_spec(w) for w in weights],
        out_specs=pl.BlockSpec((tb, out_emd), lambda i: (i, 0)),
        compiler_params=pltpu.CompilerParams(
            dimension_semantics=("parallel",)),     # shards batch tiles over v7x TCs
        cost_estimate=cost,
    )(xp, mask, *weights)


# -----------------------------------------------------------------------------
# Deterministic parameter setup (BN folded into 1x1 convs, inference mode)
# -----------------------------------------------------------------------------
def fold_bn(w, b, gamma, beta, mean, var, eps=BN_EPS):
    scale = gamma / jnp.sqrt(var + eps)
    return w * scale[:, None], scale * (b - mean) + beta


def init_params(key, c_in, feat, inter, nodes, out_emd):
    keys = jax.random.split(key, 256)
    ki = iter(keys)

    def nrm(shape, scale=0.2):
        return jax.random.normal(next(ki), shape, dtype=jnp.float32) * scale

    def bn_params(n):
        gamma = 1.0 + nrm((n,), 0.1)
        beta = nrm((n,), 0.1)
        mean = nrm((n,), 0.1)
        var = 1.0 + jax.random.uniform(next(ki), (n,), dtype=jnp.float32)
        return gamma, beta, mean, var

    # refer_reduce_fc: Conv1d(c_in -> feat, 1) + BN(feat) + ReLU
    wr = nrm((feat, c_in))
    br = nrm((feat,))
    wr, br = fold_bn(wr, br, *bn_params(feat))

    wgtp, bgtp, ww, bw = [], [], [], []
    for _ in range(NUM_GCN):
        w_g = nrm((inter, feat)); b_g = nrm((inter,))
        w_t = nrm((inter, feat)); b_t = nrm((inter,))
        w_p = nrm((inter, feat)); b_p = nrm((inter,))
        wgtp.append(jnp.concatenate([w_g, w_t, w_p], axis=0))   # (3I, F)
        bgtp.append(jnp.concatenate([b_g, b_t, b_p], axis=0))   # (3I,)
        w_w = nrm((feat, inter)); b_w = nrm((feat,))
        w_w, b_w = fold_bn(w_w, b_w, *bn_params(feat))
        ww.append(w_w); bw.append(b_w)

    # self.fc: Linear(feat * nodes, out_emd), torch weight layout (OUT, F*N)
    wfc = nrm((out_emd, feat * nodes), 0.1)
    bfc = nrm((out_emd,), 0.1)

    return dict(
        wr=wr, br=br[:, None],
        wgtp=jnp.stack(wgtp), bgtp=jnp.stack(bgtp)[:, :, None],
        ww=jnp.stack(ww), bw=jnp.stack(bw)[:, :, None],
        wfc_t=jnp.transpose(wfc),                                        # (F*N, OUT)
        wfc3=jnp.transpose(wfc.reshape(out_emd, feat, nodes), (2, 1, 0)),  # (N, F, OUT)
        bfc=bfc[None, :],
    )


def prepare_kernel_params(p, n_nodes):
    """Kernel-side weight prep: fold the Rs_GCN 1/N normalisation into theta."""
    inter = p["wgtp"].shape[1] // 3
    s = jnp.concatenate([jnp.ones((inter,), jnp.float32),
                         jnp.full((inter,), 1.0 / n_nodes, jnp.float32),
                         jnp.ones((inter,), jnp.float32)])
    kp = dict(p)
    kp["wgtp_k"] = p["wgtp"] * s[None, :, None]
    kp["bgtp_k"] = p["bgtp"] * s[None, :, None]
    return kp


# -----------------------------------------------------------------------------
# Pure-JAX reference (same folded-BN params, explicit /N) for correctness check
# -----------------------------------------------------------------------------
def reference(x, p):
    B = x.shape[0]
    inter = p["wgtp"].shape[1] // 3
    h = jnp.einsum("fc,bcn->bfn", p["wr"], x) + p["br"][None]
    h = jnp.maximum(h, 0.0)
    n = h.shape[-1]
    for l in range(NUM_GCN):
        proj = jnp.einsum("jf,bfn->bjn", p["wgtp"][l], h) + p["bgtp"][l][None]
        g = proj[:, :inter]
        th = proj[:, inter:2 * inter]
        ph = proj[:, 2 * inter:]
        R = jnp.einsum("bin,bim->bnm", th, ph) / n
        y = jnp.einsum("bnm,bim->bin", R, g)
        wy = jnp.einsum("fi,bin->bfn", p["ww"][l], y) + p["bw"][l][None]
        h = wy + h
    flat = h.reshape(B, -1)                   # == torch .view(B, F*N)
    logits = flat @ p["wfc_t"] + p["bfc"][0]
    return jax.nn.softmax(logits, axis=1)


if __name__ == "__main__":
    B = 2
    INPUT_CHANNEL = 8
    GCN_FEATURE = 32
    REDUCE_GCN_FEATURE = 16
    GCN_NODE_NUM = 8
    OUT_EMD = 16

    key = jax.random.PRNGKey(0)
    kx, kp = jax.random.split(key)
    # refer: (B, input_channel, gcn_node_num)  -- PyTorch Conv1d NCW layout
    x = jax.random.normal(kx, (B, INPUT_CHANNEL, GCN_NODE_NUM), dtype=jnp.float32)

    params = init_params(
        kp, INPUT_CHANNEL, GCN_FEATURE, REDUCE_GCN_FEATURE, GCN_NODE_NUM, OUT_EMD)
    kparams = prepare_kernel_params(params, GCN_NODE_NUM)

    out = rsgcn_forward(x, kparams)
    out = jax.block_until_ready(out)

    ref = reference(x, params)
    assert out.shape == (B, OUT_EMD)
    assert jnp.allclose(jnp.sum(out, axis=1), 1.0, atol=1e-4)
    assert jnp.allclose(out, ref, atol=1e-4, rtol=1e-4)
    print("KERNEL_OK")
</pallas_src>

<mosaic_0001>
module attributes {stable_mosaic.version = 11 : i64} {
  func.func @rsgcn_fused_kernel(%arg0: i32, %arg1: memref<1x8x16xf32, #tpu.memory_space<vmem>>, %arg2: memref<16x16xf32, #tpu.memory_space<vmem>>, %arg3: memref<32x8xf32, #tpu.memory_space<vmem>>, %arg4: memref<32x1xf32, #tpu.memory_space<vmem>>, %arg5: memref<6x48x32xf32, #tpu.memory_space<vmem>>, %arg6: memref<6x48x1xf32, #tpu.memory_space<vmem>>, %arg7: memref<6x32x16xf32, #tpu.memory_space<vmem>>, %arg8: memref<6x32x1xf32, #tpu.memory_space<vmem>>, %arg9: memref<8x32x16xf32, #tpu.memory_space<vmem>>, %arg10: memref<1x16xf32, #tpu.memory_space<vmem>>, %arg11: memref<2x16xf32, #tpu.memory_space<vmem>>) attributes {dimension_semantics = [#tpu.dimension_semantics<parallel>], iteration_bounds = array<i64: 1>, scalar_prefetch = 0 : i64, scratch_operands = 0 : i64, tpu.core_type = #tpu.core_type<tc>, window_params = [{transform_indices = @transform_0, window_bounds = array<i64: 1, 8, 16>}, {pipeline_mode = #tpu.pipeline_mode<synchronous>, transform_indices = @transform_1, window_bounds = array<i64: 16, 16>}, {pipeline_mode = #tpu.pipeline_mode<synchronous>, transform_indices = @transform_2, window_bounds = array<i64: 32, 8>}, {pipeline_mode = #tpu.pipeline_mode<synchronous>, transform_indices = @transform_3, window_bounds = array<i64: 32, 1>}, {pipeline_mode = #tpu.pipeline_mode<synchronous>, transform_indices = @transform_4, window_bounds = array<i64: 6, 48, 32>}, {pipeline_mode = #tpu.pipeline_mode<synchronous>, transform_indices = @transform_5, window_bounds = array<i64: 6, 48, 1>}, {pipeline_mode = #tpu.pipeline_mode<synchronous>, transform_indices = @transform_6, window_bounds = array<i64: 6, 32, 16>}, {pipeline_mode = #tpu.pipeline_mode<synchronous>, transform_indices = @transform_7, window_bounds = array<i64: 6, 32, 1>}, {pipeline_mode = #tpu.pipeline_mode<synchronous>, transform_indices = @transform_8, window_bounds = array<i64: 8, 32, 16>}, {pipeline_mode = #tpu.pipeline_mode<synchronous>, transform_indices = @transform_9, window_bounds = array<i64: 1, 16>}, {transform_indices = @transform_10, window_bounds = array<i64: 2, 16>}]} {
    %c0 = arith.constant 0 : index
    %c0_0 = arith.constant 0 : index
    %c0_1 = arith.constant 0 : index
    %0 = vector.load %arg1[%c0, %c0_0, %c0_1] : memref<1x8x16xf32, #tpu.memory_space<vmem>>, vector<1x8x16xf32>
    %1 = vector.shape_cast %0 : vector<1x8x16xf32> to vector<8x16xf32>
    %c0_2 = arith.constant 0 : index
    %c0_3 = arith.constant 0 : index
    %2 = vector.load %arg3[%c0_2, %c0_3] : memref<32x8xf32, #tpu.memory_space<vmem>>, vector<32x8xf32>
    %cst = arith.constant dense<0.000000e+00> : vector<32x16xf32>
    %3 = tpu.matmul %2, %1, %cst {dimension_numbers = #tpu.dot_dimension_numbers<[1], [0], [0], [1], [0, 0, 1, 1], [], []>} : vector<32x8xf32>, vector<8x16xf32>, vector<32x16xf32> -> vector<32x16xf32>
    %c0_4 = arith.constant 0 : index
    %c0_5 = arith.constant 0 : index
    %4 = vector.load %arg4[%c0_4, %c0_5] : memref<32x1xf32, #tpu.memory_space<vmem>>, vector<32x1xf32>
    %5 = vector.broadcast %4 : vector<32x1xf32> to vector<32x16xf32>
    %6 = arith.addf %3, %5 : vector<32x16xf32>
    %cst_6 = arith.constant 0.000000e+00 : f32
    %7 = vector.broadcast %cst_6 : f32 to vector<32x16xf32>
    %8 = arith.maximumf %6, %7 : vector<32x16xf32>
    %c0_7 = arith.constant 0 : index
    %c0_8 = arith.constant 0 : index
    %9 = vector.load %arg2[%c0_7, %c0_8] : memref<16x16xf32, #tpu.memory_space<vmem>>, vector<16x16xf32>
    %c0_9 = arith.constant 0 : index
    %c0_10 = arith.constant 0 : index
    %c0_11 = arith.constant 0 : index
    %10 = vector.load %arg5[%c0_9, %c0_10, %c0_11] : memref<6x48x32xf32, #tpu.memory_space<vmem>>, vector<1x48x32xf32>
    %11 = vector.shape_cast %10 : vector<1x48x32xf32> to vector<48x32xf32>
    %cst_12 = arith.constant dense<0.000000e+00> : vector<48x16xf32>
    %12 = tpu.matmul %11, %8, %cst_12 {dimension_numbers = #tpu.dot_dimension_numbers<[1], [0], [0], [1], [0, 0, 1, 1], [], []>} : vector<48x32xf32>, vector<32x16xf32>, vector<48x16xf32> -> vector<48x16xf32>
    %c0_13 = arith.constant 0 : index
    %c0_14 = arith.constant 0 : index
    %c0_15 = arith.constant 0 : index
    %13 = vector.load %arg6[%c0_13, %c0_14, %c0_15] : memref<6x48x1xf32, #tpu.memory_space<vmem>>, vector<1x48x1xf32>
    %14 = vector.shape_cast %13 : vector<1x48x1xf32> to vector<48x1xf32>
    %15 = vector.broadcast %14 : vector<48x1xf32> to vector<48x16xf32>
    %16 = arith.addf %12, %15 : vector<48x16xf32>
    %17 = vector.extract_strided_slice %16 {offsets = [0, 0], sizes = [16, 16], strides = [1, 1]} : vector<48x16xf32> to vector<16x16xf32>
    %18 = vector.extract_strided_slice %16 {offsets = [16, 0], sizes = [16, 16], strides = [1, 1]} : vector<48x16xf32> to vector<16x16xf32>
    %19 = vector.extract_strided_slice %16 {offsets = [32, 0], sizes = [16, 16], strides = [1, 1]} : vector<48x16xf32> to vector<16x16xf32>
    %cst_16 = arith.constant dense<0.000000e+00> : vector<16x16xf32>
    %20 = tpu.matmul %18, %19, %cst_16 {dimension_numbers = #tpu.dot_dimension_numbers<[0], [0], [1], [1], [0, 1, 1, 1], [], []>} : vector<16x16xf32>, vector<16x16xf32>, vector<16x16xf32> -> vector<16x16xf32>
    %21 = arith.mulf %20, %9 : vector<16x16xf32>
    %cst_17 = arith.constant dense<0.000000e+00> : vector<16x16xf32>
    %22 = tpu.matmul %17, %21, %cst_17 {dimension_numbers = #tpu.dot_dimension_numbers<[1], [1], [0], [0], [0, 0, 1, 0], [], []>} : vector<16x16xf32>, vector<16x16xf32>, vector<16x16xf32> -> vector<16x16xf32>
    %c0_18 = arith.constant 0 : index
    %c0_19 = arith.constant 0 : index
    %c0_20 = arith.constant 0 : index
    %23 = vector.load %arg7[%c0_18, %c0_19, %c0_20] : memref<6x32x16xf32, #tpu.memory_space<vmem>>, vector<1x32x16xf32>
    %24 = vector.shape_cast %23 : vector<1x32x16xf32> to vector<32x16xf32>
    %cst_21 = arith.constant dense<0.000000e+00> : vector<32x16xf32>
    %25 = tpu.matmul %24, %22, %cst_21 {dimension_numbers = #tpu.dot_dimension_numbers<[1], [0], [0], [1], [0, 0, 1, 1], [], []>} : vector<32x16xf32>, vector<16x16xf32>, vector<32x16xf32> -> vector<32x16xf32>
    %c0_22 = arith.constant 0 : index
    %c0_23 = arith.constant 0 : index
    %c0_24 = arith.constant 0 : index
    %26 = vector.load %arg8[%c0_22, %c0_23, %c0_24] : memref<6x32x1xf32, #tpu.memory_space<vmem>>, vector<1x32x1xf32>
    %27 = vector.shape_cast %26 : vector<1x32x1xf32> to vector<32x1xf32>
    %28 = vector.broadcast %27 : vector<32x1xf32> to vector<32x16xf32>
    %29 = arith.addf %25, %28 : vector<32x16xf32>
    %30 = arith.addf %29, %8 : vector<32x16xf32>
    %c1 = arith.constant 1 : index
    %c0_25 = arith.constant 0 : index
    %c0_26 = arith.constant 0 : index
    %31 = vector.load %arg5[%c1, %c0_25, %c0_26] : memref<6x48x32xf32, #tpu.memory_space<vmem>>, vector<1x48x32xf32>
    %32 = vector.shape_cast %31 : vector<1x48x32xf32> to vector<48x32xf32>
    %cst_27 = arith.constant dense<0.000000e+00> : vector<48x16xf32>
    %33 = tpu.matmul %32, %30, %cst_27 {dimension_numbers = #tpu.dot_dimension_numbers<[1], [0], [0], [1], [0, 0, 1, 1], [], []>} : vector<48x32xf32>, vector<32x16xf32>, vector<48x16xf32> -> vector<48x16xf32>
    %c1_28 = arith.constant 1 : index
    %c0_29 = arith.constant 0 : index
    %c0_30 = arith.constant 0 : index
    %34 = vector.load %arg6[%c1_28, %c0_29, %c0_30] : memref<6x48x1xf32, #tpu.memory_space<vmem>>, vector<1x48x1xf32>
    %35 = vector.shape_cast %34 : vector<1x48x1xf32> to vector<48x1xf32>
    %36 = vector.broadcast %35 : vector<48x1xf32> to vector<48x16xf32>
    %37 = arith.addf %33, %36 : vector<48x16xf32>
    %38 = vector.extract_strided_slice %37 {offsets = [0, 0], sizes = [16, 16], strides = [1, 1]} : vector<48x16xf32> to vector<16x16xf32>
    %39 = vector.extract_strided_slice %37 {offsets = [16, 0], sizes = [16, 16], strides = [1, 1]} : vector<48x16xf32> to vector<16x16xf32>
    %40 = vector.extract_strided_slice %37 {offsets = [32, 0], sizes = [16, 16], strides = [1, 1]} : vector<48x16xf32> to vector<16x16xf32>
    %cst_31 = arith.constant dense<0.000000e+00> : vector<16x16xf32>
    %41 = tpu.matmul %39, %40, %cst_31 {dimension_numbers = #tpu.dot_dimension_numbers<[0], [0], [1], [1], [0, 1, 1, 1], [], []>} : vector<16x16xf32>, vector<16x16xf32>, vector<16x16xf32> -> vector<16x16xf32>
    %42 = arith.mulf %41, %9 : vector<16x16xf32>
    %cst_32 = arith.constant dense<0.000000e+00> : vector<16x16xf32>
    %43 = tpu.matmul %38, %42, %cst_32 {dimension_numbers = #tpu.dot_dimension_numbers<[1], [1], [0], [0], [0, 0, 1, 0], [], []>} : vector<16x16xf32>, vector<16x16xf32>, vector<16x16xf32> -> vector<16x16xf32>
    %c1_33 = arith.constant 1 : index
    %c0_34 = arith.constant 0 : index
    %c0_35 = arith.constant 0 : index
    %44 = vector.load %arg7[%c1_33, %c0_34, %c0_35] : memref<6x32x16xf32, #tpu.memory_space<vmem>>, vector<1x32x16xf32>
    %45 = vector.shape_cast %44 : vector<1x32x16xf32> to vector<32x16xf32>
    %cst_36 = arith.constant dense<0.000000e+00> : vector<32x16xf32>
    %46 = tpu.matmul %45, %43, %cst_36 {dimension_numbers = #tpu.dot_dimension_numbers<[1], [0], [0], [1], [0, 0, 1, 1], [], []>} : vector<32x16xf32>, vector<16x16xf32>, vector<32x16xf32> -> vector<32x16xf32>
    %c1_37 = arith.constant 1 : index
    %c0_38 = arith.constant 0 : index
    %c0_39 = arith.constant 0 : index
    %47 = vector.load %arg8[%c1_37, %c0_38, %c0_39] : memref<6x32x1xf32, #tpu.memory_space<vmem>>, vector<1x32x1xf32>
    %48 = vector.shape_cast %47 : vector<1x32x1xf32> to vector<32x1xf32>
    %49 = vector.broadcast %48 : vector<32x1xf32> to vector<32x16xf32>
    %50 = arith.addf %46, %49 : vector<32x16xf32>
    %51 = arith.addf %50, %30 : vector<32x16xf32>
    %c2 = arith.constant 2 : index
    %c0_40 = arith.constant 0 : index
    %c0_41 = arith.constant 0 : index
    %52 = vector.load %arg5[%c2, %c0_40, %c0_41] : memref<6x48x32xf32, #tpu.memory_space<vmem>>, vector<1x48x32xf32>
    %53 = vector.shape_cast %52 : vector<1x48x32xf32> to vector<48x32xf32>
    %cst_42 = arith.constant dense<0.000000e+00> : vector<48x16xf32>
    %54 = tpu.matmul %53, %51, %cst_42 {dimension_numbers = #tpu.dot_dimension_numbers<[1], [0], [0], [1], [0, 0, 1, 1], [], []>} : vector<48x32xf32>, vector<32x16xf32>, vector<48x16xf32> -> vector<48x16xf32>
    %c2_43 = arith.constant 2 : index
    %c0_44 = arith.constant 0 : index
    %c0_45 = arith.constant 0 : index
    %55 = vector.load %arg6[%c2_43, %c0_44, %c0_45] : memref<6x48x1xf32, #tpu.memory_space<vmem>>, vector<1x48x1xf32>
    %56 = vector.shape_cast %55 : vector<1x48x1xf32> to vector<48x1xf32>
    %57 = vector.broadcast %56 : vector<48x1xf32> to vector<48x16xf32>
    %58 = arith.addf %54, %57 : vector<48x16xf32>
    %59 = vector.extract_strided_slice %58 {offsets = [0, 0], sizes = [16, 16], strides = [1, 1]} : vector<48x16xf32> to vector<16x16xf32>
    %60 = vector.extract_strided_slice %58 {offsets = [16, 0], sizes = [16, 16], strides = [1, 1]} : vector<48x16xf32> to vector<16x16xf32>
    %61 = vector.extract_strided_slice %58 {offsets = [32, 0], sizes = [16, 16], strides = [1, 1]} : vector<48x16xf32> to vector<16x16xf32>
    %cst_46 = arith.constant dense<0.000000e+00> : vector<16x16xf32>
    %62 = tpu.matmul %60, %61, %cst_46 {dimension_numbers = #tpu.dot_dimension_numbers<[0], [0], [1], [1], [0, 1, 1, 1], [], []>} : vector<16x16xf32>, vector<16x16xf32>, vector<16x16xf32> -> vector<16x16xf32>
    %63 = arith.mulf %62, %9 : vector<16x16xf32>
    %cst_47 = arith.constant dense<0.000000e+00> : vector<16x16xf32>
    %64 = tpu.matmul %59, %63, %cst_47 {dimension_numbers = #tpu.dot_dimension_numbers<[1], [1], [0], [0], [0, 0, 1, 0], [], []>} : vector<16x16xf32>, vector<16x16xf32>, vector<16x16xf32> -> vector<16x16xf32>
    %c2_48 = arith.constant 2 : index
    %c0_49 = arith.constant 0 : index
    %c0_50 = arith.constant 0 : index
    %65 = vector.load %arg7[%c2_48, %c0_49, %c0_50] : memref<6x32x16xf32, #tpu.memory_space<vmem>>, vector<1x32x16xf32>
    %66 = vector.shape_cast %65 : vector<1x32x16xf32> to vector<32x16xf32>
    %cst_51 = arith.constant dense<0.000000e+00> : vector<32x16xf32>
    %67 = tpu.matmul %66, %64, %cst_51 {dimension_numbers = #tpu.dot_dimension_numbers<[1], [0], [0], [1], [0, 0, 1, 1], [], []>} : vector<32x16xf32>, vector<16x16xf32>, vector<32x16xf32> -> vector<32x16xf32>
    %c2_52 = arith.constant 2 : index
    %c0_53 = arith.constant 0 : index
    %c0_54 = arith.constant 0 : index
    %68 = vector.load %arg8[%c2_52, %c0_53, %c0_54] : memref<6x32x1xf32, #tpu.memory_space<vmem>>, vector<1x32x1xf32>
    %69 = vector.shape_cast %68 : vector<1x32x1xf32> to vector<32x1xf32>
    %70 = vector.broadcast %69 : vector<32x1xf32> to vector<32x16xf32>
    %71 = arith.addf %67, %70 : vector<32x16xf32>
    %72 = arith.addf %71, %51 : vector<32x16xf32>
    %c3 = arith.constant 3 : index
    %c0_55 = arith.constant 0 : index
    %c0_56 = arith.constant 0 : index
    %73 = vector.load %arg5[%c3, %c0_55, %c0_56] : memref<6x48x32xf32, #tpu.memory_space<vmem>>, vector<1x48x32xf32>
    %74 = vector.shape_cast %73 : vector<1x48x32xf32> to vector<48x32xf32>
    %cst_57 = arith.constant dense<0.000000e+00> : vector<48x16xf32>
    %75 = tpu.matmul %74, %72, %cst_57 {dimension_numbers = #tpu.dot_dimension_numbers<[1], [0], [0], [1], [0, 0, 1, 1], [], []>} : vector<48x32xf32>, vector<32x16xf32>, vector<48x16xf32> -> vector<48x16xf32>
    %c3_58 = arith.constant 3 : index
    %c0_59 = arith.constant 0 : index
    %c0_60 = arith.constant 0 : index
    %76 = vector.load %arg6[%c3_58, %c0_59, %c0_60] : memref<6x48x1xf32, #tpu.memory_space<vmem>>, vector<1x48x1xf32>
    %77 = vector.shape_cast %76 : vector<1x48x1xf32> to vector<48x1xf32>
    %78 = vector.broadcast %77 : vector<48x1xf32> to vector<48x16xf32>
    %79 = arith.addf %75, %78 : vector<48x16xf32>
    %80 = vector.extract_strided_slice %79 {offsets = [0, 0], sizes = [16, 16], strides = [1, 1]} : vector<48x16xf32> to vector<16x16xf32>
    %81 = vector.extract_strided_slice %79 {offsets = [16, 0], sizes = [16, 16], strides = [1, 1]} : vector<48x16xf32> to vector<16x16xf32>
    %82 = vector.extract_strided_slice %79 {offsets = [32, 0], sizes = [16, 16], strides = [1, 1]} : vector<48x16xf32> to vector<16x16xf32>
    %cst_61 = arith.constant dense<0.000000e+00> : vector<16x16xf32>
    %83 = tpu.matmul %81, %82, %cst_61 {dimension_numbers = #tpu.dot_dimension_numbers<[0], [0], [1], [1], [0, 1, 1, 1], [], []>} : vector<16x16xf32>, vector<16x16xf32>, vector<16x16xf32> -> vector<16x16xf32>
    %84 = arith.mulf %83, %9 : vector<16x16xf32>
    %cst_62 = arith.constant dense<0.000000e+00> : vector<16x16xf32>
    %85 = tpu.matmul %80, %84, %cst_62 {dimension_numbers = #tpu.dot_dimension_numbers<[1], [1], [0], [0], [0, 0, 1, 0], [], []>} : vector<16x16xf32>, vector<16x16xf32>, vector<16x16xf32> -> vector<16x16xf32>
    %c3_63 = arith.constant 3 : index
    %c0_64 = arith.constant 0 : index
    %c0_65 = arith.constant 0 : index
    %86 = vector.load %arg7[%c3_63, %c0_64, %c0_65] : memref<6x32x16xf32, #tpu.memory_space<vmem>>, vector<1x32x16xf32>
    %87 = vector.shape_cast %86 : vector<1x32x16xf32> to vector<32x16xf32>
    %cst_66 = arith.constant dense<0.000000e+00> : vector<32x16xf32>
    %88 = tpu.matmul %87, %85, %cst_66 {dimension_numbers = #tpu.dot_dimension_numbers<[1], [0], [0], [1], [0, 0, 1, 1], [], []>} : vector<32x16xf32>, vector<16x16xf32>, vector<32x16xf32> -> vector<32x16xf32>
    %c3_67 = arith.constant 3 : index
    %c0_68 = arith.constant 0 : index
    %c0_69 = arith.constant 0 : index
    %89 = vector.load %arg8[%c3_67, %c0_68, %c0_69] : memref<6x32x1xf32, #tpu.memory_space<vmem>>, vector<1x32x1xf32>
    %90 = vector.shape_cast %89 : vector<1x32x1xf32> to vector<32x1xf32>
    %91 = vector.broadcast %90 : vector<32x1xf32> to vector<32x16xf32>
    %92 = arith.addf %88, %91 : vector<32x16xf32>
    %93 = arith.addf %92, %72 : vector<32x16xf32>
    %c4 = arith.constant 4 : index
    %c0_70 = arith.constant 0 : index
    %c0_71 = arith.constant 0 : index
    %94 = vector.load %arg5[%c4, %c0_70, %c0_71] : memref<6x48x32xf32, #tpu.memory_space<vmem>>, vector<1x48x32xf32>
    %95 = vector.shape_cast %94 : vector<1x48x32xf32> to vector<48x32xf32>
    %cst_72 = arith.constant dense<0.000000e+00> : vector<48x16xf32>
    %96 = tpu.matmul %95, %93, %cst_72 {dimension_numbers = #tpu.dot_dimension_numbers<[1], [0], [0], [1], [0, 0, 1, 1], [], []>} : vector<48x32xf32>, vector<32x16xf32>, vector<48x16xf32> -> vector<48x16xf32>
    %c4_73 = arith.constant 4 : index
    %c0_74 = arith.constant 0 : index
    %c0_75 = arith.constant 0 : index
    %97 = vector.load %arg6[%c4_73, %c0_74, %c0_75] : memref<6x48x1xf32, #tpu.memory_space<vmem>>, vector<1x48x1xf32>
    %98 = vector.shape_cast %97 : vector<1x48x1xf32> to vector<48x1xf32>
    %99 = vector.broadcast %98 : vector<48x1xf32> to vector<48x16xf32>
    %100 = arith.addf %96, %99 : vector<48x16xf32>
    %101 = vector.extract_strided_slice %100 {offsets = [0, 0], sizes = [16, 16], strides = [1, 1]} : vector<48x16xf32> to vector<16x16xf32>
    %102 = vector.extract_strided_slice %100 {offsets = [16, 0], sizes = [16, 16], strides = [1, 1]} : vector<48x16xf32> to vector<16x16xf32>
    %103 = vector.extract_strided_slice %100 {offsets = [32, 0], sizes = [16, 16], strides = [1, 1]} : vector<48x16xf32> to vector<16x16xf32>
    %cst_76 = arith.constant dense<0.000000e+00> : vector<16x16xf32>
    %104 = tpu.matmul %102, %103, %cst_76 {dimension_numbers = #tpu.dot_dimension_numbers<[0], [0], [1], [1], [0, 1, 1, 1], [], []>} : vector<16x16xf32>, vector<16x16xf32>, vector<16x16xf32> -> vector<16x16xf32>
    %105 = arith.mulf %104, %9 : vector<16x16xf32>
    %cst_77 = arith.constant dense<0.000000e+00> : vector<16x16xf32>
    %106 = tpu.matmul %101, %105, %cst_77 {dimension_numbers = #tpu.dot_dimension_numbers<[1], [1], [0], [0], [0, 0, 1, 0], [], []>} : vector<16x16xf32>, vector<16x16xf32>, vector<16x16xf32> -> vector<16x16xf32>
    %c4_78 = arith.constant 4 : index
    %c0_79 = arith.constant 0 : index
    %c0_80 = arith.constant 0 : index
    %107 = vector.load %arg7[%c4_78, %c0_79, %c0_80] : memref<6x32x16xf32, #tpu.memory_space<vmem>>, vector<1x32x16xf32>
    %108 = vector.shape_cast %107 : vector<1x32x16xf32> to vector<32x16xf32>
    %cst_81 = arith.constant dense<0.000000e+00> : vector<32x16xf32>
    %109 = tpu.matmul %108, %106, %cst_81 {dimension_numbers = #tpu.dot_dimension_numbers<[1], [0], [0], [1], [0, 0, 1, 1], [], []>} : vector<32x16xf32>, vector<16x16xf32>, vector<32x16xf32> -> vector<32x16xf32>
    %c4_82 = arith.constant 4 : index
    %c0_83 = arith.constant 0 : index
    %c0_84 = arith.constant 0 : index
    %110 = vector.load %arg8[%c4_82, %c0_83, %c0_84] : memref<6x32x1xf32, #tpu.memory_space<vmem>>, vector<1x32x1xf32>
    %111 = vector.shape_cast %110 : vector<1x32x1xf32> to vector<32x1xf32>
    %112 = vector.broadcast %111 : vector<32x1xf32> to vector<32x16xf32>
    %113 = arith.addf %109, %112 : vector<32x16xf32>
    %114 = arith.addf %113, %93 : vector<32x16xf32>
    %c5 = arith.constant 5 : index
    %c0_85 = arith.constant 0 : index
    %c0_86 = arith.constant 0 : index
    %115 = vector.load %arg5[%c5, %c0_85, %c0_86] : memref<6x48x32xf32, #tpu.memory_space<vmem>>, vector<1x48x32xf32>
    %116 = vector.shape_cast %115 : vector<1x48x32xf32> to vector<48x32xf32>
    %cst_87 = arith.constant dense<0.000000e+00> : vector<48x16xf32>
    %117 = tpu.matmul %116, %114, %cst_87 {dimension_numbers = #tpu.dot_dimension_numbers<[1], [0], [0], [1], [0, 0, 1, 1], [], []>} : vector<48x32xf32>, vector<32x16xf32>, vector<48x16xf32> -> vector<48x16xf32>
    %c5_88 = arith.constant 5 : index
    %c0_89 = arith.constant 0 : index
    %c0_90 = arith.constant 0 : index
    %118 = vector.load %arg6[%c5_88, %c0_89, %c0_90] : memref<6x48x1xf32, #tpu.memory_space<vmem>>, vector<1x48x1xf32>
    %119 = vector.shape_cast %118 : vector<1x48x1xf32> to vector<48x1xf32>
    %120 = vector.broadcast %119 : vector<48x1xf32> to vector<48x16xf32>
    %121 = arith.addf %117, %120 : vector<48x16xf32>
    %122 = vector.extract_strided_slice %121 {offsets = [0, 0], sizes = [16, 16], strides = [1, 1]} : vector<48x16xf32> to vector<16x16xf32>
    %123 = vector.extract_strided_slice %121 {offsets = [16, 0], sizes = [16, 16], strides = [1, 1]} : vector<48x16xf32> to vector<16x16xf32>
    %124 = vector.extract_strided_slice %121 {offsets = [32, 0], sizes = [16, 16], strides = [1, 1]} : vector<48x16xf32> to vector<16x16xf32>
    %cst_91 = arith.constant dense<0.000000e+00> : vector<16x16xf32>
    %125 = tpu.matmul %123, %124, %cst_91 {dimension_numbers = #tpu.dot_dimension_numbers<[0], [0], [1], [1], [0, 1, 1, 1], [], []>} : vector<16x16xf32>, vector<16x16xf32>, vector<16x16xf32> -> vector<16x16xf32>
    %126 = arith.mulf %125, %9 : vector<16x16xf32>
    %cst_92 = arith.constant dense<0.000000e+00> : vector<16x16xf32>
    %127 = tpu.matmul %122, %126, %cst_92 {dimension_numbers = #tpu.dot_dimension_numbers<[1], [1], [0], [0], [0, 0, 1, 0], [], []>} : vector<16x16xf32>, vector<16x16xf32>, vector<16x16xf32> -> vector<16x16xf32>
    %c5_93 = arith.constant 5 : index
    %c0_94 = arith.constant 0 : index
    %c0_95 = arith.constant 0 : index
    %128 = vector.load %arg7[%c5_93, %c0_94, %c0_95] : memref<6x32x16xf32, #tpu.memory_space<vmem>>, vector<1x32x16xf32>
    %129 = vector.shape_cast %128 : vector<1x32x16xf32> to vector<32x16xf32>
    %cst_96 = arith.constant dense<0.000000e+00> : vector<32x16xf32>
    %130 = tpu.matmul %129, %127, %cst_96 {dimension_numbers = #tpu.dot_dimension_numbers<[1], [0], [0], [1], [0, 0, 1, 1], [], []>} : vector<32x16xf32>, vector<16x16xf32>, vector<32x16xf32> -> vector<32x16xf32>
    %c5_97 = arith.constant 5 : index
    %c0_98 = arith.constant 0 : index
    %c0_99 = arith.constant 0 : index
    %131 = vector.load %arg8[%c5_97, %c0_98, %c0_99] : memref<6x32x1xf32, #tpu.memory_space<vmem>>, vector<1x32x1xf32>
    %132 = vector.shape_cast %131 : vector<1x32x1xf32> to vector<32x1xf32>
    %133 = vector.broadcast %132 : vector<32x1xf32> to vector<32x16xf32>
    %134 = arith.addf %130, %133 : vector<32x16xf32>
    %135 = arith.addf %134, %114 : vector<32x16xf32>
    %cst_100 = arith.constant 0.000000e+00 : f32
    %136 = vector.broadcast %cst_100 : f32 to vector<2x16xf32>
    %137 = vector.extract_strided_slice %135 {offsets = [0, 0], sizes = [32, 2], strides = [1, 1]} : vector<32x16xf32> to vector<32x2xf32>
    %c0_101 = arith.constant 0 : index
    %c0_102 = arith.constant 0 : index
    %c0_103 = arith.constant 0 : index
    %138 = vector.load %arg9[%c0_101, %c0_102, %c0_103] : memref<8x32x16xf32, #tpu.memory_space<vmem>>, vector<1x32x16xf32>
    %139 = vector.shape_cast %138 : vector<1x32x16xf32> to vector<32x16xf32>
    %cst_104 = arith.constant dense<0.000000e+00> : vector<2x16xf32>
    %140 = tpu.matmul %137, %139, %cst_104 {dimension_numbers = #tpu.dot_dimension_numbers<[0], [0], [1], [1], [0, 1, 1, 1], [], []>} : vector<32x2xf32>, vector<32x16xf32>, vector<2x16xf32> -> vector<2x16xf32>
    %141 = arith.addf %136, %140 : vector<2x16xf32>
    %142 = vector.extract_strided_slice %135 {offsets = [0, 2], sizes = [32, 2], strides = [1, 1]} : vector<32x16xf32> to vector<32x2xf32>
    %c1_105 = arith.constant 1 : index
    %c0_106 = arith.constant 0 : index
    %c0_107 = arith.constant 0 : index
    %143 = vector.load %arg9[%c1_105, %c0_106, %c0_107] : memref<8x32x16xf32, #tpu.memory_space<vmem>>, vector<1x32x16xf32>
    %144 = vector.shape_cast %143 : vector<1x32x16xf32> to vector<32x16xf32>
    %cst_108 = arith.constant dense<0.000000e+00> : vector<2x16xf32>
    %145 = tpu.matmul %142, %144, %cst_108 {dimension_numbers = #tpu.dot_dimension_numbers<[0], [0], [1], [1], [0, 1, 1, 1], [], []>} : vector<32x2xf32>, vector<32x16xf32>, vector<2x16xf32> -> vector<2x16xf32>
    %146 = arith.addf %141, %145 : vector<2x16xf32>
    %147 = vector.extract_strided_slice %135 {offsets = [0, 4], sizes = [32, 2], strides = [1, 1]} : vector<32x16xf32> to vector<32x2xf32>
    %c2_109 = arith.constant 2 : index
    %c0_110 = arith.constant 0 : index
    %c0_111 = arith.constant 0 : index
    %148 = vector.load %arg9[%c2_109, %c0_110, %c0_111] : memref<8x32x16xf32, #tpu.memory_space<vmem>>, vector<1x32x16xf32>
    %149 = vector.shape_cast %148 : vector<1x32x16xf32> to vector<32x16xf32>
    %cst_112 = arith.constant dense<0.000000e+00> : vector<2x16xf32>
    %150 = tpu.matmul %147, %149, %cst_112 {dimension_numbers = #tpu.dot_dimension_numbers<[0], [0], [1], [1], [0, 1, 1, 1], [], []>} : vector<32x2xf32>, vector<32x16xf32>, vector<2x16xf32> -> vector<2x16xf32>
    %151 = arith.addf %146, %150 : vector<2x16xf32>
    %152 = vector.extract_strided_slice %135 {offsets = [0, 6], sizes = [32, 2], strides = [1, 1]} : vector<32x16xf32> to vector<32x2xf32>
    %c3_113 = arith.constant 3 : index
    %c0_114 = arith.constant 0 : index
    %c0_115 = arith.constant 0 : index
    %153 = vector.load %arg9[%c3_113, %c0_114, %c0_115] : memref<8x32x16xf32, #tpu.memory_space<vmem>>, vector<1x32x16xf32>
    %154 = vector.shape_cast %153 : vector<1x32x16xf32> to vector<32x16xf32>
    %cst_116 = arith.constant dense<0.000000e+00> : vector<2x16xf32>
    %155 = tpu.matmul %152, %154, %cst_116 {dimension_numbers = #tpu.dot_dimension_numbers<[0], [0], [1], [1], [0, 1, 1, 1], [], []>} : vector<32x2xf32>, vector<32x16xf32>, vector<2x16xf32> -> vector<2x16xf32>
    %156 = arith.addf %151, %155 : vector<2x16xf32>
    %157 = vector.extract_strided_slice %135 {offsets = [0, 8], sizes = [32, 2], strides = [1, 1]} : vector<32x16xf32> to vector<32x2xf32>
    %c4_117 = arith.constant 4 : index
    %c0_118 = arith.constant 0 : index
    %c0_119 = arith.constant 0 : index
    %158 = vector.load %arg9[%c4_117, %c0_118, %c0_119] : memref<8x32x16xf32, #tpu.memory_space<vmem>>, vector<1x32x16xf32>
    %159 = vector.shape_cast %158 : vector<1x32x16xf32> to vector<32x16xf32>
    %cst_120 = arith.constant dense<0.000000e+00> : vector<2x16xf32>
    %160 = tpu.matmul %157, %159, %cst_120 {dimension_numbers = #tpu.dot_dimension_numbers<[0], [0], [1], [1], [0, 1, 1, 1], [], []>} : vector<32x2xf32>, vector<32x16xf32>, vector<2x16xf32> -> vector<2x16xf32>
    %161 = arith.addf %156, %160 : vector<2x16xf32>
    %162 = vector.extract_strided_slice %135 {offsets = [0, 10], sizes = [32, 2], strides = [1, 1]} : vector<32x16xf32> to vector<32x2xf32>
    %c5_121 = arith.constant 5 : index
    %c0_122 = arith.constant 0 : index
    %c0_123 = arith.constant 0 : index
    %163 = vector.load %arg9[%c5_121, %c0_122, %c0_123] : memref<8x32x16xf32, #tpu.memory_space<vmem>>, vector<1x32x16xf32>
    %164 = vector.shape_cast %163 : vector<1x32x16xf32> to vector<32x16xf32>
    %cst_124 = arith.constant dense<0.000000e+00> : vector<2x16xf32>
    %165 = tpu.matmul %162, %164, %cst_124 {dimension_numbers = #tpu.dot_dimension_numbers<[0], [0], [1], [1], [0, 1, 1, 1], [], []>} : vector<32x2xf32>, vector<32x16xf32>, vector<2x16xf32> -> vector<2x16xf32>
    %166 = arith.addf %161, %165 : vector<2x16xf32>
    %167 = vector.extract_strided_slice %135 {offsets = [0, 12], sizes = [32, 2], strides = [1, 1]} : vector<32x16xf32> to vector<32x2xf32>
    %c6 = arith.constant 6 : index
    %c0_125 = arith.constant 0 : index
    %c0_126 = arith.constant 0 : index
    %168 = vector.load %arg9[%c6, %c0_125, %c0_126] : memref<8x32x16xf32, #tpu.memory_space<vmem>>, vector<1x32x16xf32>
    %169 = vector.shape_cast %168 : vector<1x32x16xf32> to vector<32x16xf32>
    %cst_127 = arith.constant dense<0.000000e+00> : vector<2x16xf32>
    %170 = tpu.matmul %167, %169, %cst_127 {dimension_numbers = #tpu.dot_dimension_numbers<[0], [0], [1], [1], [0, 1, 1, 1], [], []>} : vector<32x2xf32>, vector<32x16xf32>, vector<2x16xf32> -> vector<2x16xf32>
    %171 = arith.addf %166, %170 : vector<2x16xf32>
    %172 = vector.extract_strided_slice %135 {offsets = [0, 14], sizes = [32, 2], strides = [1, 1]} : vector<32x16xf32> to vector<32x2xf32>
    %c7 = arith.constant 7 : index
    %c0_128 = arith.constant 0 : index
    %c0_129 = arith.constant 0 : index
    %173 = vector.load %arg9[%c7, %c0_128, %c0_129] : memref<8x32x16xf32, #tpu.memory_space<vmem>>, vector<1x32x16xf32>
    %174 = vector.shape_cast %173 : vector<1x32x16xf32> to vector<32x16xf32>
    %cst_130 = arith.constant dense<0.000000e+00> : vector<2x16xf32>
    %175 = tpu.matmul %172, %174, %cst_130 {dimension_numbers = #tpu.dot_dimension_numbers<[0], [0], [1], [1], [0, 1, 1, 1], [], []>} : vector<32x2xf32>, vector<32x16xf32>, vector<2x16xf32> -> vector<2x16xf32>
    %176 = arith.addf %171, %175 : vector<2x16xf32>
    %c0_131 = arith.constant 0 : index
    %c0_132 = arith.constant 0 : index
    %177 = vector.load %arg10[%c0_131, %c0_132] : memref<1x16xf32, #tpu.memory_space<vmem>>, vector<1x16xf32>
    %178 = vector.broadcast %177 : vector<1x16xf32> to vector<2x16xf32>
    %179 = arith.addf %176, %178 : vector<2x16xf32>
    %cst_133 = arith.constant dense<0xFF800000> : vector<2xf32>
    %180 = vector.multi_reduction <maximumf>, %179, %cst_133 [1] : vector<2x16xf32> to vector<2xf32>
    %181 = vector.shape_cast %180 : vector<2xf32> to vector<2x1xf32>
    %182 = vector.broadcast %181 : vector<2x1xf32> to vector<2x16xf32>
    %183 = arith.subf %179, %182 : vector<2x16xf32>
    %184 = math.exp %183 : vector<2x16xf32>
    %cst_134 = arith.constant dense<0.000000e+00> : vector<2xf32>
    %185 = vector.multi_reduction <add>, %184, %cst_134 [1] : vector<2x16xf32> to vector<2xf32>
    %186 = vector.shape_cast %185 : vector<2xf32> to vector<2x1xf32>
    %187 = vector.broadcast %186 : vector<2x1xf32> to vector<2x16xf32>
    %188 = arith.divf %184, %187 : vector<2x16xf32>
    %c0_135 = arith.constant 0 : index
    %c0_136 = arith.constant 0 : index
    %189 = vector.load %arg11[%c0_135, %c0_136] : memref<2x16xf32, #tpu.memory_space<vmem>>, vector<2x16xf32>
    tpu.vector_store %arg11[%c0_135, %c0_136], %188 {strides = array<i32>} : memref<2x16xf32, #tpu.memory_space<vmem>>, vector<2x16xf32>,
    return
  }
  func.func @transform_0(%arg0: i32) -> (i32, i32, i32) {
    %c0_i32 = arith.constant 0 : i32
    %c0_i32_0 = arith.constant 0 : i32
    %c0_i32_1 = arith.constant 0 : i32
    return %arg0, %c0_i32, %c0_i32_0 : i32, i32, i32
  }
  func.func @transform_1(%arg0: i32) -> (i32, i32) {
    %c0_i32 = arith.constant 0 : i32
    %c0_i32_0 = arith.constant 0 : i32
    %c0_i32_1 = arith.constant 0 : i32
    return %c0_i32, %c0_i32_0 : i32, i32
  }
  func.func @transform_2(%arg0: i32) -> (i32, i32) {
    %c0_i32 = arith.constant 0 : i32
    %c0_i32_0 = arith.constant 0 : i32
    %c0_i32_1 = arith.constant 0 : i32
    return %c0_i32, %c0_i32_0 : i32, i32
  }
  func.func @transform_3(%arg0: i32) -> (i32, i32) {
    %c0_i32 = arith.constant 0 : i32
    %c0_i32_0 = arith.constant 0 : i32
    %c0_i32_1 = arith.constant 0 : i32
    return %c0_i32, %c0_i32_0 : i32, i32
  }
  func.func @transform_4(%arg0: i32) -> (i32, i32, i32) {
    %c0_i32 = arith.constant 0 : i32
    %c0_i32_0 = arith.constant 0 : i32
    %c0_i32_1 = arith.constant 0 : i32
    %c0_i32_2 = arith.constant 0 : i32
    return %c0_i32, %c0_i32_0, %c0_i32_1 : i32, i32, i32
  }
  func.func @transform_5(%arg0: i32) -> (i32, i32, i32) {
    %c0_i32 = arith.constant 0 : i32
    %c0_i32_0 = arith.constant 0 : i32
    %c0_i32_1 = arith.constant 0 : i32
    %c0_i32_2 = arith.constant 0 : i32
    return %c0_i32, %c0_i32_0, %c0_i32_1 : i32, i32, i32
  }
  func.func @transform_6(%arg0: i32) -> (i32, i32, i32) {
    %c0_i32 = arith.constant 0 : i32
    %c0_i32_0 = arith.constant 0 : i32
    %c0_i32_1 = arith.constant 0 : i32
    %c0_i32_2 = arith.constant 0 : i32
    return %c0_i32, %c0_i32_0, %c0_i32_1 : i32, i32, i32
  }
  func.func @transform_7(%arg0: i32) -> (i32, i32, i32) {
    %c0_i32 = arith.constant 0 : i32
    %c0_i32_0 = arith.constant 0 : i32
    %c0_i32_1 = arith.constant 0 : i32
    %c0_i32_2 = arith.constant 0 : i32
    return %c0_i32, %c0_i32_0, %c0_i32_1 : i32, i32, i32
  }
  func.func @transform_8(%arg0: i32) -> (i32, i32, i32) {
    %c0_i32 = arith.constant 0 : i32
    %c0_i32_0 = arith.constant 0 : i32
    %c0_i32_1 = arith.constant 0 : i32
    %c0_i32_2 = arith.constant 0 : i32
    return %c0_i32, %c0_i32_0, %c0_i32_1 : i32, i32, i32
  }
  func.func @transform_9(%arg0: i32) -> (i32, i32) {
    %c0_i32 = arith.constant 0 : i32
    %c0_i32_0 = arith.constant 0 : i32
    %c0_i32_1 = arith.constant 0 : i32
    return %c0_i32, %c0_i32_0 : i32, i32
  }
  func.func @transform_10(%arg0: i32) -> (i32, i32) {
    %c0_i32 = arith.constant 0 : i32
    %c0_i32_0 = arith.constant 0 : i32
    return %arg0, %c0_i32 : i32, i32
  }
}

</mosaic_0001>

<llo_original>
// kernel: tpu_custom_call.1
$region0: #{tpu_custom_call.1}
  #allocation0 [shape = 'u32[]', space=smem, size = 0x4, offset = 0x4, fixed_abs, tag = 'smem constant byte address 0x4 - core index']
  #allocation1 [shape = 'u32[144,128]{1,0:T(1,128)}', space=vmem, size = 0x12000, scoped, tag = 'internal scratch']
  %s0 = inlined_call_operand.vmem [shape: f32[1,8,16], index: 0, kind: input, shape index: {}]
  %s1 = inlined_call_operand.vmem [shape: f32[16,16], index: 1, kind: input, shape index: {}]
  %s2 = inlined_call_operand.vmem [shape: f32[32,8], index: 2, kind: input, shape index: {}]
  %s3 = inlined_call_operand.vmem [shape: f32[32,1], index: 3, kind: input, shape index: {}]
  %s4 = inlined_call_operand.vmem [shape: f32[6,48,32], index: 4, kind: input, shape index: {}]
  %s5 = inlined_call_operand.vmem [shape: f32[6,48,1], index: 5, kind: input, shape index: {}]
  %s6 = inlined_call_operand.vmem [shape: f32[6,32,16], index: 6, kind: input, shape index: {}]
  %s7 = inlined_call_operand.vmem [shape: f32[6,32,1], index: 7, kind: input, shape index: {}]
  %s8 = inlined_call_operand.vmem [shape: f32[8,32,16], index: 8, kind: input, shape index: {}]
  %s9 = inlined_call_operand.vmem [shape: f32[1,16], index: 9, kind: input, shape index: {}]
  %s10 = inlined_call_operand.hbm [shape: f32[2,16], index: 10, kind: output, shape index: {}]
  %s11 = sld [smem:[#allocation0]]
  $region50: #{tpu_custom_call.1} parent=0
    _
  %s13 = ssub.s32 1, %s11
  %s14 = scalar_select 0, %s13, %s11
  $region1: #{tpu_custom_call.1} parent=0
    #allocation2 [shape = 'u8[1024]{0}', space=vmem, size = 0x400, scoped, tag = 'output window, operand 0, single buffered']
    #allocation3 [shape = 's32[1]{0}', space=sflag, size = 0x4, scoped, tag = 'scoped memory for tpu_custom_call.1']
    %15 = vsyncpa [#allocation3], 0
    // Predicated region
    $region2: #{tpu_custom_call.1} parent=1 // pred_check
      _
    $region3: #{tpu_custom_call.1} parent=1 // pred_check_branch
      %17 = sbr.rel (0) target = $region5
    $region4: #{tpu_custom_call.1} parent=1 // pred_region
      _
    $region5: #{tpu_custom_call.1} parent=1 // pred_fallthru
      _
    // Predicated region
    $region6: #{tpu_custom_call.1} parent=1 // pred_check
      _
    $region7: #{tpu_custom_call.1} parent=1 // pred_check_branch
      %19 = sbr.rel (0) target = $region9
    $region8: #{tpu_custom_call.1} parent=1 // pred_region
      _
    $region9: #{tpu_custom_call.1} parent=1 // pred_fallthru
      _
    // Predicated region
    $region10: #{tpu_custom_call.1} parent=1 // pred_check
      _
    $region11: #{tpu_custom_call.1} parent=1 // pred_check_branch
      %21 = sbr.rel (0) target = $region13
    $region12: #{tpu_custom_call.1} parent=1 // pred_region
      _
    $region13: #{tpu_custom_call.1} parent=1 // pred_fallthru
      _
    // Predicated region
    $region14: #{tpu_custom_call.1} parent=1 // pred_check
      _
    $region15: #{tpu_custom_call.1} parent=1 // pred_check_branch
      %23 = sbr.rel (0) target = $region17
    $region16: #{tpu_custom_call.1} parent=1 // pred_region
      _
    $region17: #{tpu_custom_call.1} parent=1 // pred_fallthru
      _
    // Predicated region
    $region18: #{tpu_custom_call.1} parent=1 // pred_check
      _
    $region19: #{tpu_custom_call.1} parent=1 // pred_check_branch
      %25 = sbr.rel (0) target = $region21
    $region20: #{tpu_custom_call.1} parent=1 // pred_region
      _
    $region21: #{tpu_custom_call.1} parent=1 // pred_fallthru
      _
    // Predicated region
    $region22: #{tpu_custom_call.1} parent=1 // pred_check
      _
    $region23: #{tpu_custom_call.1} parent=1 // pred_check_branch
      %27 = sbr.rel (0) target = $region25
    $region24: #{tpu_custom_call.1} parent=1 // pred_region
      _
    $region25: #{tpu_custom_call.1} parent=1 // pred_fallthru
      _
    // Predicated region
    $region26: #{tpu_custom_call.1} parent=1 // pred_check
      _
    $region27: #{tpu_custom_call.1} parent=1 // pred_check_branch
      %29 = sbr.rel (0) target = $region29
    $region28: #{tpu_custom_call.1} parent=1 // pred_region
      _
    $region29: #{tpu_custom_call.1} parent=1 // pred_fallthru
      _
    // Predicated region
    $region30: #{tpu_custom_call.1} parent=1 // pred_check
      _
    $region31: #{tpu_custom_call.1} parent=1 // pred_check_branch
      %31 = sbr.rel (0) target = $region33
    $region32: #{tpu_custom_call.1} parent=1 // pred_region
      _
    $region33: #{tpu_custom_call.1} parent=1 // pred_fallthru
      _
    // Predicated region
    $region34: #{tpu_custom_call.1} parent=1 // pred_check
      _
    $region35: #{tpu_custom_call.1} parent=1 // pred_check_branch
      %33 = sbr.rel (0) target = $region37
    $region36: #{tpu_custom_call.1} parent=1 // pred_region
      _
    $region37: #{tpu_custom_call.1} parent=1 // pred_fallthru
      _
    // Predicated region
    $region38: #{tpu_custom_call.1} parent=1 // pred_check
      _
    $region39: #{tpu_custom_call.1} parent=1 // pred_check_branch
      %35 = sbr.rel (0) target = $region41
    $region40: #{tpu_custom_call.1} parent=1 // pred_region
      _
    $region41: #{tpu_custom_call.1} parent=1 // pred_fallthru
      _
    %v36 = vld [vmem:[%s0] sm:$0xff]
    %v37 = vld [vmem:[%s2] sm:$0xff]
    %v38 = vld [vmem:[%s2 + $0x8] sm:$0xff]
    %v39 = vld [vmem:[%s2 + $0x10] sm:$0xff]
    %v40 = vld [vmem:[%s2 + $0x18] sm:$0xff]
    %v41 = vld [vmem:[%s3] sm:$0xff]
    %v42 = vld [vmem:[%s3 + $0x8] sm:$0xff]
    %v43 = vld [vmem:[%s3 + $0x10] sm:$0xff]
    %v44 = vld [vmem:[%s3 + $0x18] sm:$0xff]
    %46 = vset.pattern.permute.xlu0 0
    %47 = vperm.xlu0 %46, %v41
    %v48 = vpop.permute.xlu0 %47
    %51 = vset.pattern.permute.xlu0 0
    %52 = vperm.xlu0 %51, %v42
    %v53 = vpop.permute.xlu0 %52
    %56 = vset.pattern.permute.xlu0 0
    %57 = vperm.xlu0 %56, %v43
    %v58 = vpop.permute.xlu0 %57
    %61 = vset.pattern.permute.xlu0 0
    %62 = vperm.xlu0 %61, %v44
    %v63 = vpop.permute.xlu0 %62
    %vm65 = vcmask 64512
    %v67 = vsel %vm65, %v37, 0
    %v70 = vsel %vm65, %v38, 0
    %v73 = vsel %vm65, %v39, 0
    %v76 = vsel %vm65, %v40, 0
    %78 = vmatprep.subr.mxu0 0.0
    %79 = vmatpush1.msra.mxu0 0.0
    %80 = vmatprep.subr.mxu0 0.0
    %81 = vmatpush1.msra.mxu0 0.0
    %82 = vmatprep.subr.mxu0 0.0
    %83 = vmatpush1.msra.mxu0 0.0
    %84 = vmatprep.subr.mxu0 0.0
    %85 = vmatpush1.msra.mxu0 0.0
    %86 = vmatprep.subr.mxu0 0.0
    %87 = vmatpush1.msra.mxu0 0.0
    %88 = vmatprep.subr.mxu0 0.0
    %89 = vmatpush1.msra.mxu0 0.0
    %90 = vmatprep.subr.mxu0 0.0
    %91 = vmatpush1.msra.mxu0 0.0
    %92 = vmatprep.subr.mxu0 0.0
    %93 = vmatpush1.msra.mxu0 0.0
    %94 = vmatprep.subr.mxu0 0.0
    %95 = vmatpush1.msra.mxu0 0.0
    %96 = vmatprep.subr.mxu0 0.0
    %97 = vmatpush1.msra.mxu0 0.0
    %98 = vmatprep.subr.mxu0 0.0
    %99 = vmatpush1.msra.mxu0 0.0
    %100 = vmatprep.subr.mxu0 0.0
    %101 = vmatpush1.msra.mxu0 0.0
    %102 = vmatprep.subr.mxu0 0.0
    %103 = vmatpush1.msra.mxu0 0.0
    %104 = vmatprep.subr.mxu0 0.0
    %105 = vmatpush1.msra.mxu0 0.0
    %106 = vmatprep.subr.mxu0 0.0
    %107 = vmatpush1.msra.mxu0 0.0
    %108 = vmatprep.subr.mxu0 0.0
    %109 = vmatpush1.msra.mxu0 %v36
    %110 = vmatprep.subr.mxu0 0.0
    %111 = vmatpush2.msra.mxu0 0.0
    %112 = vmatprep.subr.mxu0 0.0
    %113 = vmatpush2.msra.mxu0 0.0
    %114 = vmatprep.subr.mxu0 0.0
    %115 = vmatpush2.msra.mxu0 0.0
    %116 = vmatprep.subr.mxu0 0.0
    %117 = vmatpush2.msra.mxu0 0.0
    %118 = vmatprep.subr.mxu0 0.0
    %119 = vmatpush2.msra.mxu0 0.0
    %120 = vmatprep.subr.mxu0 0.0
    %121 = vmatpush2.msra.mxu0 0.0
    %122 = vmatprep.subr.mxu0 0.0
    %123 = vmatpush2.msra.mxu0 0.0
    %124 = vmatprep.subr.mxu0 0.0
    %125 = vmatpush2.msra.mxu0 0.0
    %126 = vmatprep.subr.mxu0 0.0
    %127 = vmatpush2.msra.mxu0 0.0
    %128 = vmatprep.subr.mxu0 0.0
    %129 = vmatpush2.msra.mxu0 0.0
    %130 = vmatprep.subr.mxu0 0.0
    %131 = vmatpush2.msra.mxu0 0.0
    %132 = vmatprep.subr.mxu0 0.0
    %133 = vmatpush2.msra.mxu0 0.0
    %134 = vmatprep.subr.mxu0 0.0
    %135 = vmatpush2.msra.mxu0 0.0
    %136 = vmatprep.subr.mxu0 0.0
    %137 = vmatpush2.msra.mxu0 0.0
    %138 = vmatprep.subr.mxu0 0.0
    %139 = vmatpush2.msra.mxu0 0.0
    %140 = vmatprep.subr.mxu0 0.0
    %141 = vmatpush2.msra.mxu0 0.0
    %142 = vmatprep.mubr.f32.mxu0 0.0
    %143 = vmatmul.mubr.f32.gmra.mxu0 %v67
    %v144 = vpop.f32.mrf.mxu0
    %v145 = vadd.f32 %v48, %v144
    %v146 = vpop.f32.mrf.mxu0
    %147 = vmatprep.mubr.f32.mxu0 0.0
    %148 = vmatmul.mubr.f32.gmra.mxu0 %v70
    %v149 = vpop.f32.mrf.mxu0
    %v150 = vadd.f32 %v53, %v149
    %v151 = vpop.f32.mrf.mxu0
    %152 = vmatprep.mubr.f32.mxu0 0.0
    %153 = vmatmul.mubr.f32.gmra.mxu0 %v73
    %v154 = vpop.f32.mrf.mxu0
    %v155 = vadd.f32 %v58, %v154
    %v156 = vpop.f32.mrf.mxu0
    %157 = vmatprep.mubr.f32.mxu0 0.0
    %158 = vmatmul.mubr.f32.gmra.mxu0 %v76
    %v159 = vpop.f32.mrf.mxu0
    %v160 = vadd.f32 %v63, %v159
    %v161 = vpop.f32.mrf.mxu0
    %162 = vdwg.mxu0
    %v163 = vmax.f32 %v145, 0.0
    %v164 = vmax.f32 %v150, 0.0
    %v165 = vmax.f32 %v155, 0.0
    %v166 = vmax.f32 %v160, 0.0
    %v167 = vld [vmem:[%s1] sm:$0xff]
    %v168 = vld [vmem:[%s1 + $0x8] sm:$0xff]
    %v169 = vld [vmem:[%s4] sm:$0xff]
    %v170 = vld [vmem:[%s4 + $0x8] sm:$0xff]
    %v171 = vld [vmem:[%s4 + $0x10] sm:$0xff]
    %v172 = vld [vmem:[%s4 + $0x18] sm:$0xff]
    %v173 = vld [vmem:[%s4 + $0x20] sm:$0xff]
    %v174 = vld [vmem:[%s4 + $0x28] sm:$0xff]
    %v175 = vld [vmem:[%s5] sm:$0xff]
    %v176 = vld [vmem:[%s5 + $0x8] sm:$0xff]
    %v177 = vld [vmem:[%s5 + $0x10] sm:$0xff]
    %v178 = vld [vmem:[%s5 + $0x18] sm:$0xff]
    %v179 = vld [vmem:[%s5 + $0x20] sm:$0xff]
    %v180 = vld [vmem:[%s5 + $0x28] sm:$0xff]
    %182 = vset.pattern.permute.xlu0 0
    %183 = vperm.xlu0 %182, %v175
    %v184 = vpop.permute.xlu0 %183
    %187 = vset.pattern.permute.xlu0 0
    %188 = vperm.xlu0 %187, %v176
    %v189 = vpop.permute.xlu0 %188
    %192 = vset.pattern.permute.xlu0 0
    %193 = vperm.xlu0 %192, %v177
    %v194 = vpop.permute.xlu0 %193
    %197 = vset.pattern.permute.xlu0 0
    %198 = vperm.xlu0 %197, %v178
    %v199 = vpop.permute.xlu0 %198
    %202 = vset.pattern.permute.xlu0 0
    %203 = vperm.xlu0 %202, %v179
    %v204 = vpop.permute.xlu0 %203
    %207 = vset.pattern.permute.xlu0 0
    %208 = vperm.xlu0 %207, %v180
    %v209 = vpop.permute.xlu0 %208
    %vm211 = vcmask 261120
    %v213 = vsel %vm211, %v169, 0
    %v216 = vsel %vm211, %v170, 0
    %v219 = vsel %vm211, %v171, 0
    %v222 = vsel %vm211, %v172, 0
    %v225 = vsel %vm211, %v173, 0
    %v228 = vsel %vm211, %v174, 0
    %230 = vmatprep.subr.mxu0 0.0
    %231 = vmatpush1.msra.mxu0 0.0
    %232 = vmatprep.subr.mxu0 0.0
    %233 = vmatpush1.msra.mxu0 0.0
    %234 = vmatprep.subr.mxu0 0.0
    %235 = vmatpush1.msra.mxu0 0.0
    %236 = vmatprep.subr.mxu0 0.0
    %237 = vmatpush1.msra.mxu0 0.0
    %238 = vmatprep.subr.mxu0 0.0
    %239 = vmatpush1.msra.mxu0 0.0
    %240 = vmatprep.subr.mxu0 0.0
    %241 = vmatpush1.msra.mxu0 0.0
    %242 = vmatprep.subr.mxu0 0.0
    %243 = vmatpush1.msra.mxu0 0.0
    %244 = vmatprep.subr.mxu0 0.0
    %245 = vmatpush1.msra.mxu0 0.0
    %246 = vmatprep.subr.mxu0 0.0
    %247 = vmatpush1.msra.mxu0 0.0
    %248 = vmatprep.subr.mxu0 0.0
    %249 = vmatpush1.msra.mxu0 0.0
    %250 = vmatprep.subr.mxu0 0.0
    %251 = vmatpush1.msra.mxu0 0.0
    %252 = vmatprep.subr.mxu0 0.0
    %253 = vmatpush1.msra.mxu0 0.0
    %254 = vmatprep.subr.mxu0 0.0
    %255 = vmatpush1.msra.mxu0 %v166
    %256 = vmatprep.subr.mxu0 0.0
    %257 = vmatpush1.msra.mxu0 %v165
    %258 = vmatprep.subr.mxu0 0.0
    %259 = vmatpush1.msra.mxu0 %v164
    %260 = vmatprep.subr.mxu0 0.0
    %261 = vmatpush1.msra.mxu0 %v163
    %262 = vmatprep.subr.mxu0 0.0
    %263 = vmatpush2.msra.mxu0 0.0
    %264 = vmatprep.subr.mxu0 0.0
    %265 = vmatpush2.msra.mxu0 0.0
    %266 = vmatprep.subr.mxu0 0.0
    %267 = vmatpush2.msra.mxu0 0.0
    %268 = vmatprep.subr.mxu0 0.0
    %269 = vmatpush2.msra.mxu0 0.0
    %270 = vmatprep.subr.mxu0 0.0
    %271 = vmatpush2.msra.mxu0 0.0
    %272 = vmatprep.subr.mxu0 0.0
    %273 = vmatpush2.msra.mxu0 0.0
    %274 = vmatprep.subr.mxu0 0.0
    %275 = vmatpush2.msra.mxu0 0.0
    %276 = vmatprep.subr.mxu0 0.0
    %277 = vmatpush2.msra.mxu0 0.0
    %278 = vmatprep.subr.mxu0 0.0
    %279 = vmatpush2.msra.mxu0 0.0
    %280 = vmatprep.subr.mxu0 0.0
    %281 = vmatpush2.msra.mxu0 0.0
    %282 = vmatprep.subr.mxu0 0.0
    %283 = vmatpush2.msra.mxu0 0.0
    %284 = vmatprep.subr.mxu0 0.0
    %285 = vmatpush2.msra.mxu0 0.0
    %286 = vmatprep.subr.mxu0 0.0
    %287 = vmatpush2.msra.mxu0 0.0
    %288 = vmatprep.subr.mxu0 0.0
    %289 = vmatpush2.msra.mxu0 0.0
    %290 = vmatprep.subr.mxu0 0.0
    %291 = vmatpush2.msra.mxu0 0.0
    %292 = vmatprep.subr.mxu0 0.0
    %293 = vmatpush2.msra.mxu0 0.0
    %294 = vmatprep.mubr.f32.mxu0 0.0
    %295 = vmatmul.mubr.f32.gmra.mxu0 %v213
    %v296 = vpop.f32.mrf.mxu0
    %v297 = vadd.f32 %v184, %v296
    %v298 = vpop.f32.mrf.mxu0
    %299 = vmatprep.mubr.f32.mxu0 0.0
    %300 = vmatmul.mubr.f32.gmra.mxu0 %v216
    %v301 = vpop.f32.mrf.mxu0
    %v302 = vadd.f32 %v189, %v301
    %v303 = vpop.f32.mrf.mxu0
    %304 = vmatprep.mubr.f32.mxu0 0.0
    %305 = vmatmul.mubr.f32.gmra.mxu0 %v219
    %v306 = vpop.f32.mrf.mxu0
    %v307 = vadd.f32 %v194, %v306
    %v308 = vpop.f32.mrf.mxu0
    %309 = vmatprep.mubr.f32.mxu0 0.0
    %310 = vmatmul.mubr.f32.gmra.mxu0 %v222
    %v311 = vpop.f32.mrf.mxu0
    %v312 = vadd.f32 %v199, %v311
    %v313 = vpop.f32.mrf.mxu0
    %314 = vmatprep.mubr.f32.mxu0 0.0
    %315 = vmatmul.mubr.f32.gmra.mxu0 %v225
    %v316 = vpop.f32.mrf.mxu0
    %v317 = vadd.f32 %v204, %v316
    %v318 = vpop.f32.mrf.mxu0
    %319 = vmatprep.mubr.f32.mxu0 0.0
    %320 = vmatmul.mubr.f32.gmra.mxu0 %v228
    %v321 = vpop.f32.mrf.mxu0
    %v322 = vadd.f32 %v209, %v321
    %v323 = vpop.f32.mrf.mxu0
    %324 = vdwg.mxu0
    %325 = vxpose.xlu0.b32.start [1/16] %v307, 128
    %326 = vxpose.xlu0.b32.cont [2/16] %v312, 128
    %327 = vxpose.xlu0.b32.cont [3/16] 0.0, 128
    %328 = vxpose.xlu0.b32.cont [4/16] 0.0, 128
    %329 = vxpose.xlu0.b32.cont [5/16] 0.0, 128
    %330 = vxpose.xlu0.b32.cont [6/16] 0.0, 128
    %331 = vxpose.xlu0.b32.cont [7/16] 0.0, 128
    %332 = vxpose.xlu0.b32.cont [8/16] 0.0, 128
    %333 = vxpose.xlu0.b32.cont [9/16] 0.0, 128
    %334 = vxpose.xlu0.b32.cont [10/16] 0.0, 128
    %335 = vxpose.xlu0.b32.cont [11/16] 0.0, 128
    %336 = vxpose.xlu0.b32.cont [12/16] 0.0, 128
    %337 = vxpose.xlu0.b32.cont [13/16] 0.0, 128
    %338 = vxpose.xlu0.b32.cont [14/16] 0.0, 128
    %339 = vxpose.xlu0.b32.cont [15/16] 0.0, 128
    %340 = vxpose.xlu0.b32.end [16/16] 0.0, 128
    %v341 = vpop.trf.xlu0
    %v342 = vpop.trf.xlu0
    %v343 = vpop.trf.xlu0
    %v344 = vpop.trf.xlu0
    %v345 = vpop.trf.xlu0
    %v346 = vpop.trf.xlu0
    %v347 = vpop.trf.xlu0
    %v348 = vpop.trf.xlu0
    %v349 = vpop.trf.xlu0
    %v350 = vpop.trf.xlu0
    %v351 = vpop.trf.xlu0
    %v352 = vpop.trf.xlu0
    %v353 = vpop.trf.xlu0
    %v354 = vpop.trf.xlu0
    %v355 = vpop.trf.xlu0
    %v356 = vpop.trf.xlu0
    %vm357 = vcmask 130048
    %v359 = vsel %vm357, %v341, 0
    %v362 = vsel %vm357, %v342, 0
    %364 = vmatprep.subr.mxu0 0.0
    %365 = vmatpush1.msra.mxu0 0.0
    %366 = vmatprep.subr.mxu0 0.0
    %367 = vmatpush1.msra.mxu0 0.0
    %368 = vmatprep.subr.mxu0 0.0
    %369 = vmatpush1.msra.mxu0 0.0
    %370 = vmatprep.subr.mxu0 0.0
    %371 = vmatpush1.msra.mxu0 0.0
    %372 = vmatprep.subr.mxu0 0.0
    %373 = vmatpush1.msra.mxu0 0.0
    %374 = vmatprep.subr.mxu0 0.0
    %375 = vmatpush1.msra.mxu0 0.0
    %376 = vmatprep.subr.mxu0 0.0
    %377 = vmatpush1.msra.mxu0 0.0
    %378 = vmatprep.subr.mxu0 0.0
    %379 = vmatpush1.msra.mxu0 0.0
    %380 = vmatprep.subr.mxu0 0.0
    %381 = vmatpush1.msra.mxu0 0.0
    %382 = vmatprep.subr.mxu0 0.0
    %383 = vmatpush1.msra.mxu0 0.0
    %384 = vmatprep.subr.mxu0 0.0
    %385 = vmatpush1.msra.mxu0 0.0
    %386 = vmatprep.subr.mxu0 0.0
    %387 = vmatpush1.msra.mxu0 0.0
    %388 = vmatprep.subr.mxu0 0.0
    %389 = vmatpush1.msra.mxu0 0.0
    %390 = vmatprep.subr.mxu0 0.0
    %391 = vmatpush1.msra.mxu0 0.0
    %392 = vmatprep.subr.mxu0 0.0
    %393 = vmatpush1.msra.mxu0 %v322
    %394 = vmatprep.subr.mxu0 0.0
    %395 = vmatpush1.msra.mxu0 %v317
    %396 = vmatprep.subr.mxu0 0.0
    %397 = vmatpush2.msra.mxu0 0.0
    %398 = vmatprep.subr.mxu0 0.0
    %399 = vmatpush2.msra.mxu0 0.0
    %400 = vmatprep.subr.mxu0 0.0
    %401 = vmatpush2.msra.mxu0 0.0
    %402 = vmatprep.subr.mxu0 0.0
    %403 = vmatpush2.msra.mxu0 0.0
    %404 = vmatprep.subr.mxu0 0.0
    %405 = vmatpush2.msra.mxu0 0.0
    %406 = vmatprep.subr.mxu0 0.0
    %407 = vmatpush2.msra.mxu0 0.0
    %408 = vmatprep.subr.mxu0 0.0
    %409 = vmatpush2.msra.mxu0 0.0
    %410 = vmatprep.subr.mxu0 0.0
    %411 = vmatpush2.msra.mxu0 0.0
    %412 = vmatprep.subr.mxu0 0.0
    %413 = vmatpush2.msra.mxu0 0.0
    %414 = vmatprep.subr.mxu0 0.0
    %415 = vmatpush2.msra.mxu0 0.0
    %416 = vmatprep.subr.mxu0 0.0
    %417 = vmatpush2.msra.mxu0 0.0
    %418 = vmatprep.subr.mxu0 0.0
    %419 = vmatpush2.msra.mxu0 0.0
    %420 = vmatprep.subr.mxu0 0.0
    %421 = vmatpush2.msra.mxu0 0.0
    %422 = vmatprep.subr.mxu0 0.0
    %423 = vmatpush2.msra.mxu0 0.0
    %424 = vmatprep.subr.mxu0 0.0
    %425 = vmatpush2.msra.mxu0 0.0
    %426 = vmatprep.subr.mxu0 0.0
    %427 = vmatpush2.msra.mxu0 0.0
    %428 = vmatprep.mubr.f32.mxu0 0.0
    %429 = vmatmul.mubr.f32.gmra.mxu0 %v359
    %v430 = vpop.f32.mrf.mxu0
    %v431 = vadd.f32 0.0, %v430
    %v432 = vpop.f32.mrf.mxu0
    %433 = vmatprep.mubr.f32.mxu0 0.0
    %434 = vmatmul.mubr.f32.gmra.mxu0 %v362
    %v435 = vpop.f32.mrf.mxu0
    %v436 = vadd.f32 0.0, %v435
    %v437 = vpop.f32.mrf.mxu0
    %438 = vdwg.mxu0
    %v439 = vmul.f32 %v431, %v167
    %v440 = vmul.f32 %v436, %v168
    %v442 = vsel %vm357, %v297, 0
    %v445 = vsel %vm357, %v302, 0
    %v448 = vsel %vm357, %v439, 0
    %v451 = vsel %vm357, %v440, 0
    %453 = vmatprep.subr.mxu0 0.0
    %454 = vmatpush1.xpose.msra.mxu0 0.0
    %455 = vmatprep.subr.mxu0 0.0
    %456 = vmatpush1.xpose.msra.mxu0 0.0
    %457 = vmatprep.subr.mxu0 0.0
    %458 = vmatpush1.xpose.msra.mxu0 0.0
    %459 = vmatprep.subr.mxu0 0.0
    %460 = vmatpush1.xpose.msra.mxu0 0.0
    %461 = vmatprep.subr.mxu0 0.0
    %462 = vmatpush1.xpose.msra.mxu0 0.0
    %463 = vmatprep.subr.mxu0 0.0
    %464 = vmatpush1.xpose.msra.mxu0 0.0
    %465 = vmatprep.subr.mxu0 0.0
    %466 = vmatpush1.xpose.msra.mxu0 0.0
    %467 = vmatprep.subr.mxu0 0.0
    %468 = vmatpush1.xpose.msra.mxu0 0.0
    %469 = vmatprep.subr.mxu0 0.0
    %470 = vmatpush1.xpose.msra.mxu0 0.0
    %471 = vmatprep.subr.mxu0 0.0
    %472 = vmatpush1.xpose.msra.mxu0 0.0
    %473 = vmatprep.subr.mxu0 0.0
    %474 = vmatpush1.xpose.msra.mxu0 0.0
    %475 = vmatprep.subr.mxu0 0.0
    %476 = vmatpush1.xpose.msra.mxu0 0.0
    %477 = vmatprep.subr.mxu0 0.0
    %478 = vmatpush1.xpose.msra.mxu0 0.0
    %479 = vmatprep.subr.mxu0 0.0
    %480 = vmatpush1.xpose.msra.mxu0 0.0
    %481 = vmatprep.subr.mxu0 0.0
    %482 = vmatpush1.xpose.msra.mxu0 %v451
    %483 = vmatprep.subr.mxu0 0.0
    %484 = vmatpush1.xpose.msra.mxu0 %v448
    %485 = vmatprep.subr.mxu0 0.0
    %486 = vmatpush2.xpose.msra.mxu0 0.0
    %487 = vmatprep.subr.mxu0 0.0
    %488 = vmatpush2.xpose.msra.mxu0 0.0
    %489 = vmatprep.subr.mxu0 0.0
    %490 = vmatpush2.xpose.msra.mxu0 0.0
    %491 = vmatprep.subr.mxu0 0.0
    %492 = vmatpush2.xpose.msra.mxu0 0.0
    %493 = vmatprep.subr.mxu0 0.0
    %494 = vmatpush2.xpose.msra.mxu0 0.0
    %495 = vmatprep.subr.mxu0 0.0
    %496 = vmatpush2.xpose.msra.mxu0 0.0
    %497 = vmatprep.subr.mxu0 0.0
    %498 = vmatpush2.xpose.msra.mxu0 0.0
    %499 = vmatprep.subr.mxu0 0.0
    %500 = vmatpush2.xpose.msra.mxu0 0.0
    %501 = vmatprep.subr.mxu0 0.0
    %502 = vmatpush2.xpose.msra.mxu0 0.0
    %503 = vmatprep.subr.mxu0 0.0
    %504 = vmatpush2.xpose.msra.mxu0 0.0
    %505 = vmatprep.subr.mxu0 0.0
    %506 = vmatpush2.xpose.msra.mxu0 0.0
    %507 = vmatprep.subr.mxu0 0.0
    %508 = vmatpush2.xpose.msra.mxu0 0.0
    %509 = vmatprep.subr.mxu0 0.0
    %510 = vmatpush2.xpose.msra.mxu0 0.0
    %511 = vmatprep.subr.mxu0 0.0
    %512 = vmatpush2.xpose.msra.mxu0 0.0
    %513 = vmatprep.subr.mxu0 0.0
    %514 = vmatpush2.xpose.msra.mxu0 0.0
    %515 = vmatprep.subr.mxu0 0.0
    %516 = vmatpush2.xpose.msra.mxu0 0.0
    %517 = vmatprep.mubr.f32.mxu0 0.0
    %518 = vmatmul.mubr.f32.gmra.mxu0 %v442
    %v519 = vpop.f32.mrf.mxu0
    %v520 = vadd.f32 0.0, %v519
    %v521 = vpop.f32.mrf.mxu0
    %522 = vmatprep.mubr.f32.mxu0 0.0
    %523 = vmatmul.mubr.f32.gmra.mxu0 %v445
    %v524 = vpop.f32.mrf.mxu0
    %v525 = vadd.f32 0.0, %v524
    %v526 = vpop.f32.mrf.mxu0
    %527 = vdwg.mxu0
    %v528 = vld [vmem:[%s6] sm:$0xff]
    %v529 = vld [vmem:[%s6 + $0x8] sm:$0xff]
    %v530 = vld [vmem:[%s6 + $0x10] sm:$0xff]
    %v531 = vld [vmem:[%s6 + $0x18] sm:$0xff]
    %v532 = vld [vmem:[%s7] sm:$0xff]
    %v533 = vld [vmem:[%s7 + $0x8] sm:$0xff]
    %v534 = vld [vmem:[%s7 + $0x10] sm:$0xff]
    %v535 = vld [vmem:[%s7 + $0x18] sm:$0xff]
    %537 = vset.pattern.permute.xlu0 0
    %538 = vperm.xlu0 %537, %v532
    %v539 = vpop.permute.xlu0 %538
    %542 = vset.pattern.permute.xlu0 0
    %543 = vperm.xlu0 %542, %v533
    %v544 = vpop.permute.xlu0 %543
    %547 = vset.pattern.permute.xlu0 0
    %548 = vperm.xlu0 %547, %v534
    %v549 = vpop.permute.xlu0 %548
    %552 = vset.pattern.permute.xlu0 0
    %553 = vperm.xlu0 %552, %v535
    %v554 = vpop.permute.xlu0 %553
    %v557 = vsel %vm357, %v528, 0
    %v560 = vsel %vm357, %v529, 0
    %v563 = vsel %vm357, %v530, 0
    %v566 = vsel %vm357, %v531, 0
    %568 = vmatprep.subr.mxu0 0.0
    %569 = vmatpush1.msra.mxu0 0.0
    %570 = vmatprep.subr.mxu0 0.0
    %571 = vmatpush1.msra.mxu0 0.0
    %572 = vmatprep.subr.mxu0 0.0
    %573 = vmatpush1.msra.mxu0 0.0
    %574 = vmatprep.subr.mxu0 0.0
    %575 = vmatpush1.msra.mxu0 0.0
    %576 = vmatprep.subr.mxu0 0.0
    %577 = vmatpush1.msra.mxu0 0.0
    %578 = vmatprep.subr.mxu0 0.0
    %579 = vmatpush1.msra.mxu0 0.0
    %580 = vmatprep.subr.mxu0 0.0
    %581 = vmatpush1.msra.mxu0 0.0
    %582 = vmatprep.subr.mxu0 0.0
    %583 = vmatpush1.msra.mxu0 0.0
    %584 = vmatprep.subr.mxu0 0.0
    %585 = vmatpush1.msra.mxu0 0.0
    %586 = vmatprep.subr.mxu0 0.0
    %587 = vmatpush1.msra.mxu0 0.0
    %588 = vmatprep.subr.mxu0 0.0
    %589 = vmatpush1.msra.mxu0 0.0
    %590 = vmatprep.subr.mxu0 0.0
    %591 = vmatpush1.msra.mxu0 0.0
    %592 = vmatprep.subr.mxu0 0.0
    %593 = vmatpush1.msra.mxu0 0.0
    %594 = vmatprep.subr.mxu0 0.0
    %595 = vmatpush1.msra.mxu0 0.0
    %596 = vmatprep.subr.mxu0 0.0
    %597 = vmatpush1.msra.mxu0 %v525
    %598 = vmatprep.subr.mxu0 0.0
    %599 = vmatpush1.msra.mxu0 %v520
    %600 = vmatprep.subr.mxu0 0.0
    %601 = vmatpush2.msra.mxu0 0.0
    %602 = vmatprep.subr.mxu0 0.0
    %603 = vmatpush2.msra.mxu0 0.0
    %604 = vmatprep.subr.mxu0 0.0
    %605 = vmatpush2.msra.mxu0 0.0
    %606 = vmatprep.subr.mxu0 0.0
    %607 = vmatpush2.msra.mxu0 0.0
    %608 = vmatprep.subr.mxu0 0.0
    %609 = vmatpush2.msra.mxu0 0.0
    %610 = vmatprep.subr.mxu0 0.0
    %611 = vmatpush2.msra.mxu0 0.0
    %612 = vmatprep.subr.mxu0 0.0
    %613 = vmatpush2.msra.mxu0 0.0
    %614 = vmatprep.subr.mxu0 0.0
    %615 = vmatpush2.msra.mxu0 0.0
    %616 = vmatprep.subr.mxu0 0.0
    %617 = vmatpush2.msra.mxu0 0.0
    %618 = vmatprep.subr.mxu0 0.0
    %619 = vmatpush2.msra.mxu0 0.0
    %620 = vmatprep.subr.mxu0 0.0
    %621 = vmatpush2.msra.mxu0 0.0
    %622 = vmatprep.subr.mxu0 0.0
    %623 = vmatpush2.msra.mxu0 0.0
    %624 = vmatprep.subr.mxu0 0.0
    %625 = vmatpush2.msra.mxu0 0.0
    %626 = vmatprep.subr.mxu0 0.0
    %627 = vmatpush2.msra.mxu0 0.0
    %628 = vmatprep.subr.mxu0 0.0
    %629 = vmatpush2.msra.mxu0 0.0
    %630 = vmatprep.subr.mxu0 0.0
    %631 = vmatpush2.msra.mxu0 0.0
    %632 = vmatprep.mubr.f32.mxu0 0.0
    %633 = vmatmul.mubr.f32.gmra.mxu0 %v557
    %v634 = vpop.f32.mrf.mxu0
    %v635 = vadd.f32 %v539, %v634
    %v636 = vpop.f32.mrf.mxu0
    %637 = vmatprep.mubr.f32.mxu0 0.0
    %638 = vmatmul.mubr.f32.gmra.mxu0 %v560
    %v639 = vpop.f32.mrf.mxu0
    %v640 = vadd.f32 %v544, %v639
    %v641 = vpop.f32.mrf.mxu0
    %642 = vmatprep.mubr.f32.mxu0 0.0
    %643 = vmatmul.mubr.f32.gmra.mxu0 %v563
    %v644 = vpop.f32.mrf.mxu0
    %v645 = vadd.f32 %v549, %v644
    %v646 = vpop.f32.mrf.mxu0
    %647 = vmatprep.mubr.f32.mxu0 0.0
    %648 = vmatmul.mubr.f32.gmra.mxu0 %v566
    %v649 = vpop.f32.mrf.mxu0
    %v650 = vadd.f32 %v554, %v649
    %v651 = vpop.f32.mrf.mxu0
    %652 = vdwg.mxu0
    %v653 = vadd.f32 %v635, %v163
    %v654 = vadd.f32 %v640, %v164
    %v655 = vadd.f32 %v645, %v165
    %v656 = vadd.f32 %v650, %v166
    %s657 = scalar_lea.vmem %s4, 48
    %v658 = vld [vmem:[%s657] sm:$0xff]
    %v659 = vld [vmem:[%s657 + $0x8] sm:$0xff]
    %v660 = vld [vmem:[%s657 + $0x10] sm:$0xff]
    %v661 = vld [vmem:[%s657 + $0x18] sm:$0xff]
    %v662 = vld [vmem:[%s657 + $0x20] sm:$0xff]
    %v663 = vld [vmem:[%s657 + $0x28] sm:$0xff]
    %s664 = scalar_lea.vmem %s5, 48
    %v665 = vld [vmem:[%s664] sm:$0xff]
    %v666 = vld [vmem:[%s664 + $0x8] sm:$0xff]
    %v667 = vld [vmem:[%s664 + $0x10] sm:$0xff]
    %v668 = vld [vmem:[%s664 + $0x18] sm:$0xff]
    %v669 = vld [vmem:[%s664 + $0x20] sm:$0xff]
    %v670 = vld [vmem:[%s664 + $0x28] sm:$0xff]
    %672 = vset.pattern.permute.xlu0 0
    %673 = vperm.xlu0 %672, %v665
    %v674 = vpop.permute.xlu0 %673
    %677 = vset.pattern.permute.xlu0 0
    %678 = vperm.xlu0 %677, %v666
    %v679 = vpop.permute.xlu0 %678
    %682 = vset.pattern.permute.xlu0 0
    %683 = vperm.xlu0 %682, %v667
    %v684 = vpop.permute.xlu0 %683
    %687 = vset.pattern.permute.xlu0 0
    %688 = vperm.xlu0 %687, %v668
    %v689 = vpop.permute.xlu0 %688
    %692 = vset.pattern.permute.xlu0 0
    %693 = vperm.xlu0 %692, %v669
    %v694 = vpop.permute.xlu0 %693
    %697 = vset.pattern.permute.xlu0 0
    %698 = vperm.xlu0 %697, %v670
    %v699 = vpop.permute.xlu0 %698
    %v702 = vsel %vm211, %v658, 0
    %v705 = vsel %vm211, %v659, 0
    %v708 = vsel %vm211, %v660, 0
    %v711 = vsel %vm211, %v661, 0
    %v714 = vsel %vm211, %v662, 0
    %v717 = vsel %vm211, %v663, 0
    %719 = vmatprep.subr.mxu0 0.0
    %720 = vmatpush1.msra.mxu0 0.0
    %721 = vmatprep.subr.mxu0 0.0
    %722 = vmatpush1.msra.mxu0 0.0
    %723 = vmatprep.subr.mxu0 0.0
    %724 = vmatpush1.msra.mxu0 0.0
    %725 = vmatprep.subr.mxu0 0.0
    %726 = vmatpush1.msra.mxu0 0.0
    %727 = vmatprep.subr.mxu0 0.0
    %728 = vmatpush1.msra.mxu0 0.0
    %729 = vmatprep.subr.mxu0 0.0
    %730 = vmatpush1.msra.mxu0 0.0
    %731 = vmatprep.subr.mxu0 0.0
    %732 = vmatpush1.msra.mxu0 0.0
    %733 = vmatprep.subr.mxu0 0.0
    %734 = vmatpush1.msra.mxu0 0.0
    %735 = vmatprep.subr.mxu0 0.0
    %736 = vmatpush1.msra.mxu0 0.0
    %737 = vmatprep.subr.mxu0 0.0
    %738 = vmatpush1.msra.mxu0 0.0
    %739 = vmatprep.subr.mxu0 0.0
    %740 = vmatpush1.msra.mxu0 0.0
    %741 = vmatprep.subr.mxu0 0.0
    %742 = vmatpush1.msra.mxu0 0.0
    %743 = vmatprep.subr.mxu0 0.0
    %744 = vmatpush1.msra.mxu0 %v656
    %745 = vmatprep.subr.mxu0 0.0
    %746 = vmatpush1.msra.mxu0 %v655
    %747 = vmatprep.subr.mxu0 0.0
    %748 = vmatpush1.msra.mxu0 %v654
    %749 = vmatprep.subr.mxu0 0.0
    %750 = vmatpush1.msra.mxu0 %v653
    %751 = vmatprep.subr.mxu0 0.0
    %752 = vmatpush2.msra.mxu0 0.0
    %753 = vmatprep.subr.mxu0 0.0
    %754 = vmatpush2.msra.mxu0 0.0
    %755 = vmatprep.subr.mxu0 0.0
    %756 = vmatpush2.msra.mxu0 0.0
    %757 = vmatprep.subr.mxu0 0.0
    %758 = vmatpush2.msra.mxu0 0.0
    %759 = vmatprep.subr.mxu0 0.0
    %760 = vmatpush2.msra.mxu0 0.0
    %761 = vmatprep.subr.mxu0 0.0
    %762 = vmatpush2.msra.mxu0 0.0
    %763 = vmatprep.subr.mxu0 0.0
    %764 = vmatpush2.msra.mxu0 0.0
    %765 = vmatprep.subr.mxu0 0.0
    %766 = vmatpush2.msra.mxu0 0.0
    %767 = vmatprep.subr.mxu0 0.0
    %768 = vmatpush2.msra.mxu0 0.0
    %769 = vmatprep.subr.mxu0 0.0
    %770 = vmatpush2.msra.mxu0 0.0
    %771 = vmatprep.subr.mxu0 0.0
    %772 = vmatpush2.msra.mxu0 0.0
    %773 = vmatprep.subr.mxu0 0.0
    %774 = vmatpush2.msra.mxu0 0.0
    %775 = vmatprep.subr.mxu0 0.0
    %776 = vmatpush2.msra.mxu0 0.0
    %777 = vmatprep.subr.mxu0 0.0
    %778 = vmatpush2.msra.mxu0 0.0
    %779 = vmatprep.subr.mxu0 0.0
    %780 = vmatpush2.msra.mxu0 0.0
    %781 = vmatprep.subr.mxu0 0.0
    %782 = vmatpush2.msra.mxu0 0.0
    %783 = vmatprep.mubr.f32.mxu0 0.0
    %784 = vmatmul.mubr.f32.gmra.mxu0 %v702
    %v785 = vpop.f32.mrf.mxu0
    %v786 = vadd.f32 %v674, %v785
    %v787 = vpop.f32.mrf.mxu0
    %788 = vmatprep.mubr.f32.mxu0 0.0
    %789 = vmatmul.mubr.f32.gmra.mxu0 %v705
    %v790 = vpop.f32.mrf.mxu0
    %v791 = vadd.f32 %v679, %v790
    %v792 = vpop.f32.mrf.mxu0
    %793 = vmatprep.mubr.f32.mxu0 0.0
    %794 = vmatmul.mubr.f32.gmra.mxu0 %v708
    %v795 = vpop.f32.mrf.mxu0
    %v796 = vadd.f32 %v684, %v795
    %v797 = vpop.f32.mrf.mxu0
    %798 = vmatprep.mubr.f32.mxu0 0.0
    %799 = vmatmul.mubr.f32.gmra.mxu0 %v711
    %v800 = vpop.f32.mrf.mxu0
    %v801 = vadd.f32 %v689, %v800
    %v802 = vpop.f32.mrf.mxu0
    %803 = vmatprep.mubr.f32.mxu0 0.0
    %804 = vmatmul.mubr.f32.gmra.mxu0 %v714
    %v805 = vpop.f32.mrf.mxu0
    %v806 = vadd.f32 %v694, %v805
    %v807 = vpop.f32.mrf.mxu0
    %808 = vmatprep.mubr.f32.mxu0 0.0
    %809 = vmatmul.mubr.f32.gmra.mxu0 %v717
    %v810 = vpop.f32.mrf.mxu0
    %v811 = vadd.f32 %v699, %v810
    %v812 = vpop.f32.mrf.mxu0
    %813 = vdwg.mxu0
    %814 = vxpose.xlu0.b32.start [1/16] %v796, 128
    %815 = vxpose.xlu0.b32.cont [2/16] %v801, 128
    %816 = vxpose.xlu0.b32.cont [3/16] 0.0, 128
    %817 = vxpose.xlu0.b32.cont [4/16] 0.0, 128
    %818 = vxpose.xlu0.b32.cont [5/16] 0.0, 128
    %819 = vxpose.xlu0.b32.cont [6/16] 0.0, 128
    %820 = vxpose.xlu0.b32.cont [7/16] 0.0, 128
    %821 = vxpose.xlu0.b32.cont [8/16] 0.0, 128
    %822 = vxpose.xlu0.b32.cont [9/16] 0.0, 128
    %823 = vxpose.xlu0.b32.cont [10/16] 0.0, 128
    %824 = vxpose.xlu0.b32.cont [11/16] 0.0, 128
    %825 = vxpose.xlu0.b32.cont [12/16] 0.0, 128
    %826 = vxpose.xlu0.b32.cont [13/16] 0.0, 128
    %827 = vxpose.xlu0.b32.cont [14/16] 0.0, 128
    %828 = vxpose.xlu0.b32.cont [15/16] 0.0, 128
    %829 = vxpose.xlu0.b32.end [16/16] 0.0, 128
    %v830 = vpop.trf.xlu0
    %v831 = vpop.trf.xlu0
    %v832 = vpop.trf.xlu0
    %v833 = vpop.trf.xlu0
    %v834 = vpop.trf.xlu0
    %v835 = vpop.trf.xlu0
    %v836 = vpop.trf.xlu0
    %v837 = vpop.trf.xlu0
    %v838 = vpop.trf.xlu0
    %v839 = vpop.trf.xlu0
    %v840 = vpop.trf.xlu0
    %v841 = vpop.trf.xlu0
    %v842 = vpop.trf.xlu0
    %v843 = vpop.trf.xlu0
    %v844 = vpop.trf.xlu0
    %v845 = vpop.trf.xlu0
    %v847 = vsel %vm357, %v830, 0
    %v850 = vsel %vm357, %v831, 0
    %852 = vmatprep.subr.mxu0 0.0
    %853 = vmatpush1.msra.mxu0 0.0
    %854 = vmatprep.subr.mxu0 0.0
    %855 = vmatpush1.msra.mxu0 0.0
    %856 = vmatprep.subr.mxu0 0.0
    %857 = vmatpush1.msra.mxu0 0.0
    %858 = vmatprep.subr.mxu0 0.0
    %859 = vmatpush1.msra.mxu0 0.0
    %860 = vmatprep.subr.mxu0 0.0
    %861 = vmatpush1.msra.mxu0 0.0
    %862 = vmatprep.subr.mxu0 0.0
    %863 = vmatpush1.msra.mxu0 0.0
    %864 = vmatprep.subr.mxu0 0.0
    %865 = vmatpush1.msra.mxu0 0.0
    %866 = vmatprep.subr.mxu0 0.0
    %867 = vmatpush1.msra.mxu0 0.0
    %868 = vmatprep.subr.mxu0 0.0
    %869 = vmatpush1.msra.mxu0 0.0
    %870 = vmatprep.subr.mxu0 0.0
    %871 = vmatpush1.msra.mxu0 0.0
    %872 = vmatprep.subr.mxu0 0.0
    %873 = vmatpush1.msra.mxu0 0.0
    %874 = vmatprep.subr.mxu0 0.0
    %875 = vmatpush1.msra.mxu0 0.0
    %876 = vmatprep.subr.mxu0 0.0
    %877 = vmatpush1.msra.mxu0 0.0
    %878 = vmatprep.subr.mxu0 0.0
    %879 = vmatpush1.msra.mxu0 0.0
    %880 = vmatprep.subr.mxu0 0.0
    %881 = vmatpush1.msra.mxu0 %v811
    %882 = vmatprep.subr.mxu0 0.0
    %883 = vmatpush1.msra.mxu0 %v806
    %884 = vmatprep.subr.mxu0 0.0
    %885 = vmatpush2.msra.mxu0 0.0
    %886 = vmatprep.subr.mxu0 0.0
    %887 = vmatpush2.msra.mxu0 0.0
    %888 = vmatprep.subr.mxu0 0.0
    %889 = vmatpush2.msra.mxu0 0.0
    %890 = vmatprep.subr.mxu0 0.0
    %891 = vmatpush2.msra.mxu0 0.0
    %892 = vmatprep.subr.mxu0 0.0
    %893 = vmatpush2.msra.mxu0 0.0
    %894 = vmatprep.subr.mxu0 0.0
    %895 = vmatpush2.msra.mxu0 0.0
    %896 = vmatprep.subr.mxu0 0.0
    %897 = vmatpush2.msra.mxu0 0.0
    %898 = vmatprep.subr.mxu0 0.0
    %899 = vmatpush2.msra.mxu0 0.0
    %900 = vmatprep.subr.mxu0 0.0
    %901 = vmatpush2.msra.mxu0 0.0
    %902 = vmatprep.subr.mxu0 0.0
    %903 = vmatpush2.msra.mxu0 0.0
    %904 = vmatprep.subr.mxu0 0.0
    %905 = vmatpush2.msra.mxu0 0.0
    %906 = vmatprep.subr.mxu0 0.0
    %907 = vmatpush2.msra.mxu0 0.0
    %908 = vmatprep.subr.mxu0 0.0
    %909 = vmatpush2.msra.mxu0 0.0
    %910 = vmatprep.subr.mxu0 0.0
    %911 = vmatpush2.msra.mxu0 0.0
    %912 = vmatprep.subr.mxu0 0.0
    %913 = vmatpush2.msra.mxu0 0.0
    %914 = vmatprep.subr.mxu0 0.0
    %915 = vmatpush2.msra.mxu0 0.0
    %916 = vmatprep.mubr.f32.mxu0 0.0
    %917 = vmatmul.mubr.f32.gmra.mxu0 %v847
    %v918 = vpop.f32.mrf.mxu0
    %v919 = vadd.f32 0.0, %v918
    %v920 = vpop.f32.mrf.mxu0
    %921 = vmatprep.mubr.f32.mxu0 0.0
    %922 = vmatmul.mubr.f32.gmra.mxu0 %v850
    %v923 = vpop.f32.mrf.mxu0
    %v924 = vadd.f32 0.0, %v923
    %v925 = vpop.f32.mrf.mxu0
    %926 = vdwg.mxu0
    %v927 = vmul.f32 %v919, %v167
    %v928 = vmul.f32 %v924, %v168
    %v930 = vsel %vm357, %v786, 0
    %v933 = vsel %vm357, %v791, 0
    %v936 = vsel %vm357, %v927, 0
    %v939 = vsel %vm357, %v928, 0
    %941 = vmatprep.subr.mxu0 0.0
    %942 = vmatpush1.xpose.msra.mxu0 0.0
    %943 = vmatprep.subr.mxu0 0.0
    %944 = vmatpush1.xpose.msra.mxu0 0.0
    %945 = vmatprep.subr.mxu0 0.0
    %946 = vmatpush1.xpose.msra.mxu0 0.0
    %947 = vmatprep.subr.mxu0 0.0
    %948 = vmatpush1.xpose.msra.mxu0 0.0
    %949 = vmatprep.subr.mxu0 0.0
    %950 = vmatpush1.xpose.msra.mxu0 0.0
    %951 = vmatprep.subr.mxu0 0.0
    %952 = vmatpush1.xpose.msra.mxu0 0.0
    %953 = vmatprep.subr.mxu0 0.0
    %954 = vmatpush1.xpose.msra.mxu0 0.0
    %955 = vmatprep.subr.mxu0 0.0
    %956 = vmatpush1.xpose.msra.mxu0 0.0
    %957 = vmatprep.subr.mxu0 0.0
    %958 = vmatpush1.xpose.msra.mxu0 0.0
    %959 = vmatprep.subr.mxu0 0.0
    %960 = vmatpush1.xpose.msra.mxu0 0.0
    %961 = vmatprep.subr.mxu0 0.0
    %962 = vmatpush1.xpose.msra.mxu0 0.0
    %963 = vmatprep.subr.mxu0 0.0
    %964 = vmatpush1.xpose.msra.mxu0 0.0
    %965 = vmatprep.subr.mxu0 0.0
    %966 = vmatpush1.xpose.msra.mxu0 0.0
    %967 = vmatprep.subr.mxu0 0.0
    %968 = vmatpush1.xpose.msra.mxu0 0.0
    %969 = vmatprep.subr.mxu0 0.0
    %970 = vmatpush1.xpose.msra.mxu0 %v939
    %971 = vmatprep.subr.mxu0 0.0
    %972 = vmatpush1.xpose.msra.mxu0 %v936
    %973 = vmatprep.subr.mxu0 0.0
    %974 = vmatpush2.xpose.msra.mxu0 0.0
    %975 = vmatprep.subr.mxu0 0.0
    %976 = vmatpush2.xpose.msra.mxu0 0.0
    %977 = vmatprep.subr.mxu0 0.0
    %978 = vmatpush2.xpose.msra.mxu0 0.0
    %979 = vmatprep.subr.mxu0 0.0
    %980 = vmatpush2.xpose.msra.mxu0 0.0
    %981 = vmatprep.subr.mxu0 0.0
    %982 = vmatpush2.xpose.msra.mxu0 0.0
    %983 = vmatprep.subr.mxu0 0.0
    %984 = vmatpush2.xpose.msra.mxu0 0.0
    %985 = vmatprep.subr.mxu0 0.0
    %986 = vmatpush2.xpose.msra.mxu0 0.0
    %987 = vmatprep.subr.mxu0 0.0
    %988 = vmatpush2.xpose.msra.mxu0 0.0
    %989 = vmatprep.subr.mxu0 0.0
    %990 = vmatpush2.xpose.msra.mxu0 0.0
    %991 = vmatprep.subr.mxu0 0.0
    %992 = vmatpush2.xpose.msra.mxu0 0.0
    %993 = vmatprep.subr.mxu0 0.0
    %994 = vmatpush2.xpose.msra.mxu0 0.0
    %995 = vmatprep.subr.mxu0 0.0
    %996 = vmatpush2.xpose.msra.mxu0 0.0
    %997 = vmatprep.subr.mxu0 0.0
    %998 = vmatpush2.xpose.msra.mxu0 0.0
    %999 = vmatprep.subr.mxu0 0.0
    %1000 = vmatpush2.xpose.msra.mxu0 0.0
    %1001 = vmatprep.subr.mxu0 0.0
    %1002 = vmatpush2.xpose.msra.mxu0 0.0
    %1003 = vmatprep.subr.mxu0 0.0
    %1004 = vmatpush2.xpose.msra.mxu0 0.0
    %1005 = vmatprep.mubr.f32.mxu0 0.0
    %1006 = vmatmul.mubr.f32.gmra.mxu0 %v930
    %v1007 = vpop.f32.mrf.mxu0
    %v1008 = vadd.f32 0.0, %v1007
    %v1009 = vpop.f32.mrf.mxu0
    %1010 = vmatprep.mubr.f32.mxu0 0.0
    %1011 = vmatmul.mubr.f32.gmra.mxu0 %v933
    %v1012 = vpop.f32.mrf.mxu0
    %v1013 = vadd.f32 0.0, %v1012
    %v1014 = vpop.f32.mrf.mxu0
    %1015 = vdwg.mxu0
    %s1016 = scalar_lea.vmem %s6, 32
    %v1017 = vld [vmem:[%s1016] sm:$0xff]
    %v1018 = vld [vmem:[%s1016 + $0x8] sm:$0xff]
    %v1019 = vld [vmem:[%s1016 + $0x10] sm:$0xff]
    %v1020 = vld [vmem:[%s1016 + $0x18] sm:$0xff]
    %s1021 = scalar_lea.vmem %s7, 32
    %v1022 = vld [vmem:[%s1021] sm:$0xff]
    %v1023 = vld [vmem:[%s1021 + $0x8] sm:$0xff]
    %v1024 = vld [vmem:[%s1021 + $0x10] sm:$0xff]
    %v1025 = vld [vmem:[%s1021 + $0x18] sm:$0xff]
    %1027 = vset.pattern.permute.xlu0 0
    %1028 = vperm.xlu0 %1027, %v1022
    %v1029 = vpop.permute.xlu0 %1028
    %1032 = vset.pattern.permute.xlu0 0
    %1033 = vperm.xlu0 %1032, %v1023
    %v1034 = vpop.permute.xlu0 %1033
    %1037 = vset.pattern.permute.xlu0 0
    %1038 = vperm.xlu0 %1037, %v1024
    %v1039 = vpop.permute.xlu0 %1038
    %1042 = vset.pattern.permute.xlu0 0
    %1043 = vperm.xlu0 %1042, %v1025
    %v1044 = vpop.permute.xlu0 %1043
    %v1047 = vsel %vm357, %v1017, 0
    %v1050 = vsel %vm357, %v1018, 0
    %v1053 = vsel %vm357, %v1019, 0
    %v1056 = vsel %vm357, %v1020, 0
    %1058 = vmatprep.subr.mxu0 0.0
    %1059 = vmatpush1.msra.mxu0 0.0
    %1060 = vmatprep.subr.mxu0 0.0
    %1061 = vmatpush1.msra.mxu0 0.0
    %1062 = vmatprep.subr.mxu0 0.0
    %1063 = vmatpush1.msra.mxu0 0.0
    %1064 = vmatprep.subr.mxu0 0.0
    %1065 = vmatpush1.msra.mxu0 0.0
    %1066 = vmatprep.subr.mxu0 0.0
    %1067 = vmatpush1.msra.mxu0 0.0
    %1068 = vmatprep.subr.mxu0 0.0
    %1069 = vmatpush1.msra.mxu0 0.0
    %1070 = vmatprep.subr.mxu0 0.0
    %1071 = vmatpush1.msra.mxu0 0.0
    %1072 = vmatprep.subr.mxu0 0.0
    %1073 = vmatpush1.msra.mxu0 0.0
    %1074 = vmatprep.subr.mxu0 0.0
    %1075 = vmatpush1.msra.mxu0 0.0
    %1076 = vmatprep.subr.mxu0 0.0
    %1077 = vmatpush1.msra.mxu0 0.0
    %1078 = vmatprep.subr.mxu0 0.0
    %1079 = vmatpush1.msra.mxu0 0.0
    %1080 = vmatprep.subr.mxu0 0.0
    %1081 = vmatpush1.msra.mxu0 0.0
    %1082 = vmatprep.subr.mxu0 0.0
    %1083 = vmatpush1.msra.mxu0 0.0
    %1084 = vmatprep.subr.mxu0 0.0
    %1085 = vmatpush1.msra.mxu0 0.0
    %1086 = vmatprep.subr.mxu0 0.0
    %1087 = vmatpush1.msra.mxu0 %v1013
    %1088 = vmatprep.subr.mxu0 0.0
    %1089 = vmatpush1.msra.mxu0 %v1008
    %1090 = vmatprep.subr.mxu0 0.0
    %1091 = vmatpush2.msra.mxu0 0.0
    %1092 = vmatprep.subr.mxu0 0.0
    %1093 = vmatpush2.msra.mxu0 0.0
    %1094 = vmatprep.subr.mxu0 0.0
    %1095 = vmatpush2.msra.mxu0 0.0
    %1096 = vmatprep.subr.mxu0 0.0
    %1097 = vmatpush2.msra.mxu0 0.0
    %1098 = vmatprep.subr.mxu0 0.0
    %1099 = vmatpush2.msra.mxu0 0.0
    %1100 = vmatprep.subr.mxu0 0.0
    %1101 = vmatpush2.msra.mxu0 0.0
    %1102 = vmatprep.subr.mxu0 0.0
    %1103 = vmatpush2.msra.mxu0 0.0
    %1104 = vmatprep.subr.mxu0 0.0
    %1105 = vmatpush2.msra.mxu0 0.0
    %1106 = vmatprep.subr.mxu0 0.0
    %1107 = vmatpush2.msra.mxu0 0.0
    %1108 = vmatprep.subr.mxu0 0.0
    %1109 = vmatpush2.msra.mxu0 0.0
    %1110 = vmatprep.subr.mxu0 0.0
    %1111 = vmatpush2.msra.mxu0 0.0
    %1112 = vmatprep.subr.mxu0 0.0
    %1113 = vmatpush2.msra.mxu0 0.0
    %1114 = vmatprep.subr.mxu0 0.0
    %1115 = vmatpush2.msra.mxu0 0.0
    %1116 = vmatprep.subr.mxu0 0.0
    %1117 = vmatpush2.msra.mxu0 0.0
    %1118 = vmatprep.subr.mxu0 0.0
    %1119 = vmatpush2.msra.mxu0 0.0
    %1120 = vmatprep.subr.mxu0 0.0
    %1121 = vmatpush2.msra.mxu0 0.0
    %1122 = vmatprep.mubr.f32.mxu0 0.0
    %1123 = vmatmul.mubr.f32.gmra.mxu0 %v1047
    %v1124 = vpop.f32.mrf.mxu0
    %v1125 = vadd.f32 %v1029, %v1124
    %v1126 = vpop.f32.mrf.mxu0
    %1127 = vmatprep.mubr.f32.mxu0 0.0
    %1128 = vmatmul.mubr.f32.gmra.mxu0 %v1050
    %v1129 = vpop.f32.mrf.mxu0
    %v1130 = vadd.f32 %v1034, %v1129
    %v1131 = vpop.f32.mrf.mxu0
    %1132 = vmatprep.mubr.f32.mxu0 0.0
    %1133 = vmatmul.mubr.f32.gmra.mxu0 %v1053
    %v1134 = vpop.f32.mrf.mxu0
    %v1135 = vadd.f32 %v1039, %v1134
    %v1136 = vpop.f32.mrf.mxu0
    %1137 = vmatprep.mubr.f32.mxu0 0.0
    %1138 = vmatmul.mubr.f32.gmra.mxu0 %v1056
    %v1139 = vpop.f32.mrf.mxu0
    %v1140 = vadd.f32 %v1044, %v1139
    %v1141 = vpop.f32.mrf.mxu0
    %1142 = vdwg.mxu0
    %v1143 = vadd.f32 %v1125, %v653
    %v1144 = vadd.f32 %v1130, %v654
    %v1145 = vadd.f32 %v1135, %v655
    %v1146 = vadd.f32 %v1140, %v656
    %s1147 = scalar_lea.vmem %s4, 96
    %v1148 = vld [vmem:[%s1147] sm:$0xff]
    %v1149 = vld [vmem:[%s1147 + $0x8] sm:$0xff]
    %v1150 = vld [vmem:[%s1147 + $0x10] sm:$0xff]
    %v1151 = vld [vmem:[%s1147 + $0x18] sm:$0xff]
    %v1152 = vld [vmem:[%s1147 + $0x20] sm:$0xff]
    %v1153 = vld [vmem:[%s1147 + $0x28] sm:$0xff]
    %s1154 = scalar_lea.vmem %s5, 96
    %v1155 = vld [vmem:[%s1154] sm:$0xff]
    %v1156 = vld [vmem:[%s1154 + $0x8] sm:$0xff]
    %v1157 = vld [vmem:[%s1154 + $0x10] sm:$0xff]
    %v1158 = vld [vmem:[%s1154 + $0x18] sm:$0xff]
    %v1159 = vld [vmem:[%s1154 + $0x20] sm:$0xff]
    %v1160 = vld [vmem:[%s1154 + $0x28] sm:$0xff]
    %1162 = vset.pattern.permute.xlu0 0
    %1163 = vperm.xlu0 %1162, %v1155
    %v1164 = vpop.permute.xlu0 %1163
    %1167 = vset.pattern.permute.xlu0 0
    %1168 = vperm.xlu0 %1167, %v1156
    %v1169 = vpop.permute.xlu0 %1168
    %1172 = vset.pattern.permute.xlu0 0
    %1173 = vperm.xlu0 %1172, %v1157
    %v1174 = vpop.permute.xlu0 %1173
    %1177 = vset.pattern.permute.xlu0 0
    %1178 = vperm.xlu0 %1177, %v1158
    %v1179 = vpop.permute.xlu0 %1178
    %1182 = vset.pattern.permute.xlu0 0
    %1183 = vperm.xlu0 %1182, %v1159
    %v1184 = vpop.permute.xlu0 %1183
    %1187 = vset.pattern.permute.xlu0 0
    %1188 = vperm.xlu0 %1187, %v1160
    %v1189 = vpop.permute.xlu0 %1188
    %v1192 = vsel %vm211, %v1148, 0
    %v1195 = vsel %vm211, %v1149, 0
    %v1198 = vsel %vm211, %v1150, 0
    %v1201 = vsel %vm211, %v1151, 0
    %v1204 = vsel %vm211, %v1152, 0
    %v1207 = vsel %vm211, %v1153, 0
    %1209 = vmatprep.subr.mxu0 0.0
    %1210 = vmatpush1.msra.mxu0 0.0
    %1211 = vmatprep.subr.mxu0 0.0
    %1212 = vmatpush1.msra.mxu0 0.0
    %1213 = vmatprep.subr.mxu0 0.0
    %1214 = vmatpush1.msra.mxu0 0.0
    %1215 = vmatprep.subr.mxu0 0.0
    %1216 = vmatpush1.msra.mxu0 0.0
    %1217 = vmatprep.subr.mxu0 0.0
    %1218 = vmatpush1.msra.mxu0 0.0
    %1219 = vmatprep.subr.mxu0 0.0
    %1220 = vmatpush1.msra.mxu0 0.0
    %1221 = vmatprep.subr.mxu0 0.0
    %1222 = vmatpush1.msra.mxu0 0.0
    %1223 = vmatprep.subr.mxu0 0.0
    %1224 = vmatpush1.msra.mxu0 0.0
    %1225 = vmatprep.subr.mxu0 0.0
    %1226 = vmatpush1.msra.mxu0 0.0
    %1227 = vmatprep.subr.mxu0 0.0
    %1228 = vmatpush1.msra.mxu0 0.0
    %1229 = vmatprep.subr.mxu0 0.0
    %1230 = vmatpush1.msra.mxu0 0.0
    %1231 = vmatprep.subr.mxu0 0.0
    %1232 = vmatpush1.msra.mxu0 0.0
    %1233 = vmatprep.subr.mxu0 0.0
    %1234 = vmatpush1.msra.mxu0 %v1146
    %1235 = vmatprep.subr.mxu0 0.0
    %1236 = vmatpush1.msra.mxu0 %v1145
    %1237 = vmatprep.subr.mxu0 0.0
    %1238 = vmatpush1.msra.mxu0 %v1144
    %1239 = vmatprep.subr.mxu0 0.0
    %1240 = vmatpush1.msra.mxu0 %v1143
    %1241 = vmatprep.subr.mxu0 0.0
    %1242 = vmatpush2.msra.mxu0 0.0
    %1243 = vmatprep.subr.mxu0 0.0
    %1244 = vmatpush2.msra.mxu0 0.0
    %1245 = vmatprep.subr.mxu0 0.0
    %1246 = vmatpush2.msra.mxu0 0.0
    %1247 = vmatprep.subr.mxu0 0.0
    %1248 = vmatpush2.msra.mxu0 0.0
    %1249 = vmatprep.subr.mxu0 0.0
    %1250 = vmatpush2.msra.mxu0 0.0
    %1251 = vmatprep.subr.mxu0 0.0
    %1252 = vmatpush2.msra.mxu0 0.0
    %1253 = vmatprep.subr.mxu0 0.0
    %1254 = vmatpush2.msra.mxu0 0.0
    %1255 = vmatprep.subr.mxu0 0.0
    %1256 = vmatpush2.msra.mxu0 0.0
    %1257 = vmatprep.subr.mxu0 0.0
    %1258 = vmatpush2.msra.mxu0 0.0
    %1259 = vmatprep.subr.mxu0 0.0
    %1260 = vmatpush2.msra.mxu0 0.0
    %1261 = vmatprep.subr.mxu0 0.0
    %1262 = vmatpush2.msra.mxu0 0.0
    %1263 = vmatprep.subr.mxu0 0.0
    %1264 = vmatpush2.msra.mxu0 0.0
    %1265 = vmatprep.subr.mxu0 0.0
    %1266 = vmatpush2.msra.mxu0 0.0
    %1267 = vmatprep.subr.mxu0 0.0
    %1268 = vmatpush2.msra.mxu0 0.0
    %1269 = vmatprep.subr.mxu0 0.0
    %1270 = vmatpush2.msra.mxu0 0.0
    %1271 = vmatprep.subr.mxu0 0.0
    %1272 = vmatpush2.msra.mxu0 0.0
    %1273 = vmatprep.mubr.f32.mxu0 0.0
    %1274 = vmatmul.mubr.f32.gmra.mxu0 %v1192
    %v1275 = vpop.f32.mrf.mxu0
    %v1276 = vadd.f32 %v1164, %v1275
    %v1277 = vpop.f32.mrf.mxu0
    %1278 = vmatprep.mubr.f32.mxu0 0.0
    %1279 = vmatmul.mubr.f32.gmra.mxu0 %v1195
    %v1280 = vpop.f32.mrf.mxu0
    %v1281 = vadd.f32 %v1169, %v1280
    %v1282 = vpop.f32.mrf.mxu0
    %1283 = vmatprep.mubr.f32.mxu0 0.0
    %1284 = vmatmul.mubr.f32.gmra.mxu0 %v1198
    %v1285 = vpop.f32.mrf.mxu0
    %v1286 = vadd.f32 %v1174, %v1285
    %v1287 = vpop.f32.mrf.mxu0
    %1288 = vmatprep.mubr.f32.mxu0 0.0
    %1289 = vmatmul.mubr.f32.gmra.mxu0 %v1201
    %v1290 = vpop.f32.mrf.mxu0
    %v1291 = vadd.f32 %v1179, %v1290
    %v1292 = vpop.f32.mrf.mxu0
    %1293 = vmatprep.mubr.f32.mxu0 0.0
    %1294 = vmatmul.mubr.f32.gmra.mxu0 %v1204
    %v1295 = vpop.f32.mrf.mxu0
    %v1296 = vadd.f32 %v1184, %v1295
    %v1297 = vpop.f32.mrf.mxu0
    %1298 = vmatprep.mubr.f32.mxu0 0.0
    %1299 = vmatmul.mubr.f32.gmra.mxu0 %v1207
    %v1300 = vpop.f32.mrf.mxu0
    %v1301 = vadd.f32 %v1189, %v1300
    %v1302 = vpop.f32.mrf.mxu0
    %1303 = vdwg.mxu0
    %1304 = vxpose.xlu0.b32.start [1/16] %v1286, 128
    %1305 = vxpose.xlu0.b32.cont [2/16] %v1291, 128
    %1306 = vxpose.xlu0.b32.cont [3/16] 0.0, 128
    %1307 = vxpose.xlu0.b32.cont [4/16] 0.0, 128
    %1308 = vxpose.xlu0.b32.cont [5/16] 0.0, 128
    %1309 = vxpose.xlu0.b32.cont [6/16] 0.0, 128
    %1310 = vxpose.xlu0.b32.cont [7/16] 0.0, 128
    %1311 = vxpose.xlu0.b32.cont [8/16] 0.0, 128
    %1312 = vxpose.xlu0.b32.cont [9/16] 0.0, 128
    %1313 = vxpose.xlu0.b32.cont [10/16] 0.0, 128
    %1314 = vxpose.xlu0.b32.cont [11/16] 0.0, 128
    %1315 = vxpose.xlu0.b32.cont [12/16] 0.0, 128
    %1316 = vxpose.xlu0.b32.cont [13/16] 0.0, 128
    %1317 = vxpose.xlu0.b32.cont [14/16] 0.0, 128
    %1318 = vxpose.xlu0.b32.cont [15/16] 0.0, 128
    %1319 = vxpose.xlu0.b32.end [16/16] 0.0, 128
    %v1320 = vpop.trf.xlu0
    %v1321 = vpop.trf.xlu0
    %v1322 = vpop.trf.xlu0
    %v1323 = vpop.trf.xlu0
    %v1324 = vpop.trf.xlu0
    %v1325 = vpop.trf.xlu0
    %v1326 = vpop.trf.xlu0
    %v1327 = vpop.trf.xlu0
    %v1328 = vpop.trf.xlu0
    %v1329 = vpop.trf.xlu0
    %v1330 = vpop.trf.xlu0
    %v1331 = vpop.trf.xlu0
    %v1332 = vpop.trf.xlu0
    %v1333 = vpop.trf.xlu0
    %v1334 = vpop.trf.xlu0
    %v1335 = vpop.trf.xlu0
    %v1337 = vsel %vm357, %v1320, 0
    %v1340 = vsel %vm357, %v1321, 0
    %1342 = vmatprep.subr.mxu0 0.0
    %1343 = vmatpush1.msra.mxu0 0.0
    %1344 = vmatprep.subr.mxu0 0.0
    %1345 = vmatpush1.msra.mxu0 0.0
    %1346 = vmatprep.subr.mxu0 0.0
    %1347 = vmatpush1.msra.mxu0 0.0
    %1348 = vmatprep.subr.mxu0 0.0
    %1349 = vmatpush1.msra.mxu0 0.0
    %1350 = vmatprep.subr.mxu0 0.0
    %1351 = vmatpush1.msra.mxu0 0.0
    %1352 = vmatprep.subr.mxu0 0.0
    %1353 = vmatpush1.msra.mxu0 0.0
    %1354 = vmatprep.subr.mxu0 0.0
    %1355 = vmatpush1.msra.mxu0 0.0
    %1356 = vmatprep.subr.mxu0 0.0
    %1357 = vmatpush1.msra.mxu0 0.0
    %1358 = vmatprep.subr.mxu0 0.0
    %1359 = vmatpush1.msra.mxu0 0.0
    %1360 = vmatprep.subr.mxu0 0.0
    %1361 = vmatpush1.msra.mxu0 0.0
    %1362 = vmatprep.subr.mxu0 0.0
    %1363 = vmatpush1.msra.mxu0 0.0
    %1364 = vmatprep.subr.mxu0 0.0
    %1365 = vmatpush1.msra.mxu0 0.0
    %1366 = vmatprep.subr.mxu0 0.0
    %1367 = vmatpush1.msra.mxu0 0.0
    %1368 = vmatprep.subr.mxu0 0.0
    %1369 = vmatpush1.msra.mxu0 0.0
    %1370 = vmatprep.subr.mxu0 0.0
    %1371 = vmatpush1.msra.mxu0 %v1301
    %1372 = vmatprep.subr.mxu0 0.0
    %1373 = vmatpush1.msra.mxu0 %v1296
    %1374 = vmatprep.subr.mxu0 0.0
    %1375 = vmatpush2.msra.mxu0 0.0
    %1376 = vmatprep.subr.mxu0 0.0
    %1377 = vmatpush2.msra.mxu0 0.0
    %1378 = vmatprep.subr.mxu0 0.0
    %1379 = vmatpush2.msra.mxu0 0.0
    %1380 = vmatprep.subr.mxu0 0.0
    %1381 = vmatpush2.msra.mxu0 0.0
    %1382 = vmatprep.subr.mxu0 0.0
    %1383 = vmatpush2.msra.mxu0 0.0
    %1384 = vmatprep.subr.mxu0 0.0
    %1385 = vmatpush2.msra.mxu0 0.0
    %1386 = vmatprep.subr.mxu0 0.0
    %1387 = vmatpush2.msra.mxu0 0.0
    %1388 = vmatprep.subr.mxu0 0.0
    %1389 = vmatpush2.msra.mxu0 0.0
    %1390 = vmatprep.subr.mxu0 0.0
    %1391 = vmatpush2.msra.mxu0 0.0
    %1392 = vmatprep.subr.mxu0 0.0
    %1393 = vmatpush2.msra.mxu0 0.0
    %1394 = vmatprep.subr.mxu0 0.0
    %1395 = vmatpush2.msra.mxu0 0.0
    %1396 = vmatprep.subr.mxu0 0.0
    %1397 = vmatpush2.msra.mxu0 0.0
    %1398 = vmatprep.subr.mxu0 0.0
    %1399 = vmatpush2.msra.mxu0 0.0
    %1400 = vmatprep.subr.mxu0 0.0
    %1401 = vmatpush2.msra.mxu0 0.0
    %1402 = vmatprep.subr.mxu0 0.0
    %1403 = vmatpush2.msra.mxu0 0.0
    %1404 = vmatprep.subr.mxu0 0.0
    %1405 = vmatpush2.msra.mxu0 0.0
    %1406 = vmatprep.mubr.f32.mxu0 0.0
    %1407 = vmatmul.mubr.f32.gmra.mxu0 %v1337
    %v1408 = vpop.f32.mrf.mxu0
    %v1409 = vadd.f32 0.0, %v1408
    %v1410 = vpop.f32.mrf.mxu0
    %1411 = vmatprep.mubr.f32.mxu0 0.0
    %1412 = vmatmul.mubr.f32.gmra.mxu0 %v1340
    %v1413 = vpop.f32.mrf.mxu0
    %v1414 = vadd.f32 0.0, %v1413
    %v1415 = vpop.f32.mrf.mxu0
    %1416 = vdwg.mxu0
    %v1417 = vmul.f32 %v1409, %v167
    %v1418 = vmul.f32 %v1414, %v168
    %v1420 = vsel %vm357, %v1276, 0
    %v1423 = vsel %vm357, %v1281, 0
    %v1426 = vsel %vm357, %v1417, 0
    %v1429 = vsel %vm357, %v1418, 0
    %1431 = vmatprep.subr.mxu0 0.0
    %1432 = vmatpush1.xpose.msra.mxu0 0.0
    %1433 = vmatprep.subr.mxu0 0.0
    %1434 = vmatpush1.xpose.msra.mxu0 0.0
    %1435 = vmatprep.subr.mxu0 0.0
    %1436 = vmatpush1.xpose.msra.mxu0 0.0
    %1437 = vmatprep.subr.mxu0 0.0
    %1438 = vmatpush1.xpose.msra.mxu0 0.0
    %1439 = vmatprep.subr.mxu0 0.0
    %1440 = vmatpush1.xpose.msra.mxu0 0.0
    %1441 = vmatprep.subr.mxu0 0.0
    %1442 = vmatpush1.xpose.msra.mxu0 0.0
    %1443 = vmatprep.subr.mxu0 0.0
    %1444 = vmatpush1.xpose.msra.mxu0 0.0
    %1445 = vmatprep.subr.mxu0 0.0
    %1446 = vmatpush1.xpose.msra.mxu0 0.0
    %1447 = vmatprep.subr.mxu0 0.0
    %1448 = vmatpush1.xpose.msra.mxu0 0.0
    %1449 = vmatprep.subr.mxu0 0.0
    %1450 = vmatpush1.xpose.msra.mxu0 0.0
    %1451 = vmatprep.subr.mxu0 0.0
    %1452 = vmatpush1.xpose.msra.mxu0 0.0
    %1453 = vmatprep.subr.mxu0 0.0
    %1454 = vmatpush1.xpose.msra.mxu0 0.0
    %1455 = vmatprep.subr.mxu0 0.0
    %1456 = vmatpush1.xpose.msra.mxu0 0.0
    %1457 = vmatprep.subr.mxu0 0.0
    %1458 = vmatpush1.xpose.msra.mxu0 0.0
    %1459 = vmatprep.subr.mxu0 0.0
    %1460 = vmatpush1.xpose.msra.mxu0 %v1429
    %1461 = vmatprep.subr.mxu0 0.0
    %1462 = vmatpush1.xpose.msra.mxu0 %v1426
    %1463 = vmatprep.subr.mxu0 0.0
    %1464 = vmatpush2.xpose.msra.mxu0 0.0
    %1465 = vmatprep.subr.mxu0 0.0
    %1466 = vmatpush2.xpose.msra.mxu0 0.0
    %1467 = vmatprep.subr.mxu0 0.0
    %1468 = vmatpush2.xpose.msra.mxu0 0.0
    %1469 = vmatprep.subr.mxu0 0.0
    %1470 = vmatpush2.xpose.msra.mxu0 0.0
    %1471 = vmatprep.subr.mxu0 0.0
    %1472 = vmatpush2.xpose.msra.mxu0 0.0
    %1473 = vmatprep.subr.mxu0 0.0
    %1474 = vmatpush2.xpose.msra.mxu0 0.0
    %1475 = vmatprep.subr.mxu0 0.0
    %1476 = vmatpush2.xpose.msra.mxu0 0.0
    %1477 = vmatprep.subr.mxu0 0.0
    %1478 = vmatpush2.xpose.msra.mxu0 0.0
    %1479 = vmatprep.subr.mxu0 0.0
    %1480 = vmatpush2.xpose.msra.mxu0 0.0
    %1481 = vmatprep.subr.mxu0 0.0
    %1482 = vmatpush2.xpose.msra.mxu0 0.0
    %1483 = vmatprep.subr.mxu0 0.0
    %1484 = vmatpush2.xpose.msra.mxu0 0.0
    %1485 = vmatprep.subr.mxu0 0.0
    %1486 = vmatpush2.xpose.msra.mxu0 0.0
    %1487 = vmatprep.subr.mxu0 0.0
    %1488 = vmatpush2.xpose.msra.mxu0 0.0
    %1489 = vmatprep.subr.mxu0 0.0
    %1490 = vmatpush2.xpose.msra.mxu0 0.0
    %1491 = vmatprep.subr.mxu0 0.0
    %1492 = vmatpush2.xpose.msra.mxu0 0.0
    %1493 = vmatprep.subr.mxu0 0.0
    %1494 = vmatpush2.xpose.msra.mxu0 0.0
    %1495 = vmatprep.mubr.f32.mxu0 0.0
    %1496 = vmatmul.mubr.f32.gmra.mxu0 %v1420
    %v1497 = vpop.f32.mrf.mxu0
    %v1498 = vadd.f32 0.0, %v1497
    %v1499 = vpop.f32.mrf.mxu0
    %1500 = vmatprep.mubr.f32.mxu0 0.0
    %1501 = vmatmul.mubr.f32.gmra.mxu0 %v1423
    %v1502 = vpop.f32.mrf.mxu0
    %v1503 = vadd.f32 0.0, %v1502
    %v1504 = vpop.f32.mrf.mxu0
    %1505 = vdwg.mxu0
    %s1506 = scalar_lea.vmem %s6, 64
    %v1507 = vld [vmem:[%s1506] sm:$0xff]
    %v1508 = vld [vmem:[%s1506 + $0x8] sm:$0xff]
    %v1509 = vld [vmem:[%s1506 + $0x10] sm:$0xff]
    %v1510 = vld [vmem:[%s1506 + $0x18] sm:$0xff]
    %s1511 = scalar_lea.vmem %s7, 64
    %v1512 = vld [vmem:[%s1511] sm:$0xff]
    %v1513 = vld [vmem:[%s1511 + $0x8] sm:$0xff]
    %v1514 = vld [vmem:[%s1511 + $0x10] sm:$0xff]
    %v1515 = vld [vmem:[%s1511 + $0x18] sm:$0xff]
    %1517 = vset.pattern.permute.xlu0 0
    %1518 = vperm.xlu0 %1517, %v1512
    %v1519 = vpop.permute.xlu0 %1518
    %1522 = vset.pattern.permute.xlu0 0
    %1523 = vperm.xlu0 %1522, %v1513
    %v1524 = vpop.permute.xlu0 %1523
    %1527 = vset.pattern.permute.xlu0 0
    %1528 = vperm.xlu0 %1527, %v1514
    %v1529 = vpop.permute.xlu0 %1528
    %1532 = vset.pattern.permute.xlu0 0
    %1533 = vperm.xlu0 %1532, %v1515
    %v1534 = vpop.permute.xlu0 %1533
    %v1537 = vsel %vm357, %v1507, 0
    %v1540 = vsel %vm357, %v1508, 0
    %v1543 = vsel %vm357, %v1509, 0
    %v1546 = vsel %vm357, %v1510, 0
    %1548 = vmatprep.subr.mxu0 0.0
    %1549 = vmatpush1.msra.mxu0 0.0
    %1550 = vmatprep.subr.mxu0 0.0
    %1551 = vmatpush1.msra.mxu0 0.0
    %1552 = vmatprep.subr.mxu0 0.0
    %1553 = vmatpush1.msra.mxu0 0.0
    %1554 = vmatprep.subr.mxu0 0.0
    %1555 = vmatpush1.msra.mxu0 0.0
    %1556 = vmatprep.subr.mxu0 0.0
    %1557 = vmatpush1.msra.mxu0 0.0
    %1558 = vmatprep.subr.mxu0 0.0
    %1559 = vmatpush1.msra.mxu0 0.0
    %1560 = vmatprep.subr.mxu0 0.0
    %1561 = vmatpush1.msra.mxu0 0.0
    %1562 = vmatprep.subr.mxu0 0.0
    %1563 = vmatpush1.msra.mxu0 0.0
    %1564 = vmatprep.subr.mxu0 0.0
    %1565 = vmatpush1.msra.mxu0 0.0
    %1566 = vmatprep.subr.mxu0 0.0
    %1567 = vmatpush1.msra.mxu0 0.0
    %1568 = vmatprep.subr.mxu0 0.0
    %1569 = vmatpush1.msra.mxu0 0.0
    %1570 = vmatprep.subr.mxu0 0.0
    %1571 = vmatpush1.msra.mxu0 0.0
    %1572 = vmatprep.subr.mxu0 0.0
    %1573 = vmatpush1.msra.mxu0 0.0
    %1574 = vmatprep.subr.mxu0 0.0
    %1575 = vmatpush1.msra.mxu0 0.0
    %1576 = vmatprep.subr.mxu0 0.0
    %1577 = vmatpush1.msra.mxu0 %v1503
    %1578 = vmatprep.subr.mxu0 0.0
    %1579 = vmatpush1.msra.mxu0 %v1498
    %1580 = vmatprep.subr.mxu0 0.0
    %1581 = vmatpush2.msra.mxu0 0.0
    %1582 = vmatprep.subr.mxu0 0.0
    %1583 = vmatpush2.msra.mxu0 0.0
    %1584 = vmatprep.subr.mxu0 0.0
    %1585 = vmatpush2.msra.mxu0 0.0
    %1586 = vmatprep.subr.mxu0 0.0
    %1587 = vmatpush2.msra.mxu0 0.0
    %1588 = vmatprep.subr.mxu0 0.0
    %1589 = vmatpush2.msra.mxu0 0.0
    %1590 = vmatprep.subr.mxu0 0.0
    %1591 = vmatpush2.msra.mxu0 0.0
    %1592 = vmatprep.subr.mxu0 0.0
    %1593 = vmatpush2.msra.mxu0 0.0
    %1594 = vmatprep.subr.mxu0 0.0
    %1595 = vmatpush2.msra.mxu0 0.0
    %1596 = vmatprep.subr.mxu0 0.0
    %1597 = vmatpush2.msra.mxu0 0.0
    %1598 = vmatprep.subr.mxu0 0.0
    %1599 = vmatpush2.msra.mxu0 0.0
    %1600 = vmatprep.subr.mxu0 0.0
    %1601 = vmatpush2.msra.mxu0 0.0
    %1602 = vmatprep.subr.mxu0 0.0
    %1603 = vmatpush2.msra.mxu0 0.0
    %1604 = vmatprep.subr.mxu0 0.0
    %1605 = vmatpush2.msra.mxu0 0.0
    %1606 = vmatprep.subr.mxu0 0.0
    %1607 = vmatpush2.msra.mxu0 0.0
    %1608 = vmatprep.subr.mxu0 0.0
    %1609 = vmatpush2.msra.mxu0 0.0
    %1610 = vmatprep.subr.mxu0 0.0
    %1611 = vmatpush2.msra.mxu0 0.0
    %1612 = vmatprep.mubr.f32.mxu0 0.0
    %1613 = vmatmul.mubr.f32.gmra.mxu0 %v1537
    %v1614 = vpop.f32.mrf.mxu0
    %v1615 = vadd.f32 %v1519, %v1614
    %v1616 = vpop.f32.mrf.mxu0
    %1617 = vmatprep.mubr.f32.mxu0 0.0
    %1618 = vmatmul.mubr.f32.gmra.mxu0 %v1540
    %v1619 = vpop.f32.mrf.mxu0
    %v1620 = vadd.f32 %v1524, %v1619
    %v1621 = vpop.f32.mrf.mxu0
    %1622 = vmatprep.mubr.f32.mxu0 0.0
    %1623 = vmatmul.mubr.f32.gmra.mxu0 %v1543
    %v1624 = vpop.f32.mrf.mxu0
    %v1625 = vadd.f32 %v1529, %v1624
    %v1626 = vpop.f32.mrf.mxu0
    %1627 = vmatprep.mubr.f32.mxu0 0.0
    %1628 = vmatmul.mubr.f32.gmra.mxu0 %v1546
    %v1629 = vpop.f32.mrf.mxu0
    %v1630 = vadd.f32 %v1534, %v1629
    %v1631 = vpop.f32.mrf.mxu0
    %1632 = vdwg.mxu0
    %v1633 = vadd.f32 %v1615, %v1143
    %v1634 = vadd.f32 %v1620, %v1144
    %v1635 = vadd.f32 %v1625, %v1145
    %v1636 = vadd.f32 %v1630, %v1146
    %s1637 = scalar_lea.vmem %s4, 144
    %v1638 = vld [vmem:[%s1637] sm:$0xff]
    %v1639 = vld [vmem:[%s1637 + $0x8] sm:$0xff]
    %v1640 = vld [vmem:[%s1637 + $0x10] sm:$0xff]
    %v1641 = vld [vmem:[%s1637 + $0x18] sm:$0xff]
    %v1642 = vld [vmem:[%s1637 + $0x20] sm:$0xff]
    %v1643 = vld [vmem:[%s1637 + $0x28] sm:$0xff]
    %s1644 = scalar_lea.vmem %s5, 144
    %v1645 = vld [vmem:[%s1644] sm:$0xff]
    %v1646 = vld [vmem:[%s1644 + $0x8] sm:$0xff]
    %v1647 = vld [vmem:[%s1644 + $0x10] sm:$0xff]
    %v1648 = vld [vmem:[%s1644 + $0x18] sm:$0xff]
    %v1649 = vld [vmem:[%s1644 + $0x20] sm:$0xff]
    %v1650 = vld [vmem:[%s1644 + $0x28] sm:$0xff]
    %1652 = vset.pattern.permute.xlu0 0
    %1653 = vperm.xlu0 %1652, %v1645
    %v1654 = vpop.permute.xlu0 %1653
    %1657 = vset.pattern.permute.xlu0 0
    %1658 = vperm.xlu0 %1657, %v1646
    %v1659 = vpop.permute.xlu0 %1658
    %1662 = vset.pattern.permute.xlu0 0
    %1663 = vperm.xlu0 %1662, %v1647
    %v1664 = vpop.permute.xlu0 %1663
    %1667 = vset.pattern.permute.xlu0 0
    %1668 = vperm.xlu0 %1667, %v1648
    %v1669 = vpop.permute.xlu0 %1668
    %1672 = vset.pattern.permute.xlu0 0
    %1673 = vperm.xlu0 %1672, %v1649
    %v1674 = vpop.permute.xlu0 %1673
    %1677 = vset.pattern.permute.xlu0 0
    %1678 = vperm.xlu0 %1677, %v1650
    %v1679 = vpop.permute.xlu0 %1678
    %v1682 = vsel %vm211, %v1638, 0
    %v1685 = vsel %vm211, %v1639, 0
    %v1688 = vsel %vm211, %v1640, 0
    %v1691 = vsel %vm211, %v1641, 0
    %v1694 = vsel %vm211, %v1642, 0
    %v1697 = vsel %vm211, %v1643, 0
    %1699 = vmatprep.subr.mxu0 0.0
    %1700 = vmatpush1.msra.mxu0 0.0
    %1701 = vmatprep.subr.mxu0 0.0
    %1702 = vmatpush1.msra.mxu0 0.0
    %1703 = vmatprep.subr.mxu0 0.0
    %1704 = vmatpush1.msra.mxu0 0.0
    %1705 = vmatprep.subr.mxu0 0.0
    %1706 = vmatpush1.msra.mxu0 0.0
    %1707 = vmatprep.subr.mxu0 0.0
    %1708 = vmatpush1.msra.mxu0 0.0
    %1709 = vmatprep.subr.mxu0 0.0
    %1710 = vmatpush1.msra.mxu0 0.0
    %1711 = vmatprep.subr.mxu0 0.0
    %1712 = vmatpush1.msra.mxu0 0.0
    %1713 = vmatprep.subr.mxu0 0.0
    %1714 = vmatpush1.msra.mxu0 0.0
    %1715 = vmatprep.subr.mxu0 0.0
    %1716 = vmatpush1.msra.mxu0 0.0
    %1717 = vmatprep.subr.mxu0 0.0
    %1718 = vmatpush1.msra.mxu0 0.0
    %1719 = vmatprep.subr.mxu0 0.0
    %1720 = vmatpush1.msra.mxu0 0.0
    %1721 = vmatprep.subr.mxu0 0.0
    %1722 = vmatpush1.msra.mxu0 0.0
    %1723 = vmatprep.subr.mxu0 0.0
    %1724 = vmatpush1.msra.mxu0 %v1636
    %1725 = vmatprep.subr.mxu0 0.0
    %1726 = vmatpush1.msra.mxu0 %v1635
    %1727 = vmatprep.subr.mxu0 0.0
    %1728 = vmatpush1.msra.mxu0 %v1634
    %1729 = vmatprep.subr.mxu0 0.0
    %1730 = vmatpush1.msra.mxu0 %v1633
    %1731 = vmatprep.subr.mxu0 0.0
    %1732 = vmatpush2.msra.mxu0 0.0
    %1733 = vmatprep.subr.mxu0 0.0
    %1734 = vmatpush2.msra.mxu0 0.0
    %1735 = vmatprep.subr.mxu0 0.0
    %1736 = vmatpush2.msra.mxu0 0.0
    %1737 = vmatprep.subr.mxu0 0.0
    %1738 = vmatpush2.msra.mxu0 0.0
    %1739 = vmatprep.subr.mxu0 0.0
    %1740 = vmatpush2.msra.mxu0 0.0
    %1741 = vmatprep.subr.mxu0 0.0
    %1742 = vmatpush2.msra.mxu0 0.0
    %1743 = vmatprep.subr.mxu0 0.0
    %1744 = vmatpush2.msra.mxu0 0.0
    %1745 = vmatprep.subr.mxu0 0.0
    %1746 = vmatpush2.msra.mxu0 0.0
    %1747 = vmatprep.subr.mxu0 0.0
    %1748 = vmatpush2.msra.mxu0 0.0
    %1749 = vmatprep.subr.mxu0 0.0
    %1750 = vmatpush2.msra.mxu0 0.0
    %1751 = vmatprep.subr.mxu0 0.0
    %1752 = vmatpush2.msra.mxu0 0.0
    %1753 = vmatprep.subr.mxu0 0.0
    %1754 = vmatpush2.msra.mxu0 0.0
    %1755 = vmatprep.subr.mxu0 0.0
    %1756 = vmatpush2.msra.mxu0 0.0
    %1757 = vmatprep.subr.mxu0 0.0
    %1758 = vmatpush2.msra.mxu0 0.0
    %1759 = vmatprep.subr.mxu0 0.0
    %1760 = vmatpush2.msra.mxu0 0.0
    %1761 = vmatprep.subr.mxu0 0.0
    %1762 = vmatpush2.msra.mxu0 0.0
    %1763 = vmatprep.mubr.f32.mxu0 0.0
    %1764 = vmatmul.mubr.f32.gmra.mxu0 %v1682
    %v1765 = vpop.f32.mrf.mxu0
    %v1766 = vadd.f32 %v1654, %v1765
    %v1767 = vpop.f32.mrf.mxu0
    %1768 = vmatprep.mubr.f32.mxu0 0.0
    %1769 = vmatmul.mubr.f32.gmra.mxu0 %v1685
    %v1770 = vpop.f32.mrf.mxu0
    %v1771 = vadd.f32 %v1659, %v1770
    %v1772 = vpop.f32.mrf.mxu0
    %1773 = vmatprep.mubr.f32.mxu0 0.0
    %1774 = vmatmul.mubr.f32.gmra.mxu0 %v1688
    %v1775 = vpop.f32.mrf.mxu0
    %v1776 = vadd.f32 %v1664, %v1775
    %v1777 = vpop.f32.mrf.mxu0
    %1778 = vmatprep.mubr.f32.mxu0 0.0
    %1779 = vmatmul.mubr.f32.gmra.mxu0 %v1691
    %v1780 = vpop.f32.mrf.mxu0
    %v1781 = vadd.f32 %v1669, %v1780
    %v1782 = vpop.f32.mrf.mxu0
    %1783 = vmatprep.mubr.f32.mxu0 0.0
    %1784 = vmatmul.mubr.f32.gmra.mxu0 %v1694
    %v1785 = vpop.f32.mrf.mxu0
    %v1786 = vadd.f32 %v1674, %v1785
    %v1787 = vpop.f32.mrf.mxu0
    %1788 = vmatprep.mubr.f32.mxu0 0.0
    %1789 = vmatmul.mubr.f32.gmra.mxu0 %v1697
    %v1790 = vpop.f32.mrf.mxu0
    %v1791 = vadd.f32 %v1679, %v1790
    %v1792 = vpop.f32.mrf.mxu0
    %1793 = vdwg.mxu0
    %1794 = vxpose.xlu0.b32.start [1/16] %v1776, 128
    %1795 = vxpose.xlu0.b32.cont [2/16] %v1781, 128
    %1796 = vxpose.xlu0.b32.cont [3/16] 0.0, 128
    %1797 = vxpose.xlu0.b32.cont [4/16] 0.0, 128
    %1798 = vxpose.xlu0.b32.cont [5/16] 0.0, 128
    %1799 = vxpose.xlu0.b32.cont [6/16] 0.0, 128
    %1800 = vxpose.xlu0.b32.cont [7/16] 0.0, 128
    %1801 = vxpose.xlu0.b32.cont [8/16] 0.0, 128
    %1802 = vxpose.xlu0.b32.cont [9/16] 0.0, 128
    %1803 = vxpose.xlu0.b32.cont [10/16] 0.0, 128
    %1804 = vxpose.xlu0.b32.cont [11/16] 0.0, 128
    %1805 = vxpose.xlu0.b32.cont [12/16] 0.0, 128
    %1806 = vxpose.xlu0.b32.cont [13/16] 0.0, 128
    %1807 = vxpose.xlu0.b32.cont [14/16] 0.0, 128
    %1808 = vxpose.xlu0.b32.cont [15/16] 0.0, 128
    %1809 = vxpose.xlu0.b32.end [16/16] 0.0, 128
    %v1810 = vpop.trf.xlu0
    %v1811 = vpop.trf.xlu0
    %v1812 = vpop.trf.xlu0
    %v1813 = vpop.trf.xlu0
    %v1814 = vpop.trf.xlu0
    %v1815 = vpop.trf.xlu0
    %v1816 = vpop.trf.xlu0
    %v1817 = vpop.trf.xlu0
    %v1818 = vpop.trf.xlu0
    %v1819 = vpop.trf.xlu0
    %v1820 = vpop.trf.xlu0
    %v1821 = vpop.trf.xlu0
    %v1822 = vpop.trf.xlu0
    %v1823 = vpop.trf.xlu0
    %v1824 = vpop.trf.xlu0
    %v1825 = vpop.trf.xlu0
    %v1827 = vsel %vm357, %v1810, 0
    %v1830 = vsel %vm357, %v1811, 0
    %1832 = vmatprep.subr.mxu0 0.0
    %1833 = vmatpush1.msra.mxu0 0.0
    %1834 = vmatprep.subr.mxu0 0.0
    %1835 = vmatpush1.msra.mxu0 0.0
    %1836 = vmatprep.subr.mxu0 0.0
    %1837 = vmatpush1.msra.mxu0 0.0
    %1838 = vmatprep.subr.mxu0 0.0
    %1839 = vmatpush1.msra.mxu0 0.0
    %1840 = vmatprep.subr.mxu0 0.0
    %1841 = vmatpush1.msra.mxu0 0.0
    %1842 = vmatprep.subr.mxu0 0.0
    %1843 = vmatpush1.msra.mxu0 0.0
    %1844 = vmatprep.subr.mxu0 0.0
    %1845 = vmatpush1.msra.mxu0 0.0
    %1846 = vmatprep.subr.mxu0 0.0
    %1847 = vmatpush1.msra.mxu0 0.0
    %1848 = vmatprep.subr.mxu0 0.0
    %1849 = vmatpush1.msra.mxu0 0.0
    %1850 = vmatprep.subr.mxu0 0.0
    %1851 = vmatpush1.msra.mxu0 0.0
    %1852 = vmatprep.subr.mxu0 0.0
    %1853 = vmatpush1.msra.mxu0 0.0
    %1854 = vmatprep.subr.mxu0 0.0
    %1855 = vmatpush1.msra.mxu0 0.0
    %1856 = vmatprep.subr.mxu0 0.0
    %1857 = vmatpush1.msra.mxu0 0.0
    %1858 = vmatprep.subr.mxu0 0.0
    %1859 = vmatpush1.msra.mxu0 0.0
    %1860 = vmatprep.subr.mxu0 0.0
    %1861 = vmatpush1.msra.mxu0 %v1791
    %1862 = vmatprep.subr.mxu0 0.0
    %1863 = vmatpush1.msra.mxu0 %v1786
    %1864 = vmatprep.subr.mxu0 0.0
    %1865 = vmatpush2.msra.mxu0 0.0
    %1866 = vmatprep.subr.mxu0 0.0
    %1867 = vmatpush2.msra.mxu0 0.0
    %1868 = vmatprep.subr.mxu0 0.0
    %1869 = vmatpush2.msra.mxu0 0.0
    %1870 = vmatprep.subr.mxu0 0.0
    %1871 = vmatpush2.msra.mxu0 0.0
    %1872 = vmatprep.subr.mxu0 0.0
    %1873 = vmatpush2.msra.mxu0 0.0
    %1874 = vmatprep.subr.mxu0 0.0
    %1875 = vmatpush2.msra.mxu0 0.0
    %1876 = vmatprep.subr.mxu0 0.0
    %1877 = vmatpush2.msra.mxu0 0.0
    %1878 = vmatprep.subr.mxu0 0.0
    %1879 = vmatpush2.msra.mxu0 0.0
    %1880 = vmatprep.subr.mxu0 0.0
    %1881 = vmatpush2.msra.mxu0 0.0
    %1882 = vmatprep.subr.mxu0 0.0
    %1883 = vmatpush2.msra.mxu0 0.0
    %1884 = vmatprep.subr.mxu0 0.0
    %1885 = vmatpush2.msra.mxu0 0.0
    %1886 = vmatprep.subr.mxu0 0.0
    %1887 = vmatpush2.msra.mxu0 0.0
    %1888 = vmatprep.subr.mxu0 0.0
    %1889 = vmatpush2.msra.mxu0 0.0
    %1890 = vmatprep.subr.mxu0 0.0
    %1891 = vmatpush2.msra.mxu0 0.0
    %1892 = vmatprep.subr.mxu0 0.0
    %1893 = vmatpush2.msra.mxu0 0.0
    %1894 = vmatprep.subr.mxu0 0.0
    %1895 = vmatpush2.msra.mxu0 0.0
    %1896 = vmatprep.mubr.f32.mxu0 0.0
    %1897 = vmatmul.mubr.f32.gmra.mxu0 %v1827
    %v1898 = vpop.f32.mrf.mxu0
    %v1899 = vadd.f32 0.0, %v1898
    %v1900 = vpop.f32.mrf.mxu0
    %1901 = vmatprep.mubr.f32.mxu0 0.0
    %1902 = vmatmul.mubr.f32.gmra.mxu0 %v1830
    %v1903 = vpop.f32.mrf.mxu0
    %v1904 = vadd.f32 0.0, %v1903
    %v1905 = vpop.f32.mrf.mxu0
    %1906 = vdwg.mxu0
    %v1907 = vmul.f32 %v1899, %v167
    %v1908 = vmul.f32 %v1904, %v168
    %v1910 = vsel %vm357, %v1766, 0
    %v1913 = vsel %vm357, %v1771, 0
    %v1916 = vsel %vm357, %v1907, 0
    %v1919 = vsel %vm357, %v1908, 0
    %1921 = vmatprep.subr.mxu0 0.0
    %1922 = vmatpush1.xpose.msra.mxu0 0.0
    %1923 = vmatprep.subr.mxu0 0.0
    %1924 = vmatpush1.xpose.msra.mxu0 0.0
    %1925 = vmatprep.subr.mxu0 0.0
    %1926 = vmatpush1.xpose.msra.mxu0 0.0
    %1927 = vmatprep.subr.mxu0 0.0
    %1928 = vmatpush1.xpose.msra.mxu0 0.0
    %1929 = vmatprep.subr.mxu0 0.0
    %1930 = vmatpush1.xpose.msra.mxu0 0.0
    %1931 = vmatprep.subr.mxu0 0.0
    %1932 = vmatpush1.xpose.msra.mxu0 0.0
    %1933 = vmatprep.subr.mxu0 0.0
    %1934 = vmatpush1.xpose.msra.mxu0 0.0
    %1935 = vmatprep.subr.mxu0 0.0
    %1936 = vmatpush1.xpose.msra.mxu0 0.0
    %1937 = vmatprep.subr.mxu0 0.0
    %1938 = vmatpush1.xpose.msra.mxu0 0.0
    %1939 = vmatprep.subr.mxu0 0.0
    %1940 = vmatpush1.xpose.msra.mxu0 0.0
    %1941 = vmatprep.subr.mxu0 0.0
    %1942 = vmatpush1.xpose.msra.mxu0 0.0
    %1943 = vmatprep.subr.mxu0 0.0
    %1944 = vmatpush1.xpose.msra.mxu0 0.0
    %1945 = vmatprep.subr.mxu0 0.0
    %1946 = vmatpush1.xpose.msra.mxu0 0.0
    %1947 = vmatprep.subr.mxu0 0.0
    %1948 = vmatpush1.xpose.msra.mxu0 0.0
    %1949 = vmatprep.subr.mxu0 0.0
    %1950 = vmatpush1.xpose.msra.mxu0 %v1919
    %1951 = vmatprep.subr.mxu0 0.0
    %1952 = vmatpush1.xpose.msra.mxu0 %v1916
    %1953 = vmatprep.subr.mxu0 0.0
    %1954 = vmatpush2.xpose.msra.mxu0 0.0
    %1955 = vmatprep.subr.mxu0 0.0
    %1956 = vmatpush2.xpose.msra.mxu0 0.0
    %1957 = vmatprep.subr.mxu0 0.0
    %1958 = vmatpush2.xpose.msra.mxu0 0.0
    %1959 = vmatprep.subr.mxu0 0.0
    %1960 = vmatpush2.xpose.msra.mxu0 0.0
    %1961 = vmatprep.subr.mxu0 0.0
    %1962 = vmatpush2.xpose.msra.mxu0 0.0
    %1963 = vmatprep.subr.mxu0 0.0
    %1964 = vmatpush2.xpose.msra.mxu0 0.0
    %1965 = vmatprep.subr.mxu0 0.0
    %1966 = vmatpush2.xpose.msra.mxu0 0.0
    %1967 = vmatprep.subr.mxu0 0.0
    %1968 = vmatpush2.xpose.msra.mxu0 0.0
    %1969 = vmatprep.subr.mxu0 0.0
    %1970 = vmatpush2.xpose.msra.mxu0 0.0
    %1971 = vmatprep.subr.mxu0 0.0
    %1972 = vmatpush2.xpose.msra.mxu0 0.0
    %1973 = vmatprep.subr.mxu0 0.0
    %1974 = vmatpush2.xpose.msra.mxu0 0.0
    %1975 = vmatprep.subr.mxu0 0.0
    %1976 = vmatpush2.xpose.msra.mxu0 0.0
    %1977 = vmatprep.subr.mxu0 0.0
    %1978 = vmatpush2.xpose.msra.mxu0 0.0
    %1979 = vmatprep.subr.mxu0 0.0
    %1980 = vmatpush2.xpose.msra.mxu0 0.0
    %1981 = vmatprep.subr.mxu0 0.0
    %1982 = vmatpush2.xpose.msra.mxu0 0.0
    %1983 = vmatprep.subr.mxu0 0.0
    %1984 = vmatpush2.xpose.msra.mxu0 0.0
    %1985 = vmatprep.mubr.f32.mxu0 0.0
    %1986 = vmatmul.mubr.f32.gmra.mxu0 %v1910
    %v1987 = vpop.f32.mrf.mxu0
    %v1988 = vadd.f32 0.0, %v1987
    %v1989 = vpop.f32.mrf.mxu0
    %1990 = vmatprep.mubr.f32.mxu0 0.0
    %1991 = vmatmul.mubr.f32.gmra.mxu0 %v1913
    %v1992 = vpop.f32.mrf.mxu0
    %v1993 = vadd.f32 0.0, %v1992
    %v1994 = vpop.f32.mrf.mxu0
    %1995 = vdwg.mxu0
    %s1996 = scalar_lea.vmem %s6, 96
    %v1997 = vld [vmem:[%s1996] sm:$0xff]
    %v1998 = vld [vmem:[%s1996 + $0x8] sm:$0xff]
    %v1999 = vld [vmem:[%s1996 + $0x10] sm:$0xff]
    %v2000 = vld [vmem:[%s1996 + $0x18] sm:$0xff]
    %s2001 = scalar_lea.vmem %s7, 96
    %v2002 = vld [vmem:[%s2001] sm:$0xff]
    %v2003 = vld [vmem:[%s2001 + $0x8] sm:$0xff]
    %v2004 = vld [vmem:[%s2001 + $0x10] sm:$0xff]
    %v2005 = vld [vmem:[%s2001 + $0x18] sm:$0xff]
    %2007 = vset.pattern.permute.xlu0 0
    %2008 = vperm.xlu0 %2007, %v2002
    %v2009 = vpop.permute.xlu0 %2008
    %2012 = vset.pattern.permute.xlu0 0
    %2013 = vperm.xlu0 %2012, %v2003
    %v2014 = vpop.permute.xlu0 %2013
    %2017 = vset.pattern.permute.xlu0 0
    %2018 = vperm.xlu0 %2017, %v2004
    %v2019 = vpop.permute.xlu0 %2018
    %2022 = vset.pattern.permute.xlu0 0
    %2023 = vperm.xlu0 %2022, %v2005
    %v2024 = vpop.permute.xlu0 %2023
    %v2027 = vsel %vm357, %v1997, 0
    %v2030 = vsel %vm357, %v1998, 0
    %v2033 = vsel %vm357, %v1999, 0
    %v2036 = vsel %vm357, %v2000, 0
    %2038 = vmatprep.subr.mxu0 0.0
    %2039 = vmatpush1.msra.mxu0 0.0
    %2040 = vmatprep.subr.mxu0 0.0
    %2041 = vmatpush1.msra.mxu0 0.0
    %2042 = vmatprep.subr.mxu0 0.0
    %2043 = vmatpush1.msra.mxu0 0.0
    %2044 = vmatprep.subr.mxu0 0.0
    %2045 = vmatpush1.msra.mxu0 0.0
    %2046 = vmatprep.subr.mxu0 0.0
    %2047 = vmatpush1.msra.mxu0 0.0
    %2048 = vmatprep.subr.mxu0 0.0
    %2049 = vmatpush1.msra.mxu0 0.0
    %2050 = vmatprep.subr.mxu0 0.0
    %2051 = vmatpush1.msra.mxu0 0.0
    %2052 = vmatprep.subr.mxu0 0.0
    %2053 = vmatpush1.msra.mxu0 0.0
    %2054 = vmatprep.subr.mxu0 0.0
    %2055 = vmatpush1.msra.mxu0 0.0
    %2056 = vmatprep.subr.mxu0 0.0
    %2057 = vmatpush1.msra.mxu0 0.0
    %2058 = vmatprep.subr.mxu0 0.0
    %2059 = vmatpush1.msra.mxu0 0.0
    %2060 = vmatprep.subr.mxu0 0.0
    %2061 = vmatpush1.msra.mxu0 0.0
    %2062 = vmatprep.subr.mxu0 0.0
    %2063 = vmatpush1.msra.mxu0 0.0
    %2064 = vmatprep.subr.mxu0 0.0
    %2065 = vmatpush1.msra.mxu0 0.0
    %2066 = vmatprep.subr.mxu0 0.0
    %2067 = vmatpush1.msra.mxu0 %v1993
    %2068 = vmatprep.subr.mxu0 0.0
    %2069 = vmatpush1.msra.mxu0 %v1988
    %2070 = vmatprep.subr.mxu0 0.0
    %2071 = vmatpush2.msra.mxu0 0.0
    %2072 = vmatprep.subr.mxu0 0.0
    %2073 = vmatpush2.msra.mxu0 0.0
    %2074 = vmatprep.subr.mxu0 0.0
    %2075 = vmatpush2.msra.mxu0 0.0
    %2076 = vmatprep.subr.mxu0 0.0
    %2077 = vmatpush2.msra.mxu0 0.0
    %2078 = vmatprep.subr.mxu0 0.0
    %2079 = vmatpush2.msra.mxu0 0.0
    %2080 = vmatprep.subr.mxu0 0.0
    %2081 = vmatpush2.msra.mxu0 0.0
    %2082 = vmatprep.subr.mxu0 0.0
    %2083 = vmatpush2.msra.mxu0 0.0
    %2084 = vmatprep.subr.mxu0 0.0
    %2085 = vmatpush2.msra.mxu0 0.0
    %2086 = vmatprep.subr.mxu0 0.0
    %2087 = vmatpush2.msra.mxu0 0.0
    %2088 = vmatprep.subr.mxu0 0.0
    %2089 = vmatpush2.msra.mxu0 0.0
    %2090 = vmatprep.subr.mxu0 0.0
    %2091 = vmatpush2.msra.mxu0 0.0
    %2092 = vmatprep.subr.mxu0 0.0
    %2093 = vmatpush2.msra.mxu0 0.0
    %2094 = vmatprep.subr.mxu0 0.0
    %2095 = vmatpush2.msra.mxu0 0.0
    %2096 = vmatprep.subr.mxu0 0.0
    %2097 = vmatpush2.msra.mxu0 0.0
    %2098 = vmatprep.subr.mxu0 0.0
    %2099 = vmatpush2.msra.mxu0 0.0
    %2100 = vmatprep.subr.mxu0 0.0
    %2101 = vmatpush2.msra.mxu0 0.0
    %2102 = vmatprep.mubr.f32.mxu0 0.0
    %2103 = vmatmul.mubr.f32.gmra.mxu0 %v2027
    %v2104 = vpop.f32.mrf.mxu0
    %v2105 = vadd.f32 %v2009, %v2104
    %v2106 = vpop.f32.mrf.mxu0
    %2107 = vmatprep.mubr.f32.mxu0 0.0
    %2108 = vmatmul.mubr.f32.gmra.mxu0 %v2030
    %v2109 = vpop.f32.mrf.mxu0
    %v2110 = vadd.f32 %v2014, %v2109
    %v2111 = vpop.f32.mrf.mxu0
    %2112 = vmatprep.mubr.f32.mxu0 0.0
    %2113 = vmatmul.mubr.f32.gmra.mxu0 %v2033
    %v2114 = vpop.f32.mrf.mxu0
    %v2115 = vadd.f32 %v2019, %v2114
    %v2116 = vpop.f32.mrf.mxu0
    %2117 = vmatprep.mubr.f32.mxu0 0.0
    %2118 = vmatmul.mubr.f32.gmra.mxu0 %v2036
    %v2119 = vpop.f32.mrf.mxu0
    %v2120 = vadd.f32 %v2024, %v2119
    %v2121 = vpop.f32.mrf.mxu0
    %2122 = vdwg.mxu0
    %v2123 = vadd.f32 %v2105, %v1633
    %v2124 = vadd.f32 %v2110, %v1634
    %v2125 = vadd.f32 %v2115, %v1635
    %v2126 = vadd.f32 %v2120, %v1636
    %s2127 = scalar_lea.vmem %s4, 192
    %v2128 = vld [vmem:[%s2127] sm:$0xff]
    %v2129 = vld [vmem:[%s2127 + $0x8] sm:$0xff]
    %v2130 = vld [vmem:[%s2127 + $0x10] sm:$0xff]
    %v2131 = vld [vmem:[%s2127 + $0x18] sm:$0xff]
    %v2132 = vld [vmem:[%s2127 + $0x20] sm:$0xff]
    %v2133 = vld [vmem:[%s2127 + $0x28] sm:$0xff]
    %s2134 = scalar_lea.vmem %s5, 192
    %v2135 = vld [vmem:[%s2134] sm:$0xff]
    %v2136 = vld [vmem:[%s2134 + $0x8] sm:$0xff]
    %v2137 = vld [vmem:[%s2134 + $0x10] sm:$0xff]
    %v2138 = vld [vmem:[%s2134 + $0x18] sm:$0xff]
    %v2139 = vld [vmem:[%s2134 + $0x20] sm:$0xff]
    %v2140 = vld [vmem:[%s2134 + $0x28] sm:$0xff]
    %2142 = vset.pattern.permute.xlu0 0
    %2143 = vperm.xlu0 %2142, %v2135
    %v2144 = vpop.permute.xlu0 %2143
    %2147 = vset.pattern.permute.xlu0 0
    %2148 = vperm.xlu0 %2147, %v2136
    %v2149 = vpop.permute.xlu0 %2148
    %2152 = vset.pattern.permute.xlu0 0
    %2153 = vperm.xlu0 %2152, %v2137
    %v2154 = vpop.permute.xlu0 %2153
    %2157 = vset.pattern.permute.xlu0 0
    %2158 = vperm.xlu0 %2157, %v2138
    %v2159 = vpop.permute.xlu0 %2158
    %2162 = vset.pattern.permute.xlu0 0
    %2163 = vperm.xlu0 %2162, %v2139
    %v2164 = vpop.permute.xlu0 %2163
    %2167 = vset.pattern.permute.xlu0 0
    %2168 = vperm.xlu0 %2167, %v2140
    %v2169 = vpop.permute.xlu0 %2168
    %v2172 = vsel %vm211, %v2128, 0
    %v2175 = vsel %vm211, %v2129, 0
    %v2178 = vsel %vm211, %v2130, 0
    %v2181 = vsel %vm211, %v2131, 0
    %v2184 = vsel %vm211, %v2132, 0
    %v2187 = vsel %vm211, %v2133, 0
    %2189 = vmatprep.subr.mxu0 0.0
    %2190 = vmatpush1.msra.mxu0 0.0
    %2191 = vmatprep.subr.mxu0 0.0
    %2192 = vmatpush1.msra.mxu0 0.0
    %2193 = vmatprep.subr.mxu0 0.0
    %2194 = vmatpush1.msra.mxu0 0.0
    %2195 = vmatprep.subr.mxu0 0.0
    %2196 = vmatpush1.msra.mxu0 0.0
    %2197 = vmatprep.subr.mxu0 0.0
    %2198 = vmatpush1.msra.mxu0 0.0
    %2199 = vmatprep.subr.mxu0 0.0
    %2200 = vmatpush1.msra.mxu0 0.0
    %2201 = vmatprep.subr.mxu0 0.0
    %2202 = vmatpush1.msra.mxu0 0.0
    %2203 = vmatprep.subr.mxu0 0.0
    %2204 = vmatpush1.msra.mxu0 0.0
    %2205 = vmatprep.subr.mxu0 0.0
    %2206 = vmatpush1.msra.mxu0 0.0
    %2207 = vmatprep.subr.mxu0 0.0
    %2208 = vmatpush1.msra.mxu0 0.0
    %2209 = vmatprep.subr.mxu0 0.0
    %2210 = vmatpush1.msra.mxu0 0.0
    %2211 = vmatprep.subr.mxu0 0.0
    %2212 = vmatpush1.msra.mxu0 0.0
    %2213 = vmatprep.subr.mxu0 0.0
    %2214 = vmatpush1.msra.mxu0 %v2126
    %2215 = vmatprep.subr.mxu0 0.0
    %2216 = vmatpush1.msra.mxu0 %v2125
    %2217 = vmatprep.subr.mxu0 0.0
    %2218 = vmatpush1.msra.mxu0 %v2124
    %2219 = vmatprep.subr.mxu0 0.0
    %2220 = vmatpush1.msra.mxu0 %v2123
    %2221 = vmatprep.subr.mxu0 0.0
    %2222 = vmatpush2.msra.mxu0 0.0
    %2223 = vmatprep.subr.mxu0 0.0
    %2224 = vmatpush2.msra.mxu0 0.0
    %2225 = vmatprep.subr.mxu0 0.0
    %2226 = vmatpush2.msra.mxu0 0.0
    %2227 = vmatprep.subr.mxu0 0.0
    %2228 = vmatpush2.msra.mxu0 0.0
    %2229 = vmatprep.subr.mxu0 0.0
    %2230 = vmatpush2.msra.mxu0 0.0
    %2231 = vmatprep.subr.mxu0 0.0
    %2232 = vmatpush2.msra.mxu0 0.0
    %2233 = vmatprep.subr.mxu0 0.0
    %2234 = vmatpush2.msra.mxu0 0.0
    %2235 = vmatprep.subr.mxu0 0.0
    %2236 = vmatpush2.msra.mxu0 0.0
    %2237 = vmatprep.subr.mxu0 0.0
    %2238 = vmatpush2.msra.mxu0 0.0
    %2239 = vmatprep.subr.mxu0 0.0
    %2240 = vmatpush2.msra.mxu0 0.0
    %2241 = vmatprep.subr.mxu0 0.0
    %2242 = vmatpush2.msra.mxu0 0.0
    %2243 = vmatprep.subr.mxu0 0.0
    %2244 = vmatpush2.msra.mxu0 0.0
    %2245 = vmatprep.subr.mxu0 0.0
    %2246 = vmatpush2.msra.mxu0 0.0
    %2247 = vmatprep.subr.mxu0 0.0
    %2248 = vmatpush2.msra.mxu0 0.0
    %2249 = vmatprep.subr.mxu0 0.0
    %2250 = vmatpush2.msra.mxu0 0.0
    %2251 = vmatprep.subr.mxu0 0.0
    %2252 = vmatpush2.msra.mxu0 0.0
    %2253 = vmatprep.mubr.f32.mxu0 0.0
    %2254 = vmatmul.mubr.f32.gmra.mxu0 %v2172
    %v2255 = vpop.f32.mrf.mxu0
    %v2256 = vadd.f32 %v2144, %v2255
    %v2257 = vpop.f32.mrf.mxu0
    %2258 = vmatprep.mubr.f32.mxu0 0.0
    %2259 = vmatmul.mubr.f32.gmra.mxu0 %v2175
    %v2260 = vpop.f32.mrf.mxu0
    %v2261 = vadd.f32 %v2149, %v2260
    %v2262 = vpop.f32.mrf.mxu0
    %2263 = vmatprep.mubr.f32.mxu0 0.0
    %2264 = vmatmul.mubr.f32.gmra.mxu0 %v2178
    %v2265 = vpop.f32.mrf.mxu0
    %v2266 = vadd.f32 %v2154, %v2265
    %v2267 = vpop.f32.mrf.mxu0
    %2268 = vmatprep.mubr.f32.mxu0 0.0
    %2269 = vmatmul.mubr.f32.gmra.mxu0 %v2181
    %v2270 = vpop.f32.mrf.mxu0
    %v2271 = vadd.f32 %v2159, %v2270
    %v2272 = vpop.f32.mrf.mxu0
    %2273 = vmatprep.mubr.f32.mxu0 0.0
    %2274 = vmatmul.mubr.f32.gmra.mxu0 %v2184
    %v2275 = vpop.f32.mrf.mxu0
    %v2276 = vadd.f32 %v2164, %v2275
    %v2277 = vpop.f32.mrf.mxu0
    %2278 = vmatprep.mubr.f32.mxu0 0.0
    %2279 = vmatmul.mubr.f32.gmra.mxu0 %v2187
    %v2280 = vpop.f32.mrf.mxu0
    %v2281 = vadd.f32 %v2169, %v2280
    %v2282 = vpop.f32.mrf.mxu0
    %2283 = vdwg.mxu0
    %2284 = vxpose.xlu0.b32.start [1/16] %v2266, 128
    %2285 = vxpose.xlu0.b32.cont [2/16] %v2271, 128
    %2286 = vxpose.xlu0.b32.cont [3/16] 0.0, 128
    %2287 = vxpose.xlu0.b32.cont [4/16] 0.0, 128
    %2288 = vxpose.xlu0.b32.cont [5/16] 0.0, 128
    %2289 = vxpose.xlu0.b32.cont [6/16] 0.0, 128
    %2290 = vxpose.xlu0.b32.cont [7/16] 0.0, 128
    %2291 = vxpose.xlu0.b32.cont [8/16] 0.0, 128
    %2292 = vxpose.xlu0.b32.cont [9/16] 0.0, 128
    %2293 = vxpose.xlu0.b32.cont [10/16] 0.0, 128
    %2294 = vxpose.xlu0.b32.cont [11/16] 0.0, 128
    %2295 = vxpose.xlu0.b32.cont [12/16] 0.0, 128
    %2296 = vxpose.xlu0.b32.cont [13/16] 0.0, 128
    %2297 = vxpose.xlu0.b32.cont [14/16] 0.0, 128
    %2298 = vxpose.xlu0.b32.cont [15/16] 0.0, 128
    %2299 = vxpose.xlu0.b32.end [16/16] 0.0, 128
    %v2300 = vpop.trf.xlu0
    %v2301 = vpop.trf.xlu0
    %v2302 = vpop.trf.xlu0
    %v2303 = vpop.trf.xlu0
    %v2304 = vpop.trf.xlu0
    %v2305 = vpop.trf.xlu0
    %v2306 = vpop.trf.xlu0
    %v2307 = vpop.trf.xlu0
    %v2308 = vpop.trf.xlu0
    %v2309 = vpop.trf.xlu0
    %v2310 = vpop.trf.xlu0
    %v2311 = vpop.trf.xlu0
    %v2312 = vpop.trf.xlu0
    %v2313 = vpop.trf.xlu0
    %v2314 = vpop.trf.xlu0
    %v2315 = vpop.trf.xlu0
    %v2317 = vsel %vm357, %v2300, 0
    %v2320 = vsel %vm357, %v2301, 0
    %2322 = vmatprep.subr.mxu0 0.0
    %2323 = vmatpush1.msra.mxu0 0.0
    %2324 = vmatprep.subr.mxu0 0.0
    %2325 = vmatpush1.msra.mxu0 0.0
    %2326 = vmatprep.subr.mxu0 0.0
    %2327 = vmatpush1.msra.mxu0 0.0
    %2328 = vmatprep.subr.mxu0 0.0
    %2329 = vmatpush1.msra.mxu0 0.0
    %2330 = vmatprep.subr.mxu0 0.0
    %2331 = vmatpush1.msra.mxu0 0.0
    %2332 = vmatprep.subr.mxu0 0.0
    %2333 = vmatpush1.msra.mxu0 0.0
    %2334 = vmatprep.subr.mxu0 0.0
    %2335 = vmatpush1.msra.mxu0 0.0
    %2336 = vmatprep.subr.mxu0 0.0
    %2337 = vmatpush1.msra.mxu0 0.0
    %2338 = vmatprep.subr.mxu0 0.0
    %2339 = vmatpush1.msra.mxu0 0.0
    %2340 = vmatprep.subr.mxu0 0.0
    %2341 = vmatpush1.msra.mxu0 0.0
    %2342 = vmatprep.subr.mxu0 0.0
    %2343 = vmatpush1.msra.mxu0 0.0
    %2344 = vmatprep.subr.mxu0 0.0
    %2345 = vmatpush1.msra.mxu0 0.0
    %2346 = vmatprep.subr.mxu0 0.0
    %2347 = vmatpush1.msra.mxu0 0.0
    %2348 = vmatprep.subr.mxu0 0.0
    %2349 = vmatpush1.msra.mxu0 0.0
    %2350 = vmatprep.subr.mxu0 0.0
    %2351 = vmatpush1.msra.mxu0 %v2281
    %2352 = vmatprep.subr.mxu0 0.0
    %2353 = vmatpush1.msra.mxu0 %v2276
    %2354 = vmatprep.subr.mxu0 0.0
    %2355 = vmatpush2.msra.mxu0 0.0
    %2356 = vmatprep.subr.mxu0 0.0
    %2357 = vmatpush2.msra.mxu0 0.0
    %2358 = vmatprep.subr.mxu0 0.0
    %2359 = vmatpush2.msra.mxu0 0.0
    %2360 = vmatprep.subr.mxu0 0.0
    %2361 = vmatpush2.msra.mxu0 0.0
    %2362 = vmatprep.subr.mxu0 0.0
    %2363 = vmatpush2.msra.mxu0 0.0
    %2364 = vmatprep.subr.mxu0 0.0
    %2365 = vmatpush2.msra.mxu0 0.0
    %2366 = vmatprep.subr.mxu0 0.0
    %2367 = vmatpush2.msra.mxu0 0.0
    %2368 = vmatprep.subr.mxu0 0.0
    %2369 = vmatpush2.msra.mxu0 0.0
    %2370 = vmatprep.subr.mxu0 0.0
    %2371 = vmatpush2.msra.mxu0 0.0
    %2372 = vmatprep.subr.mxu0 0.0
    %2373 = vmatpush2.msra.mxu0 0.0
    %2374 = vmatprep.subr.mxu0 0.0
    %2375 = vmatpush2.msra.mxu0 0.0
    %2376 = vmatprep.subr.mxu0 0.0
    %2377 = vmatpush2.msra.mxu0 0.0
    %2378 = vmatprep.subr.mxu0 0.0
    %2379 = vmatpush2.msra.mxu0 0.0
    %2380 = vmatprep.subr.mxu0 0.0
    %2381 = vmatpush2.msra.mxu0 0.0
    %2382 = vmatprep.subr.mxu0 0.0
    %2383 = vmatpush2.msra.mxu0 0.0
    %2384 = vmatprep.subr.mxu0 0.0
    %2385 = vmatpush2.msra.mxu0 0.0
    %2386 = vmatprep.mubr.f32.mxu0 0.0
    %2387 = vmatmul.mubr.f32.gmra.mxu0 %v2317
    %v2388 = vpop.f32.mrf.mxu0
    %v2389 = vadd.f32 0.0, %v2388
    %v2390 = vpop.f32.mrf.mxu0
    %2391 = vmatprep.mubr.f32.mxu0 0.0
    %2392 = vmatmul.mubr.f32.gmra.mxu0 %v2320
    %v2393 = vpop.f32.mrf.mxu0
    %v2394 = vadd.f32 0.0, %v2393
    %v2395 = vpop.f32.mrf.mxu0
    %2396 = vdwg.mxu0
    %v2397 = vmul.f32 %v2389, %v167
    %v2398 = vmul.f32 %v2394, %v168
    %v2400 = vsel %vm357, %v2256, 0
    %v2403 = vsel %vm357, %v2261, 0
    %v2406 = vsel %vm357, %v2397, 0
    %v2409 = vsel %vm357, %v2398, 0
    %2411 = vmatprep.subr.mxu0 0.0
    %2412 = vmatpush1.xpose.msra.mxu0 0.0
    %2413 = vmatprep.subr.mxu0 0.0
    %2414 = vmatpush1.xpose.msra.mxu0 0.0
    %2415 = vmatprep.subr.mxu0 0.0
    %2416 = vmatpush1.xpose.msra.mxu0 0.0
    %2417 = vmatprep.subr.mxu0 0.0
    %2418 = vmatpush1.xpose.msra.mxu0 0.0
    %2419 = vmatprep.subr.mxu0 0.0
    %2420 = vmatpush1.xpose.msra.mxu0 0.0
    %2421 = vmatprep.subr.mxu0 0.0
    %2422 = vmatpush1.xpose.msra.mxu0 0.0
    %2423 = vmatprep.subr.mxu0 0.0
    %2424 = vmatpush1.xpose.msra.mxu0 0.0
    %2425 = vmatprep.subr.mxu0 0.0
    %2426 = vmatpush1.xpose.msra.mxu0 0.0
    %2427 = vmatprep.subr.mxu0 0.0
    %2428 = vmatpush1.xpose.msra.mxu0 0.0
    %2429 = vmatprep.subr.mxu0 0.0
    %2430 = vmatpush1.xpose.msra.mxu0 0.0
    %2431 = vmatprep.subr.mxu0 0.0
    %2432 = vmatpush1.xpose.msra.mxu0 0.0
    %2433 = vmatprep.subr.mxu0 0.0
    %2434 = vmatpush1.xpose.msra.mxu0 0.0
    %2435 = vmatprep.subr.mxu0 0.0
    %2436 = vmatpush1.xpose.msra.mxu0 0.0
    %2437 = vmatprep.subr.mxu0 0.0
    %2438 = vmatpush1.xpose.msra.mxu0 0.0
    %2439 = vmatprep.subr.mxu0 0.0
    %2440 = vmatpush1.xpose.msra.mxu0 %v2409
    %2441 = vmatprep.subr.mxu0 0.0
    %2442 = vmatpush1.xpose.msra.mxu0 %v2406
    %2443 = vmatprep.subr.mxu0 0.0
    %2444 = vmatpush2.xpose.msra.mxu0 0.0
    %2445 = vmatprep.subr.mxu0 0.0
    %2446 = vmatpush2.xpose.msra.mxu0 0.0
    %2447 = vmatprep.subr.mxu0 0.0
    %2448 = vmatpush2.xpose.msra.mxu0 0.0
    %2449 = vmatprep.subr.mxu0 0.0
    %2450 = vmatpush2.xpose.msra.mxu0 0.0
    %2451 = vmatprep.subr.mxu0 0.0
    %2452 = vmatpush2.xpose.msra.mxu0 0.0
    %2453 = vmatprep.subr.mxu0 0.0
    %2454 = vmatpush2.xpose.msra.mxu0 0.0
    %2455 = vmatprep.subr.mxu0 0.0
    %2456 = vmatpush2.xpose.msra.mxu0 0.0
    %2457 = vmatprep.subr.mxu0 0.0
    %2458 = vmatpush2.xpose.msra.mxu0 0.0
    %2459 = vmatprep.subr.mxu0 0.0
    %2460 = vmatpush2.xpose.msra.mxu0 0.0
    %2461 = vmatprep.subr.mxu0 0.0
    %2462 = vmatpush2.xpose.msra.mxu0 0.0
    %2463 = vmatprep.subr.mxu0 0.0
    %2464 = vmatpush2.xpose.msra.mxu0 0.0
    %2465 = vmatprep.subr.mxu0 0.0
    %2466 = vmatpush2.xpose.msra.mxu0 0.0
    %2467 = vmatprep.subr.mxu0 0.0
    %2468 = vmatpush2.xpose.msra.mxu0 0.0
    %2469 = vmatprep.subr.mxu0 0.0
    %2470 = vmatpush2.xpose.msra.mxu0 0.0
    %2471 = vmatprep.subr.mxu0 0.0
    %2472 = vmatpush2.xpose.msra.mxu0 0.0
    %2473 = vmatprep.subr.mxu0 0.0
    %2474 = vmatpush2.xpose.msra.mxu0 0.0
    %2475 = vmatprep.mubr.f32.mxu0 0.0
    %2476 = vmatmul.mubr.f32.gmra.mxu0 %v2400
    %v2477 = vpop.f32.mrf.mxu0
    %v2478 = vadd.f32 0.0, %v2477
    %v2479 = vpop.f32.mrf.mxu0
    %2480 = vmatprep.mubr.f32.mxu0 0.0
    %2481 = vmatmul.mubr.f32.gmra.mxu0 %v2403
    %v2482 = vpop.f32.mrf.mxu0
    %v2483 = vadd.f32 0.0, %v2482
    %v2484 = vpop.f32.mrf.mxu0
    %2485 = vdwg.mxu0
    %s2486 = scalar_lea.vmem %s6, 128
    %v2487 = vld [vmem:[%s2486] sm:$0xff]
    %v2488 = vld [vmem:[%s2486 + $0x8] sm:$0xff]
    %v2489 = vld [vmem:[%s2486 + $0x10] sm:$0xff]
    %v2490 = vld [vmem:[%s2486 + $0x18] sm:$0xff]
    %s2491 = scalar_lea.vmem %s7, 128
    %v2492 = vld [vmem:[%s2491] sm:$0xff]
    %v2493 = vld [vmem:[%s2491 + $0x8] sm:$0xff]
    %v2494 = vld [vmem:[%s2491 + $0x10] sm:$0xff]
    %v2495 = vld [vmem:[%s2491 + $0x18] sm:$0xff]
    %2497 = vset.pattern.permute.xlu0 0
    %2498 = vperm.xlu0 %2497, %v2492
    %v2499 = vpop.permute.xlu0 %2498
    %2502 = vset.pattern.permute.xlu0 0
    %2503 = vperm.xlu0 %2502, %v2493
    %v2504 = vpop.permute.xlu0 %2503
    %2507 = vset.pattern.permute.xlu0 0
    %2508 = vperm.xlu0 %2507, %v2494
    %v2509 = vpop.permute.xlu0 %2508
    %2512 = vset.pattern.permute.xlu0 0
    %2513 = vperm.xlu0 %2512, %v2495
    %v2514 = vpop.permute.xlu0 %2513
    %v2517 = vsel %vm357, %v2487, 0
    %v2520 = vsel %vm357, %v2488, 0
    %v2523 = vsel %vm357, %v2489, 0
    %v2526 = vsel %vm357, %v2490, 0
    %2528 = vmatprep.subr.mxu0 0.0
    %2529 = vmatpush1.msra.mxu0 0.0
    %2530 = vmatprep.subr.mxu0 0.0
    %2531 = vmatpush1.msra.mxu0 0.0
    %2532 = vmatprep.subr.mxu0 0.0
    %2533 = vmatpush1.msra.mxu0 0.0
    %2534 = vmatprep.subr.mxu0 0.0
    %2535 = vmatpush1.msra.mxu0 0.0
    %2536 = vmatprep.subr.mxu0 0.0
    %2537 = vmatpush1.msra.mxu0 0.0
    %2538 = vmatprep.subr.mxu0 0.0
    %2539 = vmatpush1.msra.mxu0 0.0
    %2540 = vmatprep.subr.mxu0 0.0
    %2541 = vmatpush1.msra.mxu0 0.0
    %2542 = vmatprep.subr.mxu0 0.0
    %2543 = vmatpush1.msra.mxu0 0.0
    %2544 = vmatprep.subr.mxu0 0.0
    %2545 = vmatpush1.msra.mxu0 0.0
    %2546 = vmatprep.subr.mxu0 0.0
    %2547 = vmatpush1.msra.mxu0 0.0
    %2548 = vmatprep.subr.mxu0 0.0
    %2549 = vmatpush1.msra.mxu0 0.0
    %2550 = vmatprep.subr.mxu0 0.0
    %2551 = vmatpush1.msra.mxu0 0.0
    %2552 = vmatprep.subr.mxu0 0.0
    %2553 = vmatpush1.msra.mxu0 0.0
    %2554 = vmatprep.subr.mxu0 0.0
    %2555 = vmatpush1.msra.mxu0 0.0
    %2556 = vmatprep.subr.mxu0 0.0
    %2557 = vmatpush1.msra.mxu0 %v2483
    %2558 = vmatprep.subr.mxu0 0.0
    %2559 = vmatpush1.msra.mxu0 %v2478
    %2560 = vmatprep.subr.mxu0 0.0
    %2561 = vmatpush2.msra.mxu0 0.0
    %2562 = vmatprep.subr.mxu0 0.0
    %2563 = vmatpush2.msra.mxu0 0.0
    %2564 = vmatprep.subr.mxu0 0.0
    %2565 = vmatpush2.msra.mxu0 0.0
    %2566 = vmatprep.subr.mxu0 0.0
    %2567 = vmatpush2.msra.mxu0 0.0
    %2568 = vmatprep.subr.mxu0 0.0
    %2569 = vmatpush2.msra.mxu0 0.0
    %2570 = vmatprep.subr.mxu0 0.0
    %2571 = vmatpush2.msra.mxu0 0.0
    %2572 = vmatprep.subr.mxu0 0.0
    %2573 = vmatpush2.msra.mxu0 0.0
    %2574 = vmatprep.subr.mxu0 0.0
    %2575 = vmatpush2.msra.mxu0 0.0
    %2576 = vmatprep.subr.mxu0 0.0
    %2577 = vmatpush2.msra.mxu0 0.0
    %2578 = vmatprep.subr.mxu0 0.0
    %2579 = vmatpush2.msra.mxu0 0.0
    %2580 = vmatprep.subr.mxu0 0.0
    %2581 = vmatpush2.msra.mxu0 0.0
    %2582 = vmatprep.subr.mxu0 0.0
    %2583 = vmatpush2.msra.mxu0 0.0
    %2584 = vmatprep.subr.mxu0 0.0
    %2585 = vmatpush2.msra.mxu0 0.0
    %2586 = vmatprep.subr.mxu0 0.0
    %2587 = vmatpush2.msra.mxu0 0.0
    %2588 = vmatprep.subr.mxu0 0.0
    %2589 = vmatpush2.msra.mxu0 0.0
    %2590 = vmatprep.subr.mxu0 0.0
    %2591 = vmatpush2.msra.mxu0 0.0
    %2592 = vmatprep.mubr.f32.mxu0 0.0
    %2593 = vmatmul.mubr.f32.gmra.mxu0 %v2517
    %v2594 = vpop.f32.mrf.mxu0
    %v2595 = vadd.f32 %v2499, %v2594
    %v2596 = vpop.f32.mrf.mxu0
    %2597 = vmatprep.mubr.f32.mxu0 0.0
    %2598 = vmatmul.mubr.f32.gmra.mxu0 %v2520
    %v2599 = vpop.f32.mrf.mxu0
    %v2600 = vadd.f32 %v2504, %v2599
    %v2601 = vpop.f32.mrf.mxu0
    %2602 = vmatprep.mubr.f32.mxu0 0.0
    %2603 = vmatmul.mubr.f32.gmra.mxu0 %v2523
    %v2604 = vpop.f32.mrf.mxu0
    %v2605 = vadd.f32 %v2509, %v2604
    %v2606 = vpop.f32.mrf.mxu0
    %2607 = vmatprep.mubr.f32.mxu0 0.0
    %2608 = vmatmul.mubr.f32.gmra.mxu0 %v2526
    %v2609 = vpop.f32.mrf.mxu0
    %v2610 = vadd.f32 %v2514, %v2609
    %v2611 = vpop.f32.mrf.mxu0
    %2612 = vdwg.mxu0
    %v2613 = vadd.f32 %v2595, %v2123
    %v2614 = vadd.f32 %v2600, %v2124
    %v2615 = vadd.f32 %v2605, %v2125
    %v2616 = vadd.f32 %v2610, %v2126
    %s2617 = scalar_lea.vmem %s4, 240
    %v2618 = vld [vmem:[%s2617] sm:$0xff]
    %v2619 = vld [vmem:[%s2617 + $0x8] sm:$0xff]
    %v2620 = vld [vmem:[%s2617 + $0x10] sm:$0xff]
    %v2621 = vld [vmem:[%s2617 + $0x18] sm:$0xff]
    %v2622 = vld [vmem:[%s2617 + $0x20] sm:$0xff]
    %v2623 = vld [vmem:[%s2617 + $0x28] sm:$0xff]
    %s2624 = scalar_lea.vmem %s5, 240
    %v2625 = vld [vmem:[%s2624] sm:$0xff]
    %v2626 = vld [vmem:[%s2624 + $0x8] sm:$0xff]
    %v2627 = vld [vmem:[%s2624 + $0x10] sm:$0xff]
    %v2628 = vld [vmem:[%s2624 + $0x18] sm:$0xff]
    %v2629 = vld [vmem:[%s2624 + $0x20] sm:$0xff]
    %v2630 = vld [vmem:[%s2624 + $0x28] sm:$0xff]
    %2632 = vset.pattern.permute.xlu0 0
    %2633 = vperm.xlu0 %2632, %v2625
    %v2634 = vpop.permute.xlu0 %2633
    %2637 = vset.pattern.permute.xlu0 0
    %2638 = vperm.xlu0 %2637, %v2626
    %v2639 = vpop.permute.xlu0 %2638
    %2642 = vset.pattern.permute.xlu0 0
    %2643 = vperm.xlu0 %2642, %v2627
    %v2644 = vpop.permute.xlu0 %2643
    %2647 = vset.pattern.permute.xlu0 0
    %2648 = vperm.xlu0 %2647, %v2628
    %v2649 = vpop.permute.xlu0 %2648
    %2652 = vset.pattern.permute.xlu0 0
    %2653 = vperm.xlu0 %2652, %v2629
    %v2654 = vpop.permute.xlu0 %2653
    %2657 = vset.pattern.permute.xlu0 0
    %2658 = vperm.xlu0 %2657, %v2630
    %v2659 = vpop.permute.xlu0 %2658
    %v2662 = vsel %vm211, %v2618, 0
    %v2665 = vsel %vm211, %v2619, 0
    %v2668 = vsel %vm211, %v2620, 0
    %v2671 = vsel %vm211, %v2621, 0
    %v2674 = vsel %vm211, %v2622, 0
    %v2677 = vsel %vm211, %v2623, 0
    %2679 = vmatprep.subr.mxu0 0.0
    %2680 = vmatpush1.msra.mxu0 0.0
    %2681 = vmatprep.subr.mxu0 0.0
    %2682 = vmatpush1.msra.mxu0 0.0
    %2683 = vmatprep.subr.mxu0 0.0
    %2684 = vmatpush1.msra.mxu0 0.0
    %2685 = vmatprep.subr.mxu0 0.0
    %2686 = vmatpush1.msra.mxu0 0.0
    %2687 = vmatprep.subr.mxu0 0.0
    %2688 = vmatpush1.msra.mxu0 0.0
    %2689 = vmatprep.subr.mxu0 0.0
    %2690 = vmatpush1.msra.mxu0 0.0
    %2691 = vmatprep.subr.mxu0 0.0
    %2692 = vmatpush1.msra.mxu0 0.0
    %2693 = vmatprep.subr.mxu0 0.0
    %2694 = vmatpush1.msra.mxu0 0.0
    %2695 = vmatprep.subr.mxu0 0.0
    %2696 = vmatpush1.msra.mxu0 0.0
    %2697 = vmatprep.subr.mxu0 0.0
    %2698 = vmatpush1.msra.mxu0 0.0
    %2699 = vmatprep.subr.mxu0 0.0
    %2700 = vmatpush1.msra.mxu0 0.0
    %2701 = vmatprep.subr.mxu0 0.0
    %2702 = vmatpush1.msra.mxu0 0.0
    %2703 = vmatprep.subr.mxu0 0.0
    %2704 = vmatpush1.msra.mxu0 %v2616
    %2705 = vmatprep.subr.mxu0 0.0
    %2706 = vmatpush1.msra.mxu0 %v2615
    %2707 = vmatprep.subr.mxu0 0.0
    %2708 = vmatpush1.msra.mxu0 %v2614
    %2709 = vmatprep.subr.mxu0 0.0
    %2710 = vmatpush1.msra.mxu0 %v2613
    %2711 = vmatprep.subr.mxu0 0.0
    %2712 = vmatpush2.msra.mxu0 0.0
    %2713 = vmatprep.subr.mxu0 0.0
    %2714 = vmatpush2.msra.mxu0 0.0
    %2715 = vmatprep.subr.mxu0 0.0
    %2716 = vmatpush2.msra.mxu0 0.0
    %2717 = vmatprep.subr.mxu0 0.0
    %2718 = vmatpush2.msra.mxu0 0.0
    %2719 = vmatprep.subr.mxu0 0.0
    %2720 = vmatpush2.msra.mxu0 0.0
    %2721 = vmatprep.subr.mxu0 0.0
    %2722 = vmatpush2.msra.mxu0 0.0
    %2723 = vmatprep.subr.mxu0 0.0
    %2724 = vmatpush2.msra.mxu0 0.0
    %2725 = vmatprep.subr.mxu0 0.0
    %2726 = vmatpush2.msra.mxu0 0.0
    %2727 = vmatprep.subr.mxu0 0.0
    %2728 = vmatpush2.msra.mxu0 0.0
    %2729 = vmatprep.subr.mxu0 0.0
    %2730 = vmatpush2.msra.mxu0 0.0
    %2731 = vmatprep.subr.mxu0 0.0
    %2732 = vmatpush2.msra.mxu0 0.0
    %2733 = vmatprep.subr.mxu0 0.0
    %2734 = vmatpush2.msra.mxu0 0.0
    %2735 = vmatprep.subr.mxu0 0.0
    %2736 = vmatpush2.msra.mxu0 0.0
    %2737 = vmatprep.subr.mxu0 0.0
    %2738 = vmatpush2.msra.mxu0 0.0
    %2739 = vmatprep.subr.mxu0 0.0
    %2740 = vmatpush2.msra.mxu0 0.0
    %2741 = vmatprep.subr.mxu0 0.0
    %2742 = vmatpush2.msra.mxu0 0.0
    %2743 = vmatprep.mubr.f32.mxu0 0.0
    %2744 = vmatmul.mubr.f32.gmra.mxu0 %v2662
    %v2745 = vpop.f32.mrf.mxu0
    %v2746 = vadd.f32 %v2634, %v2745
    %v2747 = vpop.f32.mrf.mxu0
    %2748 = vmatprep.mubr.f32.mxu0 0.0
    %2749 = vmatmul.mubr.f32.gmra.mxu0 %v2665
    %v2750 = vpop.f32.mrf.mxu0
    %v2751 = vadd.f32 %v2639, %v2750
    %v2752 = vpop.f32.mrf.mxu0
    %2753 = vmatprep.mubr.f32.mxu0 0.0
    %2754 = vmatmul.mubr.f32.gmra.mxu0 %v2668
    %v2755 = vpop.f32.mrf.mxu0
    %v2756 = vadd.f32 %v2644, %v2755
    %v2757 = vpop.f32.mrf.mxu0
    %2758 = vmatprep.mubr.f32.mxu0 0.0
    %2759 = vmatmul.mubr.f32.gmra.mxu0 %v2671
    %v2760 = vpop.f32.mrf.mxu0
    %v2761 = vadd.f32 %v2649, %v2760
    %v2762 = vpop.f32.mrf.mxu0
    %2763 = vmatprep.mubr.f32.mxu0 0.0
    %2764 = vmatmul.mubr.f32.gmra.mxu0 %v2674
    %v2765 = vpop.f32.mrf.mxu0
    %v2766 = vadd.f32 %v2654, %v2765
    %v2767 = vpop.f32.mrf.mxu0
    %2768 = vmatprep.mubr.f32.mxu0 0.0
    %2769 = vmatmul.mubr.f32.gmra.mxu0 %v2677
    %v2770 = vpop.f32.mrf.mxu0
    %v2771 = vadd.f32 %v2659, %v2770
    %v2772 = vpop.f32.mrf.mxu0
    %2773 = vdwg.mxu0
    %2774 = vxpose.xlu0.b32.start [1/16] %v2756, 128
    %2775 = vxpose.xlu0.b32.cont [2/16] %v2761, 128
    %2776 = vxpose.xlu0.b32.cont [3/16] 0.0, 128
    %2777 = vxpose.xlu0.b32.cont [4/16] 0.0, 128
    %2778 = vxpose.xlu0.b32.cont [5/16] 0.0, 128
    %2779 = vxpose.xlu0.b32.cont [6/16] 0.0, 128
    %2780 = vxpose.xlu0.b32.cont [7/16] 0.0, 128
    %2781 = vxpose.xlu0.b32.cont [8/16] 0.0, 128
    %2782 = vxpose.xlu0.b32.cont [9/16] 0.0, 128
    %2783 = vxpose.xlu0.b32.cont [10/16] 0.0, 128
    %2784 = vxpose.xlu0.b32.cont [11/16] 0.0, 128
    %2785 = vxpose.xlu0.b32.cont [12/16] 0.0, 128
    %2786 = vxpose.xlu0.b32.cont [13/16] 0.0, 128
    %2787 = vxpose.xlu0.b32.cont [14/16] 0.0, 128
    %2788 = vxpose.xlu0.b32.cont [15/16] 0.0, 128
    %2789 = vxpose.xlu0.b32.end [16/16] 0.0, 128
    %v2790 = vpop.trf.xlu0
    %v2791 = vpop.trf.xlu0
    %v2792 = vpop.trf.xlu0
    %v2793 = vpop.trf.xlu0
    %v2794 = vpop.trf.xlu0
    %v2795 = vpop.trf.xlu0
    %v2796 = vpop.trf.xlu0
    %v2797 = vpop.trf.xlu0
    %v2798 = vpop.trf.xlu0
    %v2799 = vpop.trf.xlu0
    %v2800 = vpop.trf.xlu0
    %v2801 = vpop.trf.xlu0
    %v2802 = vpop.trf.xlu0
    %v2803 = vpop.trf.xlu0
    %v2804 = vpop.trf.xlu0
    %v2805 = vpop.trf.xlu0
    %v2807 = vsel %vm357, %v2790, 0
    %v2810 = vsel %vm357, %v2791, 0
    %2812 = vmatprep.subr.mxu0 0.0
    %2813 = vmatpush1.msra.mxu0 0.0
    %2814 = vmatprep.subr.mxu0 0.0
    %2815 = vmatpush1.msra.mxu0 0.0
    %2816 = vmatprep.subr.mxu0 0.0
    %2817 = vmatpush1.msra.mxu0 0.0
    %2818 = vmatprep.subr.mxu0 0.0
    %2819 = vmatpush1.msra.mxu0 0.0
    %2820 = vmatprep.subr.mxu0 0.0
    %2821 = vmatpush1.msra.mxu0 0.0
    %2822 = vmatprep.subr.mxu0 0.0
    %2823 = vmatpush1.msra.mxu0 0.0
    %2824 = vmatprep.subr.mxu0 0.0
    %2825 = vmatpush1.msra.mxu0 0.0
    %2826 = vmatprep.subr.mxu0 0.0
    %2827 = vmatpush1.msra.mxu0 0.0
    %2828 = vmatprep.subr.mxu0 0.0
    %2829 = vmatpush1.msra.mxu0 0.0
    %2830 = vmatprep.subr.mxu0 0.0
    %2831 = vmatpush1.msra.mxu0 0.0
    %2832 = vmatprep.subr.mxu0 0.0
    %2833 = vmatpush1.msra.mxu0 0.0
    %2834 = vmatprep.subr.mxu0 0.0
    %2835 = vmatpush1.msra.mxu0 0.0
    %2836 = vmatprep.subr.mxu0 0.0
    %2837 = vmatpush1.msra.mxu0 0.0
    %2838 = vmatprep.subr.mxu0 0.0
    %2839 = vmatpush1.msra.mxu0 0.0
    %2840 = vmatprep.subr.mxu0 0.0
    %2841 = vmatpush1.msra.mxu0 %v2771
    %2842 = vmatprep.subr.mxu0 0.0
    %2843 = vmatpush1.msra.mxu0 %v2766
    %2844 = vmatprep.subr.mxu0 0.0
    %2845 = vmatpush2.msra.mxu0 0.0
    %2846 = vmatprep.subr.mxu0 0.0
    %2847 = vmatpush2.msra.mxu0 0.0
    %2848 = vmatprep.subr.mxu0 0.0
    %2849 = vmatpush2.msra.mxu0 0.0
    %2850 = vmatprep.subr.mxu0 0.0
    %2851 = vmatpush2.msra.mxu0 0.0
    %2852 = vmatprep.subr.mxu0 0.0
    %2853 = vmatpush2.msra.mxu0 0.0
    %2854 = vmatprep.subr.mxu0 0.0
    %2855 = vmatpush2.msra.mxu0 0.0
    %2856 = vmatprep.subr.mxu0 0.0
    %2857 = vmatpush2.msra.mxu0 0.0
    %2858 = vmatprep.subr.mxu0 0.0
    %2859 = vmatpush2.msra.mxu0 0.0
    %2860 = vmatprep.subr.mxu0 0.0
    %2861 = vmatpush2.msra.mxu0 0.0
    %2862 = vmatprep.subr.mxu0 0.0
    %2863 = vmatpush2.msra.mxu0 0.0
    %2864 = vmatprep.subr.mxu0 0.0
    %2865 = vmatpush2.msra.mxu0 0.0
    %2866 = vmatprep.subr.mxu0 0.0
    %2867 = vmatpush2.msra.mxu0 0.0
    %2868 = vmatprep.subr.mxu0 0.0
    %2869 = vmatpush2.msra.mxu0 0.0
    %2870 = vmatprep.subr.mxu0 0.0
    %2871 = vmatpush2.msra.mxu0 0.0
    %2872 = vmatprep.subr.mxu0 0.0
    %2873 = vmatpush2.msra.mxu0 0.0
    %2874 = vmatprep.subr.mxu0 0.0
    %2875 = vmatpush2.msra.mxu0 0.0
    %2876 = vmatprep.mubr.f32.mxu0 0.0
    %2877 = vmatmul.mubr.f32.gmra.mxu0 %v2807
    %v2878 = vpop.f32.mrf.mxu0
    %v2879 = vadd.f32 0.0, %v2878
    %v2880 = vpop.f32.mrf.mxu0
    %2881 = vmatprep.mubr.f32.mxu0 0.0
    %2882 = vmatmul.mubr.f32.gmra.mxu0 %v2810
    %v2883 = vpop.f32.mrf.mxu0
    %v2884 = vadd.f32 0.0, %v2883
    %v2885 = vpop.f32.mrf.mxu0
    %2886 = vdwg.mxu0
    %v2887 = vmul.f32 %v2879, %v167
    %v2888 = vmul.f32 %v2884, %v168
    %v2890 = vsel %vm357, %v2746, 0
    %v2893 = vsel %vm357, %v2751, 0
    %v2896 = vsel %vm357, %v2887, 0
    %v2899 = vsel %vm357, %v2888, 0
    %2901 = vmatprep.subr.mxu0 0.0
    %2902 = vmatpush1.xpose.msra.mxu0 0.0
    %2903 = vmatprep.subr.mxu0 0.0
    %2904 = vmatpush1.xpose.msra.mxu0 0.0
    %2905 = vmatprep.subr.mxu0 0.0
    %2906 = vmatpush1.xpose.msra.mxu0 0.0
    %2907 = vmatprep.subr.mxu0 0.0
    %2908 = vmatpush1.xpose.msra.mxu0 0.0
    %2909 = vmatprep.subr.mxu0 0.0
    %2910 = vmatpush1.xpose.msra.mxu0 0.0
    %2911 = vmatprep.subr.mxu0 0.0
    %2912 = vmatpush1.xpose.msra.mxu0 0.0
    %2913 = vmatprep.subr.mxu0 0.0
    %2914 = vmatpush1.xpose.msra.mxu0 0.0
    %2915 = vmatprep.subr.mxu0 0.0
    %2916 = vmatpush1.xpose.msra.mxu0 0.0
    %2917 = vmatprep.subr.mxu0 0.0
    %2918 = vmatpush1.xpose.msra.mxu0 0.0
    %2919 = vmatprep.subr.mxu0 0.0
    %2920 = vmatpush1.xpose.msra.mxu0 0.0
    %2921 = vmatprep.subr.mxu0 0.0
    %2922 = vmatpush1.xpose.msra.mxu0 0.0
    %2923 = vmatprep.subr.mxu0 0.0
    %2924 = vmatpush1.xpose.msra.mxu0 0.0
    %2925 = vmatprep.subr.mxu0 0.0
    %2926 = vmatpush1.xpose.msra.mxu0 0.0
    %2927 = vmatprep.subr.mxu0 0.0
    %2928 = vmatpush1.xpose.msra.mxu0 0.0
    %2929 = vmatprep.subr.mxu0 0.0
    %2930 = vmatpush1.xpose.msra.mxu0 %v2899
    %2931 = vmatprep.subr.mxu0 0.0
    %2932 = vmatpush1.xpose.msra.mxu0 %v2896
    %2933 = vmatprep.subr.mxu0 0.0
    %2934 = vmatpush2.xpose.msra.mxu0 0.0
    %2935 = vmatprep.subr.mxu0 0.0
    %2936 = vmatpush2.xpose.msra.mxu0 0.0
    %2937 = vmatprep.subr.mxu0 0.0
    %2938 = vmatpush2.xpose.msra.mxu0 0.0
    %2939 = vmatprep.subr.mxu0 0.0
    %2940 = vmatpush2.xpose.msra.mxu0 0.0
    %2941 = vmatprep.subr.mxu0 0.0
    %2942 = vmatpush2.xpose.msra.mxu0 0.0
    %2943 = vmatprep.subr.mxu0 0.0
    %2944 = vmatpush2.xpose.msra.mxu0 0.0
    %2945 = vmatprep.subr.mxu0 0.0
    %2946 = vmatpush2.xpose.msra.mxu0 0.0
    %2947 = vmatprep.subr.mxu0 0.0
    %2948 = vmatpush2.xpose.msra.mxu0 0.0
    %2949 = vmatprep.subr.mxu0 0.0
    %2950 = vmatpush2.xpose.msra.mxu0 0.0
    %2951 = vmatprep.subr.mxu0 0.0
    %2952 = vmatpush2.xpose.msra.mxu0 0.0
    %2953 = vmatprep.subr.mxu0 0.0
    %2954 = vmatpush2.xpose.msra.mxu0 0.0
    %2955 = vmatprep.subr.mxu0 0.0
    %2956 = vmatpush2.xpose.msra.mxu0 0.0
    %2957 = vmatprep.subr.mxu0 0.0
    %2958 = vmatpush2.xpose.msra.mxu0 0.0
    %2959 = vmatprep.subr.mxu0 0.0
    %2960 = vmatpush2.xpose.msra.mxu0 0.0
    %2961 = vmatprep.subr.mxu0 0.0
    %2962 = vmatpush2.xpose.msra.mxu0 0.0
    %2963 = vmatprep.subr.mxu0 0.0
    %2964 = vmatpush2.xpose.msra.mxu0 0.0
    %2965 = vmatprep.mubr.f32.mxu0 0.0
    %2966 = vmatmul.mubr.f32.gmra.mxu0 %v2890
    %v2967 = vpop.f32.mrf.mxu0
    %v2968 = vadd.f32 0.0, %v2967
    %v2969 = vpop.f32.mrf.mxu0
    %2970 = vmatprep.mubr.f32.mxu0 0.0
    %2971 = vmatmul.mubr.f32.gmra.mxu0 %v2893
    %v2972 = vpop.f32.mrf.mxu0
    %v2973 = vadd.f32 0.0, %v2972
    %v2974 = vpop.f32.mrf.mxu0
    %2975 = vdwg.mxu0
    %s2976 = scalar_lea.vmem %s6, 160
    %v2977 = vld [vmem:[%s2976] sm:$0xff]
    %v2978 = vld [vmem:[%s2976 + $0x8] sm:$0xff]
    %v2979 = vld [vmem:[%s2976 + $0x10] sm:$0xff]
    %v2980 = vld [vmem:[%s2976 + $0x18] sm:$0xff]
    %s2981 = scalar_lea.vmem %s7, 160
    %v2982 = vld [vmem:[%s2981] sm:$0xff]
    %v2983 = vld [vmem:[%s2981 + $0x8] sm:$0xff]
    %v2984 = vld [vmem:[%s2981 + $0x10] sm:$0xff]
    %v2985 = vld [vmem:[%s2981 + $0x18] sm:$0xff]
    %2987 = vset.pattern.permute.xlu0 0
    %2988 = vperm.xlu0 %2987, %v2982
    %v2989 = vpop.permute.xlu0 %2988
    %2992 = vset.pattern.permute.xlu0 0
    %2993 = vperm.xlu0 %2992, %v2983
    %v2994 = vpop.permute.xlu0 %2993
    %2997 = vset.pattern.permute.xlu0 0
    %2998 = vperm.xlu0 %2997, %v2984
    %v2999 = vpop.permute.xlu0 %2998
    %3002 = vset.pattern.permute.xlu0 0
    %3003 = vperm.xlu0 %3002, %v2985
    %v3004 = vpop.permute.xlu0 %3003
    %v3007 = vsel %vm357, %v2977, 0
    %v3010 = vsel %vm357, %v2978, 0
    %v3013 = vsel %vm357, %v2979, 0
    %v3016 = vsel %vm357, %v2980, 0
    %3018 = vmatprep.subr.mxu0 0.0
    %3019 = vmatpush1.msra.mxu0 0.0
    %3020 = vmatprep.subr.mxu0 0.0
    %3021 = vmatpush1.msra.mxu0 0.0
    %3022 = vmatprep.subr.mxu0 0.0
    %3023 = vmatpush1.msra.mxu0 0.0
    %3024 = vmatprep.subr.mxu0 0.0
    %3025 = vmatpush1.msra.mxu0 0.0
    %3026 = vmatprep.subr.mxu0 0.0
    %3027 = vmatpush1.msra.mxu0 0.0
    %3028 = vmatprep.subr.mxu0 0.0
    %3029 = vmatpush1.msra.mxu0 0.0
    %3030 = vmatprep.subr.mxu0 0.0
    %3031 = vmatpush1.msra.mxu0 0.0
    %3032 = vmatprep.subr.mxu0 0.0
    %3033 = vmatpush1.msra.mxu0 0.0
    %3034 = vmatprep.subr.mxu0 0.0
    %3035 = vmatpush1.msra.mxu0 0.0
    %3036 = vmatprep.subr.mxu0 0.0
    %3037 = vmatpush1.msra.mxu0 0.0
    %3038 = vmatprep.subr.mxu0 0.0
    %3039 = vmatpush1.msra.mxu0 0.0
    %3040 = vmatprep.subr.mxu0 0.0
    %3041 = vmatpush1.msra.mxu0 0.0
    %3042 = vmatprep.subr.mxu0 0.0
    %3043 = vmatpush1.msra.mxu0 0.0
    %3044 = vmatprep.subr.mxu0 0.0
    %3045 = vmatpush1.msra.mxu0 0.0
    %3046 = vmatprep.subr.mxu0 0.0
    %3047 = vmatpush1.msra.mxu0 %v2973
    %3048 = vmatprep.subr.mxu0 0.0
    %3049 = vmatpush1.msra.mxu0 %v2968
    %3050 = vmatprep.subr.mxu0 0.0
    %3051 = vmatpush2.msra.mxu0 0.0
    %3052 = vmatprep.subr.mxu0 0.0
    %3053 = vmatpush2.msra.mxu0 0.0
    %3054 = vmatprep.subr.mxu0 0.0
    %3055 = vmatpush2.msra.mxu0 0.0
    %3056 = vmatprep.subr.mxu0 0.0
    %3057 = vmatpush2.msra.mxu0 0.0
    %3058 = vmatprep.subr.mxu0 0.0
    %3059 = vmatpush2.msra.mxu0 0.0
    %3060 = vmatprep.subr.mxu0 0.0
    %3061 = vmatpush2.msra.mxu0 0.0
    %3062 = vmatprep.subr.mxu0 0.0
    %3063 = vmatpush2.msra.mxu0 0.0
    %3064 = vmatprep.subr.mxu0 0.0
    %3065 = vmatpush2.msra.mxu0 0.0
    %3066 = vmatprep.subr.mxu0 0.0
    %3067 = vmatpush2.msra.mxu0 0.0
    %3068 = vmatprep.subr.mxu0 0.0
    %3069 = vmatpush2.msra.mxu0 0.0
    %3070 = vmatprep.subr.mxu0 0.0
    %3071 = vmatpush2.msra.mxu0 0.0
    %3072 = vmatprep.subr.mxu0 0.0
    %3073 = vmatpush2.msra.mxu0 0.0
    %3074 = vmatprep.subr.mxu0 0.0
    %3075 = vmatpush2.msra.mxu0 0.0
    %3076 = vmatprep.subr.mxu0 0.0
    %3077 = vmatpush2.msra.mxu0 0.0
    %3078 = vmatprep.subr.mxu0 0.0
    %3079 = vmatpush2.msra.mxu0 0.0
    %3080 = vmatprep.subr.mxu0 0.0
    %3081 = vmatpush2.msra.mxu0 0.0
    %3082 = vmatprep.mubr.f32.mxu0 0.0
    %3083 = vmatmul.mubr.f32.gmra.mxu0 %v3007
    %v3084 = vpop.f32.mrf.mxu0
    %v3085 = vadd.f32 %v2989, %v3084
    %v3086 = vpop.f32.mrf.mxu0
    %3087 = vmatprep.mubr.f32.mxu0 0.0
    %3088 = vmatmul.mubr.f32.gmra.mxu0 %v3010
    %v3089 = vpop.f32.mrf.mxu0
    %v3090 = vadd.f32 %v2994, %v3089
    %v3091 = vpop.f32.mrf.mxu0
    %3092 = vmatprep.mubr.f32.mxu0 0.0
    %3093 = vmatmul.mubr.f32.gmra.mxu0 %v3013
    %v3094 = vpop.f32.mrf.mxu0
    %v3095 = vadd.f32 %v2999, %v3094
    %v3096 = vpop.f32.mrf.mxu0
    %3097 = vmatprep.mubr.f32.mxu0 0.0
    %3098 = vmatmul.mubr.f32.gmra.mxu0 %v3016
    %v3099 = vpop.f32.mrf.mxu0
    %v3100 = vadd.f32 %v3004, %v3099
    %v3101 = vpop.f32.mrf.mxu0
    %3102 = vdwg.mxu0
    %v3103 = vadd.f32 %v3085, %v2613
    %v3104 = vadd.f32 %v3090, %v2614
    %v3105 = vadd.f32 %v3095, %v2615
    %v3106 = vadd.f32 %v3100, %v2616
    %v3107 = vld [vmem:[%s8] sm:$0xff]
    %v3108 = vld [vmem:[%s8 + $0x8] sm:$0xff]
    %v3109 = vld [vmem:[%s8 + $0x10] sm:$0xff]
    %v3110 = vld [vmem:[%s8 + $0x18] sm:$0xff]
    %s3111 = scalar_lea.vmem %s8, 32
    %v3112 = vld [vmem:[%s3111] sm:$0xff]
    %v3113 = vld [vmem:[%s3111 + $0x8] sm:$0xff]
    %v3114 = vld [vmem:[%s3111 + $0x10] sm:$0xff]
    %v3115 = vld [vmem:[%s3111 + $0x18] sm:$0xff]
    %3120 = vrot.lane.b32.xlu0 %v3103, 126
    %v3121 = vpop.permute.xlu0 %3120
    %3122 = vrot.lane.b32.xlu0 %v3104, 126
    %v3123 = vpop.permute.xlu0 %3122
    %3124 = vrot.lane.b32.xlu0 %v3105, 126
    %v3125 = vpop.permute.xlu0 %3124
    %3126 = vrot.lane.b32.xlu0 %v3106, 126
    %v3127 = vpop.permute.xlu0 %3126
    %3132 = vxpose.xlu0.b32.start [1/16] %v3121, 128
    %3133 = vxpose.xlu0.b32.cont [2/16] %v3123, 128
    %3134 = vxpose.xlu0.b32.cont [3/16] %v3125, 128
    %3135 = vxpose.xlu0.b32.cont [4/16] %v3127, 128
    %3136 = vxpose.xlu0.b32.cont [5/16] 0.0, 128
    %3137 = vxpose.xlu0.b32.cont [6/16] 0.0, 128
    %3138 = vxpose.xlu0.b32.cont [7/16] 0.0, 128
    %3139 = vxpose.xlu0.b32.cont [8/16] 0.0, 128
    %3140 = vxpose.xlu0.b32.cont [9/16] 0.0, 128
    %3141 = vxpose.xlu0.b32.cont [10/16] 0.0, 128
    %3142 = vxpose.xlu0.b32.cont [11/16] 0.0, 128
    %3143 = vxpose.xlu0.b32.cont [12/16] 0.0, 128
    %3144 = vxpose.xlu0.b32.cont [13/16] 0.0, 128
    %3145 = vxpose.xlu0.b32.cont [14/16] 0.0, 128
    %3146 = vxpose.xlu0.b32.cont [15/16] 0.0, 128
    %3147 = vxpose.xlu0.b32.end [16/16] 0.0, 128
    %v3148 = vpop.trf.xlu0
    %v3149 = vpop.trf.xlu0
    %v3150 = vpop.trf.xlu0
    %v3151 = vpop.trf.xlu0
    %v3152 = vpop.trf.xlu0
    %v3153 = vpop.trf.xlu0
    %v3154 = vpop.trf.xlu0
    %v3155 = vpop.trf.xlu0
    %v3156 = vpop.trf.xlu0
    %v3157 = vpop.trf.xlu0
    %v3158 = vpop.trf.xlu0
    %v3159 = vpop.trf.xlu0
    %v3160 = vpop.trf.xlu0
    %v3161 = vpop.trf.xlu0
    %v3162 = vpop.trf.xlu0
    %v3163 = vpop.trf.xlu0
    %v3165 = vsel %vm211, %v3148, 0
    %3167 = vmatprep.subr.mxu0 0.0
    %3168 = vmatpush1.msra.mxu0 0.0
    %3169 = vmatprep.subr.mxu0 0.0
    %3170 = vmatpush1.msra.mxu0 0.0
    %3171 = vmatprep.subr.mxu0 0.0
    %3172 = vmatpush1.msra.mxu0 0.0
    %3173 = vmatprep.subr.mxu0 0.0
    %3174 = vmatpush1.msra.mxu0 0.0
    %3175 = vmatprep.subr.mxu0 0.0
    %3176 = vmatpush1.msra.mxu0 0.0
    %3177 = vmatprep.subr.mxu0 0.0
    %3178 = vmatpush1.msra.mxu0 0.0
    %3179 = vmatprep.subr.mxu0 0.0
    %3180 = vmatpush1.msra.mxu0 0.0
    %3181 = vmatprep.subr.mxu0 0.0
    %3182 = vmatpush1.msra.mxu0 0.0
    %3183 = vmatprep.subr.mxu0 0.0
    %3184 = vmatpush1.msra.mxu0 0.0
    %3185 = vmatprep.subr.mxu0 0.0
    %3186 = vmatpush1.msra.mxu0 0.0
    %3187 = vmatprep.subr.mxu0 0.0
    %3188 = vmatpush1.msra.mxu0 0.0
    %3189 = vmatprep.subr.mxu0 0.0
    %3190 = vmatpush1.msra.mxu0 0.0
    %3191 = vmatprep.subr.mxu0 0.0
    %3192 = vmatpush1.msra.mxu0 %v3115
    %3193 = vmatprep.subr.mxu0 0.0
    %3194 = vmatpush1.msra.mxu0 %v3114
    %3195 = vmatprep.subr.mxu0 0.0
    %3196 = vmatpush1.msra.mxu0 %v3113
    %3197 = vmatprep.subr.mxu0 0.0
    %3198 = vmatpush1.msra.mxu0 %v3112
    %3199 = vmatprep.subr.mxu0 0.0
    %3200 = vmatpush2.msra.mxu0 0.0
    %3201 = vmatprep.subr.mxu0 0.0
    %3202 = vmatpush2.msra.mxu0 0.0
    %3203 = vmatprep.subr.mxu0 0.0
    %3204 = vmatpush2.msra.mxu0 0.0
    %3205 = vmatprep.subr.mxu0 0.0
    %3206 = vmatpush2.msra.mxu0 0.0
    %3207 = vmatprep.subr.mxu0 0.0
    %3208 = vmatpush2.msra.mxu0 0.0
    %3209 = vmatprep.subr.mxu0 0.0
    %3210 = vmatpush2.msra.mxu0 0.0
    %3211 = vmatprep.subr.mxu0 0.0
    %3212 = vmatpush2.msra.mxu0 0.0
    %3213 = vmatprep.subr.mxu0 0.0
    %3214 = vmatpush2.msra.mxu0 0.0
    %3215 = vmatprep.subr.mxu0 0.0
    %3216 = vmatpush2.msra.mxu0 0.0
    %3217 = vmatprep.subr.mxu0 0.0
    %3218 = vmatpush2.msra.mxu0 0.0
    %3219 = vmatprep.subr.mxu0 0.0
    %3220 = vmatpush2.msra.mxu0 0.0
    %3221 = vmatprep.subr.mxu0 0.0
    %3222 = vmatpush2.msra.mxu0 0.0
    %3223 = vmatprep.subr.mxu0 0.0
    %3224 = vmatpush2.msra.mxu0 0.0
    %3225 = vmatprep.subr.mxu0 0.0
    %3226 = vmatpush2.msra.mxu0 0.0
    %3227 = vmatprep.subr.mxu0 0.0
    %3228 = vmatpush2.msra.mxu0 0.0
    %3229 = vmatprep.subr.mxu0 0.0
    %3230 = vmatpush2.msra.mxu0 0.0
    %3231 = vmatprep.mubr.f32.mxu0 0.0
    %3232 = vmatmul.mubr.f32.gmra.mxu0 %v3165
    %v3233 = vpop.f32.mrf.mxu0
    %v3234 = vadd.f32 0.0, %v3233
    %v3235 = vpop.f32.mrf.mxu0
    %3236 = vdwg.mxu0
    %3237 = vxpose.xlu0.b32.start [1/16] %v3103, 128
    %3238 = vxpose.xlu0.b32.cont [2/16] %v3104, 128
    %3239 = vxpose.xlu0.b32.cont [3/16] %v3105, 128
    %3240 = vxpose.xlu0.b32.cont [4/16] %v3106, 128
    %3241 = vxpose.xlu0.b32.cont [5/16] 0.0, 128
    %3242 = vxpose.xlu0.b32.cont [6/16] 0.0, 128
    %3243 = vxpose.xlu0.b32.cont [7/16] 0.0, 128
    %3244 = vxpose.xlu0.b32.cont [8/16] 0.0, 128
    %3245 = vxpose.xlu0.b32.cont [9/16] 0.0, 128
    %3246 = vxpose.xlu0.b32.cont [10/16] 0.0, 128
    %3247 = vxpose.xlu0.b32.cont [11/16] 0.0, 128
    %3248 = vxpose.xlu0.b32.cont [12/16] 0.0, 128
    %3249 = vxpose.xlu0.b32.cont [13/16] 0.0, 128
    %3250 = vxpose.xlu0.b32.cont [14/16] 0.0, 128
    %3251 = vxpose.xlu0.b32.cont [15/16] 0.0, 128
    %3252 = vxpose.xlu0.b32.end [16/16] 0.0, 128
    %v3253 = vpop.trf.xlu0
    %v3254 = vpop.trf.xlu0
    %v3255 = vpop.trf.xlu0
    %v3256 = vpop.trf.xlu0
    %v3257 = vpop.trf.xlu0
    %v3258 = vpop.trf.xlu0
    %v3259 = vpop.trf.xlu0
    %v3260 = vpop.trf.xlu0
    %v3261 = vpop.trf.xlu0
    %v3262 = vpop.trf.xlu0
    %v3263 = vpop.trf.xlu0
    %v3264 = vpop.trf.xlu0
    %v3265 = vpop.trf.xlu0
    %v3266 = vpop.trf.xlu0
    %v3267 = vpop.trf.xlu0
    %v3268 = vpop.trf.xlu0
    %v3270 = vsel %vm211, %v3253, 0
    %3272 = vmatprep.subr.mxu0 0.0
    %3273 = vmatpush1.msra.mxu0 0.0
    %3274 = vmatprep.subr.mxu0 0.0
    %3275 = vmatpush1.msra.mxu0 0.0
    %3276 = vmatprep.subr.mxu0 0.0
    %3277 = vmatpush1.msra.mxu0 0.0
    %3278 = vmatprep.subr.mxu0 0.0
    %3279 = vmatpush1.msra.mxu0 0.0
    %3280 = vmatprep.subr.mxu0 0.0
    %3281 = vmatpush1.msra.mxu0 0.0
    %3282 = vmatprep.subr.mxu0 0.0
    %3283 = vmatpush1.msra.mxu0 0.0
    %3284 = vmatprep.subr.mxu0 0.0
    %3285 = vmatpush1.msra.mxu0 0.0
    %3286 = vmatprep.subr.mxu0 0.0
    %3287 = vmatpush1.msra.mxu0 0.0
    %3288 = vmatprep.subr.mxu0 0.0
    %3289 = vmatpush1.msra.mxu0 0.0
    %3290 = vmatprep.subr.mxu0 0.0
    %3291 = vmatpush1.msra.mxu0 0.0
    %3292 = vmatprep.subr.mxu0 0.0
    %3293 = vmatpush1.msra.mxu0 0.0
    %3294 = vmatprep.subr.mxu0 0.0
    %3295 = vmatpush1.msra.mxu0 0.0
    %3296 = vmatprep.subr.mxu0 0.0
    %3297 = vmatpush1.msra.mxu0 %v3110
    %3298 = vmatprep.subr.mxu0 0.0
    %3299 = vmatpush1.msra.mxu0 %v3109
    %3300 = vmatprep.subr.mxu0 0.0
    %3301 = vmatpush1.msra.mxu0 %v3108
    %3302 = vmatprep.subr.mxu0 0.0
    %3303 = vmatpush1.msra.mxu0 %v3107
    %3304 = vmatprep.subr.mxu0 0.0
    %3305 = vmatpush2.msra.mxu0 0.0
    %3306 = vmatprep.subr.mxu0 0.0
    %3307 = vmatpush2.msra.mxu0 0.0
    %3308 = vmatprep.subr.mxu0 0.0
    %3309 = vmatpush2.msra.mxu0 0.0
    %3310 = vmatprep.subr.mxu0 0.0
    %3311 = vmatpush2.msra.mxu0 0.0
    %3312 = vmatprep.subr.mxu0 0.0
    %3313 = vmatpush2.msra.mxu0 0.0
    %3314 = vmatprep.subr.mxu0 0.0
    %3315 = vmatpush2.msra.mxu0 0.0
    %3316 = vmatprep.subr.mxu0 0.0
    %3317 = vmatpush2.msra.mxu0 0.0
    %3318 = vmatprep.subr.mxu0 0.0
    %3319 = vmatpush2.msra.mxu0 0.0
    %3320 = vmatprep.subr.mxu0 0.0
    %3321 = vmatpush2.msra.mxu0 0.0
    %3322 = vmatprep.subr.mxu0 0.0
    %3323 = vmatpush2.msra.mxu0 0.0
    %3324 = vmatprep.subr.mxu0 0.0
    %3325 = vmatpush2.msra.mxu0 0.0
    %3326 = vmatprep.subr.mxu0 0.0
    %3327 = vmatpush2.msra.mxu0 0.0
    %3328 = vmatprep.subr.mxu0 0.0
    %3329 = vmatpush2.msra.mxu0 0.0
    %3330 = vmatprep.subr.mxu0 0.0
    %3331 = vmatpush2.msra.mxu0 0.0
    %3332 = vmatprep.subr.mxu0 0.0
    %3333 = vmatpush2.msra.mxu0 0.0
    %3334 = vmatprep.subr.mxu0 0.0
    %3335 = vmatpush2.msra.mxu0 0.0
    %3336 = vmatprep.mubr.f32.mxu0 0.0
    %3337 = vmatmul.mubr.f32.gmra.mxu0 %v3270
    %v3338 = vpop.f32.mrf.mxu0
    %v3339 = vadd.f32 %v3234, %v3338
    %v3340 = vpop.f32.mrf.mxu0
    %3341 = vdwg.mxu0
    %s3342 = scalar_lea.vmem %s8, 64
    %v3343 = vld [vmem:[%s3342] sm:$0xff]
    %v3344 = vld [vmem:[%s3342 + $0x8] sm:$0xff]
    %v3345 = vld [vmem:[%s3342 + $0x10] sm:$0xff]
    %v3346 = vld [vmem:[%s3342 + $0x18] sm:$0xff]
    %3347 = vrot.lane.b32.xlu0 %v3103, 124
    %v3348 = vpop.permute.xlu0 %3347
    %3349 = vrot.lane.b32.xlu0 %v3104, 124
    %v3350 = vpop.permute.xlu0 %3349
    %3351 = vrot.lane.b32.xlu0 %v3105, 124
    %v3352 = vpop.permute.xlu0 %3351
    %3353 = vrot.lane.b32.xlu0 %v3106, 124
    %v3354 = vpop.permute.xlu0 %3353
    %3359 = vxpose.xlu0.b32.start [1/16] %v3348, 128
    %3360 = vxpose.xlu0.b32.cont [2/16] %v3350, 128
    %3361 = vxpose.xlu0.b32.cont [3/16] %v3352, 128
    %3362 = vxpose.xlu0.b32.cont [4/16] %v3354, 128
    %3363 = vxpose.xlu0.b32.cont [5/16] 0.0, 128
    %3364 = vxpose.xlu0.b32.cont [6/16] 0.0, 128
    %3365 = vxpose.xlu0.b32.cont [7/16] 0.0, 128
    %3366 = vxpose.xlu0.b32.cont [8/16] 0.0, 128
    %3367 = vxpose.xlu0.b32.cont [9/16] 0.0, 128
    %3368 = vxpose.xlu0.b32.cont [10/16] 0.0, 128
    %3369 = vxpose.xlu0.b32.cont [11/16] 0.0, 128
    %3370 = vxpose.xlu0.b32.cont [12/16] 0.0, 128
    %3371 = vxpose.xlu0.b32.cont [13/16] 0.0, 128
    %3372 = vxpose.xlu0.b32.cont [14/16] 0.0, 128
    %3373 = vxpose.xlu0.b32.cont [15/16] 0.0, 128
    %3374 = vxpose.xlu0.b32.end [16/16] 0.0, 128
    %v3375 = vpop.trf.xlu0
    %v3376 = vpop.trf.xlu0
    %v3377 = vpop.trf.xlu0
    %v3378 = vpop.trf.xlu0
    %v3379 = vpop.trf.xlu0
    %v3380 = vpop.trf.xlu0
    %v3381 = vpop.trf.xlu0
    %v3382 = vpop.trf.xlu0
    %v3383 = vpop.trf.xlu0
    %v3384 = vpop.trf.xlu0
    %v3385 = vpop.trf.xlu0
    %v3386 = vpop.trf.xlu0
    %v3387 = vpop.trf.xlu0
    %v3388 = vpop.trf.xlu0
    %v3389 = vpop.trf.xlu0
    %v3390 = vpop.trf.xlu0
    %v3392 = vsel %vm211, %v3375, 0
    %3394 = vmatprep.subr.mxu0 0.0
    %3395 = vmatpush1.msra.mxu0 0.0
    %3396 = vmatprep.subr.mxu0 0.0
    %3397 = vmatpush1.msra.mxu0 0.0
    %3398 = vmatprep.subr.mxu0 0.0
    %3399 = vmatpush1.msra.mxu0 0.0
    %3400 = vmatprep.subr.mxu0 0.0
    %3401 = vmatpush1.msra.mxu0 0.0
    %3402 = vmatprep.subr.mxu0 0.0
    %3403 = vmatpush1.msra.mxu0 0.0
    %3404 = vmatprep.subr.mxu0 0.0
    %3405 = vmatpush1.msra.mxu0 0.0
    %3406 = vmatprep.subr.mxu0 0.0
    %3407 = vmatpush1.msra.mxu0 0.0
    %3408 = vmatprep.subr.mxu0 0.0
    %3409 = vmatpush1.msra.mxu0 0.0
    %3410 = vmatprep.subr.mxu0 0.0
    %3411 = vmatpush1.msra.mxu0 0.0
    %3412 = vmatprep.subr.mxu0 0.0
    %3413 = vmatpush1.msra.mxu0 0.0
    %3414 = vmatprep.subr.mxu0 0.0
    %3415 = vmatpush1.msra.mxu0 0.0
    %3416 = vmatprep.subr.mxu0 0.0
    %3417 = vmatpush1.msra.mxu0 0.0
    %3418 = vmatprep.subr.mxu0 0.0
    %3419 = vmatpush1.msra.mxu0 %v3346
    %3420 = vmatprep.subr.mxu0 0.0
    %3421 = vmatpush1.msra.mxu0 %v3345
    %3422 = vmatprep.subr.mxu0 0.0
    %3423 = vmatpush1.msra.mxu0 %v3344
    %3424 = vmatprep.subr.mxu0 0.0
    %3425 = vmatpush1.msra.mxu0 %v3343
    %3426 = vmatprep.subr.mxu0 0.0
    %3427 = vmatpush2.msra.mxu0 0.0
    %3428 = vmatprep.subr.mxu0 0.0
    %3429 = vmatpush2.msra.mxu0 0.0
    %3430 = vmatprep.subr.mxu0 0.0
    %3431 = vmatpush2.msra.mxu0 0.0
    %3432 = vmatprep.subr.mxu0 0.0
    %3433 = vmatpush2.msra.mxu0 0.0
    %3434 = vmatprep.subr.mxu0 0.0
    %3435 = vmatpush2.msra.mxu0 0.0
    %3436 = vmatprep.subr.mxu0 0.0
    %3437 = vmatpush2.msra.mxu0 0.0
    %3438 = vmatprep.subr.mxu0 0.0
    %3439 = vmatpush2.msra.mxu0 0.0
    %3440 = vmatprep.subr.mxu0 0.0
    %3441 = vmatpush2.msra.mxu0 0.0
    %3442 = vmatprep.subr.mxu0 0.0
    %3443 = vmatpush2.msra.mxu0 0.0
    %3444 = vmatprep.subr.mxu0 0.0
    %3445 = vmatpush2.msra.mxu0 0.0
    %3446 = vmatprep.subr.mxu0 0.0
    %3447 = vmatpush2.msra.mxu0 0.0
    %3448 = vmatprep.subr.mxu0 0.0
    %3449 = vmatpush2.msra.mxu0 0.0
    %3450 = vmatprep.subr.mxu0 0.0
    %3451 = vmatpush2.msra.mxu0 0.0
    %3452 = vmatprep.subr.mxu0 0.0
    %3453 = vmatpush2.msra.mxu0 0.0
    %3454 = vmatprep.subr.mxu0 0.0
    %3455 = vmatpush2.msra.mxu0 0.0
    %3456 = vmatprep.subr.mxu0 0.0
    %3457 = vmatpush2.msra.mxu0 0.0
    %3458 = vmatprep.mubr.f32.mxu0 0.0
    %3459 = vmatmul.mubr.f32.gmra.mxu0 %v3392
    %v3460 = vpop.f32.mrf.mxu0
    %v3461 = vadd.f32 0.0, %v3460
    %v3462 = vpop.f32.mrf.mxu0
    %3463 = vdwg.mxu0
    %v3464 = vadd.f32 %v3339, %v3461
    %s3465 = scalar_lea.vmem %s8, 96
    %v3466 = vld [vmem:[%s3465] sm:$0xff]
    %v3467 = vld [vmem:[%s3465 + $0x8] sm:$0xff]
    %v3468 = vld [vmem:[%s3465 + $0x10] sm:$0xff]
    %v3469 = vld [vmem:[%s3465 + $0x18] sm:$0xff]
    %3470 = vrot.lane.b32.xlu0 %v3103, 122
    %v3471 = vpop.permute.xlu0 %3470
    %3472 = vrot.lane.b32.xlu0 %v3104, 122
    %v3473 = vpop.permute.xlu0 %3472
    %3474 = vrot.lane.b32.xlu0 %v3105, 122
    %v3475 = vpop.permute.xlu0 %3474
    %3476 = vrot.lane.b32.xlu0 %v3106, 122
    %v3477 = vpop.permute.xlu0 %3476
    %3482 = vxpose.xlu0.b32.start [1/16] %v3471, 128
    %3483 = vxpose.xlu0.b32.cont [2/16] %v3473, 128
    %3484 = vxpose.xlu0.b32.cont [3/16] %v3475, 128
    %3485 = vxpose.xlu0.b32.cont [4/16] %v3477, 128
    %3486 = vxpose.xlu0.b32.cont [5/16] 0.0, 128
    %3487 = vxpose.xlu0.b32.cont [6/16] 0.0, 128
    %3488 = vxpose.xlu0.b32.cont [7/16] 0.0, 128
    %3489 = vxpose.xlu0.b32.cont [8/16] 0.0, 128
    %3490 = vxpose.xlu0.b32.cont [9/16] 0.0, 128
    %3491 = vxpose.xlu0.b32.cont [10/16] 0.0, 128
    %3492 = vxpose.xlu0.b32.cont [11/16] 0.0, 128
    %3493 = vxpose.xlu0.b32.cont [12/16] 0.0, 128
    %3494 = vxpose.xlu0.b32.cont [13/16] 0.0, 128
    %3495 = vxpose.xlu0.b32.cont [14/16] 0.0, 128
    %3496 = vxpose.xlu0.b32.cont [15/16] 0.0, 128
    %3497 = vxpose.xlu0.b32.end [16/16] 0.0, 128
    %v3498 = vpop.trf.xlu0
    %v3499 = vpop.trf.xlu0
    %v3500 = vpop.trf.xlu0
    %v3501 = vpop.trf.xlu0
    %v3502 = vpop.trf.xlu0
    %v3503 = vpop.trf.xlu0
    %v3504 = vpop.trf.xlu0
    %v3505 = vpop.trf.xlu0
    %v3506 = vpop.trf.xlu0
    %v3507 = vpop.trf.xlu0
    %v3508 = vpop.trf.xlu0
    %v3509 = vpop.trf.xlu0
    %v3510 = vpop.trf.xlu0
    %v3511 = vpop.trf.xlu0
    %v3512 = vpop.trf.xlu0
    %v3513 = vpop.trf.xlu0
    %v3515 = vsel %vm211, %v3498, 0
    %3517 = vmatprep.subr.mxu0 0.0
    %3518 = vmatpush1.msra.mxu0 0.0
    %3519 = vmatprep.subr.mxu0 0.0
    %3520 = vmatpush1.msra.mxu0 0.0
    %3521 = vmatprep.subr.mxu0 0.0
    %3522 = vmatpush1.msra.mxu0 0.0
    %3523 = vmatprep.subr.mxu0 0.0
    %3524 = vmatpush1.msra.mxu0 0.0
    %3525 = vmatprep.subr.mxu0 0.0
    %3526 = vmatpush1.msra.mxu0 0.0
    %3527 = vmatprep.subr.mxu0 0.0
    %3528 = vmatpush1.msra.mxu0 0.0
    %3529 = vmatprep.subr.mxu0 0.0
    %3530 = vmatpush1.msra.mxu0 0.0
    %3531 = vmatprep.subr.mxu0 0.0
    %3532 = vmatpush1.msra.mxu0 0.0
    %3533 = vmatprep.subr.mxu0 0.0
    %3534 = vmatpush1.msra.mxu0 0.0
    %3535 = vmatprep.subr.mxu0 0.0
    %3536 = vmatpush1.msra.mxu0 0.0
    %3537 = vmatprep.subr.mxu0 0.0
    %3538 = vmatpush1.msra.mxu0 0.0
    %3539 = vmatprep.subr.mxu0 0.0
    %3540 = vmatpush1.msra.mxu0 0.0
    %3541 = vmatprep.subr.mxu0 0.0
    %3542 = vmatpush1.msra.mxu0 %v3469
    %3543 = vmatprep.subr.mxu0 0.0
    %3544 = vmatpush1.msra.mxu0 %v3468
    %3545 = vmatprep.subr.mxu0 0.0
    %3546 = vmatpush1.msra.mxu0 %v3467
    %3547 = vmatprep.subr.mxu0 0.0
    %3548 = vmatpush1.msra.mxu0 %v3466
    %3549 = vmatprep.subr.mxu0 0.0
    %3550 = vmatpush2.msra.mxu0 0.0
    %3551 = vmatprep.subr.mxu0 0.0
    %3552 = vmatpush2.msra.mxu0 0.0
    %3553 = vmatprep.subr.mxu0 0.0
    %3554 = vmatpush2.msra.mxu0 0.0
    %3555 = vmatprep.subr.mxu0 0.0
    %3556 = vmatpush2.msra.mxu0 0.0
    %3557 = vmatprep.subr.mxu0 0.0
    %3558 = vmatpush2.msra.mxu0 0.0
    %3559 = vmatprep.subr.mxu0 0.0
    %3560 = vmatpush2.msra.mxu0 0.0
    %3561 = vmatprep.subr.mxu0 0.0
    %3562 = vmatpush2.msra.mxu0 0.0
    %3563 = vmatprep.subr.mxu0 0.0
    %3564 = vmatpush2.msra.mxu0 0.0
    %3565 = vmatprep.subr.mxu0 0.0
    %3566 = vmatpush2.msra.mxu0 0.0
    %3567 = vmatprep.subr.mxu0 0.0
    %3568 = vmatpush2.msra.mxu0 0.0
    %3569 = vmatprep.subr.mxu0 0.0
    %3570 = vmatpush2.msra.mxu0 0.0
    %3571 = vmatprep.subr.mxu0 0.0
    %3572 = vmatpush2.msra.mxu0 0.0
    %3573 = vmatprep.subr.mxu0 0.0
    %3574 = vmatpush2.msra.mxu0 0.0
    %3575 = vmatprep.subr.mxu0 0.0
    %3576 = vmatpush2.msra.mxu0 0.0
    %3577 = vmatprep.subr.mxu0 0.0
    %3578 = vmatpush2.msra.mxu0 0.0
    %3579 = vmatprep.subr.mxu0 0.0
    %3580 = vmatpush2.msra.mxu0 0.0
    %3581 = vmatprep.mubr.f32.mxu0 0.0
    %3582 = vmatmul.mubr.f32.gmra.mxu0 %v3515
    %v3583 = vpop.f32.mrf.mxu0
    %v3584 = vadd.f32 0.0, %v3583
    %v3585 = vpop.f32.mrf.mxu0
    %3586 = vdwg.mxu0
    %v3587 = vadd.f32 %v3464, %v3584
    %s3588 = scalar_lea.vmem %s8, 128
    %v3589 = vld [vmem:[%s3588] sm:$0xff]
    %v3590 = vld [vmem:[%s3588 + $0x8] sm:$0xff]
    %v3591 = vld [vmem:[%s3588 + $0x10] sm:$0xff]
    %v3592 = vld [vmem:[%s3588 + $0x18] sm:$0xff]
    %3593 = vrot.lane.b32.xlu0 %v3103, 120
    %v3594 = vpop.permute.xlu0 %3593
    %3595 = vrot.lane.b32.xlu0 %v3104, 120
    %v3596 = vpop.permute.xlu0 %3595
    %3597 = vrot.lane.b32.xlu0 %v3105, 120
    %v3598 = vpop.permute.xlu0 %3597
    %3599 = vrot.lane.b32.xlu0 %v3106, 120
    %v3600 = vpop.permute.xlu0 %3599
    %3605 = vxpose.xlu0.b32.start [1/16] %v3594, 128
    %3606 = vxpose.xlu0.b32.cont [2/16] %v3596, 128
    %3607 = vxpose.xlu0.b32.cont [3/16] %v3598, 128
    %3608 = vxpose.xlu0.b32.cont [4/16] %v3600, 128
    %3609 = vxpose.xlu0.b32.cont [5/16] 0.0, 128
    %3610 = vxpose.xlu0.b32.cont [6/16] 0.0, 128
    %3611 = vxpose.xlu0.b32.cont [7/16] 0.0, 128
    %3612 = vxpose.xlu0.b32.cont [8/16] 0.0, 128
    %3613 = vxpose.xlu0.b32.cont [9/16] 0.0, 128
    %3614 = vxpose.xlu0.b32.cont [10/16] 0.0, 128
    %3615 = vxpose.xlu0.b32.cont [11/16] 0.0, 128
    %3616 = vxpose.xlu0.b32.cont [12/16] 0.0, 128
    %3617 = vxpose.xlu0.b32.cont [13/16] 0.0, 128
    %3618 = vxpose.xlu0.b32.cont [14/16] 0.0, 128
    %3619 = vxpose.xlu0.b32.cont [15/16] 0.0, 128
    %3620 = vxpose.xlu0.b32.end [16/16] 0.0, 128
    %v3621 = vpop.trf.xlu0
    %v3622 = vpop.trf.xlu0
    %v3623 = vpop.trf.xlu0
    %v3624 = vpop.trf.xlu0
    %v3625 = vpop.trf.xlu0
    %v3626 = vpop.trf.xlu0
    %v3627 = vpop.trf.xlu0
    %v3628 = vpop.trf.xlu0
    %v3629 = vpop.trf.xlu0
    %v3630 = vpop.trf.xlu0
    %v3631 = vpop.trf.xlu0
    %v3632 = vpop.trf.xlu0
    %v3633 = vpop.trf.xlu0
    %v3634 = vpop.trf.xlu0
    %v3635 = vpop.trf.xlu0
    %v3636 = vpop.trf.xlu0
    %v3638 = vsel %vm211, %v3621, 0
    %3640 = vmatprep.subr.mxu0 0.0
    %3641 = vmatpush1.msra.mxu0 0.0
    %3642 = vmatprep.subr.mxu0 0.0
    %3643 = vmatpush1.msra.mxu0 0.0
    %3644 = vmatprep.subr.mxu0 0.0
    %3645 = vmatpush1.msra.mxu0 0.0
    %3646 = vmatprep.subr.mxu0 0.0
    %3647 = vmatpush1.msra.mxu0 0.0
    %3648 = vmatprep.subr.mxu0 0.0
    %3649 = vmatpush1.msra.mxu0 0.0
    %3650 = vmatprep.subr.mxu0 0.0
    %3651 = vmatpush1.msra.mxu0 0.0
    %3652 = vmatprep.subr.mxu0 0.0
    %3653 = vmatpush1.msra.mxu0 0.0
    %3654 = vmatprep.subr.mxu0 0.0
    %3655 = vmatpush1.msra.mxu0 0.0
    %3656 = vmatprep.subr.mxu0 0.0
    %3657 = vmatpush1.msra.mxu0 0.0
    %3658 = vmatprep.subr.mxu0 0.0
    %3659 = vmatpush1.msra.mxu0 0.0
    %3660 = vmatprep.subr.mxu0 0.0
    %3661 = vmatpush1.msra.mxu0 0.0
    %3662 = vmatprep.subr.mxu0 0.0
    %3663 = vmatpush1.msra.mxu0 0.0
    %3664 = vmatprep.subr.mxu0 0.0
    %3665 = vmatpush1.msra.mxu0 %v3592
    %3666 = vmatprep.subr.mxu0 0.0
    %3667 = vmatpush1.msra.mxu0 %v3591
    %3668 = vmatprep.subr.mxu0 0.0
    %3669 = vmatpush1.msra.mxu0 %v3590
    %3670 = vmatprep.subr.mxu0 0.0
    %3671 = vmatpush1.msra.mxu0 %v3589
    %3672 = vmatprep.subr.mxu0 0.0
    %3673 = vmatpush2.msra.mxu0 0.0
    %3674 = vmatprep.subr.mxu0 0.0
    %3675 = vmatpush2.msra.mxu0 0.0
    %3676 = vmatprep.subr.mxu0 0.0
    %3677 = vmatpush2.msra.mxu0 0.0
    %3678 = vmatprep.subr.mxu0 0.0
    %3679 = vmatpush2.msra.mxu0 0.0
    %3680 = vmatprep.subr.mxu0 0.0
    %3681 = vmatpush2.msra.mxu0 0.0
    %3682 = vmatprep.subr.mxu0 0.0
    %3683 = vmatpush2.msra.mxu0 0.0
    %3684 = vmatprep.subr.mxu0 0.0
    %3685 = vmatpush2.msra.mxu0 0.0
    %3686 = vmatprep.subr.mxu0 0.0
    %3687 = vmatpush2.msra.mxu0 0.0
    %3688 = vmatprep.subr.mxu0 0.0
    %3689 = vmatpush2.msra.mxu0 0.0
    %3690 = vmatprep.subr.mxu0 0.0
    %3691 = vmatpush2.msra.mxu0 0.0
    %3692 = vmatprep.subr.mxu0 0.0
    %3693 = vmatpush2.msra.mxu0 0.0
    %3694 = vmatprep.subr.mxu0 0.0
    %3695 = vmatpush2.msra.mxu0 0.0
    %3696 = vmatprep.subr.mxu0 0.0
    %3697 = vmatpush2.msra.mxu0 0.0
    %3698 = vmatprep.subr.mxu0 0.0
    %3699 = vmatpush2.msra.mxu0 0.0
    %3700 = vmatprep.subr.mxu0 0.0
    %3701 = vmatpush2.msra.mxu0 0.0
    %3702 = vmatprep.subr.mxu0 0.0
    %3703 = vmatpush2.msra.mxu0 0.0
    %3704 = vmatprep.mubr.f32.mxu0 0.0
    %3705 = vmatmul.mubr.f32.gmra.mxu0 %v3638
    %v3706 = vpop.f32.mrf.mxu0
    %v3707 = vadd.f32 0.0, %v3706
    %v3708 = vpop.f32.mrf.mxu0
    %3709 = vdwg.mxu0
    %v3710 = vadd.f32 %v3587, %v3707
    %s3711 = scalar_lea.vmem %s8, 160
    %v3712 = vld [vmem:[%s3711] sm:$0xff]
    %v3713 = vld [vmem:[%s3711 + $0x8] sm:$0xff]
    %v3714 = vld [vmem:[%s3711 + $0x10] sm:$0xff]
    %v3715 = vld [vmem:[%s3711 + $0x18] sm:$0xff]
    %3716 = vrot.lane.b32.xlu0 %v3103, 118
    %v3717 = vpop.permute.xlu0 %3716
    %3718 = vrot.lane.b32.xlu0 %v3104, 118
    %v3719 = vpop.permute.xlu0 %3718
    %3720 = vrot.lane.b32.xlu0 %v3105, 118
    %v3721 = vpop.permute.xlu0 %3720
    %3722 = vrot.lane.b32.xlu0 %v3106, 118
    %v3723 = vpop.permute.xlu0 %3722
    %3728 = vxpose.xlu0.b32.start [1/16] %v3717, 128
    %3729 = vxpose.xlu0.b32.cont [2/16] %v3719, 128
    %3730 = vxpose.xlu0.b32.cont [3/16] %v3721, 128
    %3731 = vxpose.xlu0.b32.cont [4/16] %v3723, 128
    %3732 = vxpose.xlu0.b32.cont [5/16] 0.0, 128
    %3733 = vxpose.xlu0.b32.cont [6/16] 0.0, 128
    %3734 = vxpose.xlu0.b32.cont [7/16] 0.0, 128
    %3735 = vxpose.xlu0.b32.cont [8/16] 0.0, 128
    %3736 = vxpose.xlu0.b32.cont [9/16] 0.0, 128
    %3737 = vxpose.xlu0.b32.cont [10/16] 0.0, 128
    %3738 = vxpose.xlu0.b32.cont [11/16] 0.0, 128
    %3739 = vxpose.xlu0.b32.cont [12/16] 0.0, 128
    %3740 = vxpose.xlu0.b32.cont [13/16] 0.0, 128
    %3741 = vxpose.xlu0.b32.cont [14/16] 0.0, 128
    %3742 = vxpose.xlu0.b32.cont [15/16] 0.0, 128
    %3743 = vxpose.xlu0.b32.end [16/16] 0.0, 128
    %v3744 = vpop.trf.xlu0
    %v3745 = vpop.trf.xlu0
    %v3746 = vpop.trf.xlu0
    %v3747 = vpop.trf.xlu0
    %v3748 = vpop.trf.xlu0
    %v3749 = vpop.trf.xlu0
    %v3750 = vpop.trf.xlu0
    %v3751 = vpop.trf.xlu0
    %v3752 = vpop.trf.xlu0
    %v3753 = vpop.trf.xlu0
    %v3754 = vpop.trf.xlu0
    %v3755 = vpop.trf.xlu0
    %v3756 = vpop.trf.xlu0
    %v3757 = vpop.trf.xlu0
    %v3758 = vpop.trf.xlu0
    %v3759 = vpop.trf.xlu0
    %v3761 = vsel %vm211, %v3744, 0
    %3763 = vmatprep.subr.mxu0 0.0
    %3764 = vmatpush1.msra.mxu0 0.0
    %3765 = vmatprep.subr.mxu0 0.0
    %3766 = vmatpush1.msra.mxu0 0.0
    %3767 = vmatprep.subr.mxu0 0.0
    %3768 = vmatpush1.msra.mxu0 0.0
    %3769 = vmatprep.subr.mxu0 0.0
    %3770 = vmatpush1.msra.mxu0 0.0
    %3771 = vmatprep.subr.mxu0 0.0
    %3772 = vmatpush1.msra.mxu0 0.0
    %3773 = vmatprep.subr.mxu0 0.0
    %3774 = vmatpush1.msra.mxu0 0.0
    %3775 = vmatprep.subr.mxu0 0.0
    %3776 = vmatpush1.msra.mxu0 0.0
    %3777 = vmatprep.subr.mxu0 0.0
    %3778 = vmatpush1.msra.mxu0 0.0
    %3779 = vmatprep.subr.mxu0 0.0
    %3780 = vmatpush1.msra.mxu0 0.0
    %3781 = vmatprep.subr.mxu0 0.0
    %3782 = vmatpush1.msra.mxu0 0.0
    %3783 = vmatprep.subr.mxu0 0.0
    %3784 = vmatpush1.msra.mxu0 0.0
    %3785 = vmatprep.subr.mxu0 0.0
    %3786 = vmatpush1.msra.mxu0 0.0
    %3787 = vmatprep.subr.mxu0 0.0
    %3788 = vmatpush1.msra.mxu0 %v3715
    %3789 = vmatprep.subr.mxu0 0.0
    %3790 = vmatpush1.msra.mxu0 %v3714
    %3791 = vmatprep.subr.mxu0 0.0
    %3792 = vmatpush1.msra.mxu0 %v3713
    %3793 = vmatprep.subr.mxu0 0.0
    %3794 = vmatpush1.msra.mxu0 %v3712
    %3795 = vmatprep.subr.mxu0 0.0
    %3796 = vmatpush2.msra.mxu0 0.0
    %3797 = vmatprep.subr.mxu0 0.0
    %3798 = vmatpush2.msra.mxu0 0.0
    %3799 = vmatprep.subr.mxu0 0.0
    %3800 = vmatpush2.msra.mxu0 0.0
    %3801 = vmatprep.subr.mxu0 0.0
    %3802 = vmatpush2.msra.mxu0 0.0
    %3803 = vmatprep.subr.mxu0 0.0
    %3804 = vmatpush2.msra.mxu0 0.0
    %3805 = vmatprep.subr.mxu0 0.0
    %3806 = vmatpush2.msra.mxu0 0.0
    %3807 = vmatprep.subr.mxu0 0.0
    %3808 = vmatpush2.msra.mxu0 0.0
    %3809 = vmatprep.subr.mxu0 0.0
    %3810 = vmatpush2.msra.mxu0 0.0
    %3811 = vmatprep.subr.mxu0 0.0
    %3812 = vmatpush2.msra.mxu0 0.0
    %3813 = vmatprep.subr.mxu0 0.0
    %3814 = vmatpush2.msra.mxu0 0.0
    %3815 = vmatprep.subr.mxu0 0.0
    %3816 = vmatpush2.msra.mxu0 0.0
    %3817 = vmatprep.subr.mxu0 0.0
    %3818 = vmatpush2.msra.mxu0 0.0
    %3819 = vmatprep.subr.mxu0 0.0
    %3820 = vmatpush2.msra.mxu0 0.0
    %3821 = vmatprep.subr.mxu0 0.0
    %3822 = vmatpush2.msra.mxu0 0.0
    %3823 = vmatprep.subr.mxu0 0.0
    %3824 = vmatpush2.msra.mxu0 0.0
    %3825 = vmatprep.subr.mxu0 0.0
    %3826 = vmatpush2.msra.mxu0 0.0
    %3827 = vmatprep.mubr.f32.mxu0 0.0
    %3828 = vmatmul.mubr.f32.gmra.mxu0 %v3761
    %v3829 = vpop.f32.mrf.mxu0
    %v3830 = vadd.f32 0.0, %v3829
    %v3831 = vpop.f32.mrf.mxu0
    %3832 = vdwg.mxu0
    %v3833 = vadd.f32 %v3710, %v3830
    %s3834 = scalar_lea.vmem %s8, 192
    %v3835 = vld [vmem:[%s3834] sm:$0xff]
    %v3836 = vld [vmem:[%s3834 + $0x8] sm:$0xff]
    %v3837 = vld [vmem:[%s3834 + $0x10] sm:$0xff]
    %v3838 = vld [vmem:[%s3834 + $0x18] sm:$0xff]
    %3839 = vrot.lane.b32.xlu0 %v3103, 116
    %v3840 = vpop.permute.xlu0 %3839
    %3841 = vrot.lane.b32.xlu0 %v3104, 116
    %v3842 = vpop.permute.xlu0 %3841
    %3843 = vrot.lane.b32.xlu0 %v3105, 116
    %v3844 = vpop.permute.xlu0 %3843
    %3845 = vrot.lane.b32.xlu0 %v3106, 116
    %v3846 = vpop.permute.xlu0 %3845
    %3851 = vxpose.xlu0.b32.start [1/16] %v3840, 128
    %3852 = vxpose.xlu0.b32.cont [2/16] %v3842, 128
    %3853 = vxpose.xlu0.b32.cont [3/16] %v3844, 128
    %3854 = vxpose.xlu0.b32.cont [4/16] %v3846, 128
    %3855 = vxpose.xlu0.b32.cont [5/16] 0.0, 128
    %3856 = vxpose.xlu0.b32.cont [6/16] 0.0, 128
    %3857 = vxpose.xlu0.b32.cont [7/16] 0.0, 128
    %3858 = vxpose.xlu0.b32.cont [8/16] 0.0, 128
    %3859 = vxpose.xlu0.b32.cont [9/16] 0.0, 128
    %3860 = vxpose.xlu0.b32.cont [10/16] 0.0, 128
    %3861 = vxpose.xlu0.b32.cont [11/16] 0.0, 128
    %3862 = vxpose.xlu0.b32.cont [12/16] 0.0, 128
    %3863 = vxpose.xlu0.b32.cont [13/16] 0.0, 128
    %3864 = vxpose.xlu0.b32.cont [14/16] 0.0, 128
    %3865 = vxpose.xlu0.b32.cont [15/16] 0.0, 128
    %3866 = vxpose.xlu0.b32.end [16/16] 0.0, 128
    %v3867 = vpop.trf.xlu0
    %v3868 = vpop.trf.xlu0
    %v3869 = vpop.trf.xlu0
    %v3870 = vpop.trf.xlu0
    %v3871 = vpop.trf.xlu0
    %v3872 = vpop.trf.xlu0
    %v3873 = vpop.trf.xlu0
    %v3874 = vpop.trf.xlu0
    %v3875 = vpop.trf.xlu0
    %v3876 = vpop.trf.xlu0
    %v3877 = vpop.trf.xlu0
    %v3878 = vpop.trf.xlu0
    %v3879 = vpop.trf.xlu0
    %v3880 = vpop.trf.xlu0
    %v3881 = vpop.trf.xlu0
    %v3882 = vpop.trf.xlu0
    %v3884 = vsel %vm211, %v3867, 0
    %3886 = vmatprep.subr.mxu0 0.0
    %3887 = vmatpush1.msra.mxu0 0.0
    %3888 = vmatprep.subr.mxu0 0.0
    %3889 = vmatpush1.msra.mxu0 0.0
    %3890 = vmatprep.subr.mxu0 0.0
    %3891 = vmatpush1.msra.mxu0 0.0
    %3892 = vmatprep.subr.mxu0 0.0
    %3893 = vmatpush1.msra.mxu0 0.0
    %3894 = vmatprep.subr.mxu0 0.0
    %3895 = vmatpush1.msra.mxu0 0.0
    %3896 = vmatprep.subr.mxu0 0.0
    %3897 = vmatpush1.msra.mxu0 0.0
    %3898 = vmatprep.subr.mxu0 0.0
    %3899 = vmatpush1.msra.mxu0 0.0
    %3900 = vmatprep.subr.mxu0 0.0
    %3901 = vmatpush1.msra.mxu0 0.0
    %3902 = vmatprep.subr.mxu0 0.0
    %3903 = vmatpush1.msra.mxu0 0.0
    %3904 = vmatprep.subr.mxu0 0.0
    %3905 = vmatpush1.msra.mxu0 0.0
    %3906 = vmatprep.subr.mxu0 0.0
    %3907 = vmatpush1.msra.mxu0 0.0
    %3908 = vmatprep.subr.mxu0 0.0
    %3909 = vmatpush1.msra.mxu0 0.0
    %3910 = vmatprep.subr.mxu0 0.0
    %3911 = vmatpush1.msra.mxu0 %v3838
    %3912 = vmatprep.subr.mxu0 0.0
    %3913 = vmatpush1.msra.mxu0 %v3837
    %3914 = vmatprep.subr.mxu0 0.0
    %3915 = vmatpush1.msra.mxu0 %v3836
    %3916 = vmatprep.subr.mxu0 0.0
    %3917 = vmatpush1.msra.mxu0 %v3835
    %3918 = vmatprep.subr.mxu0 0.0
    %3919 = vmatpush2.msra.mxu0 0.0
    %3920 = vmatprep.subr.mxu0 0.0
    %3921 = vmatpush2.msra.mxu0 0.0
    %3922 = vmatprep.subr.mxu0 0.0
    %3923 = vmatpush2.msra.mxu0 0.0
    %3924 = vmatprep.subr.mxu0 0.0
    %3925 = vmatpush2.msra.mxu0 0.0
    %3926 = vmatprep.subr.mxu0 0.0
    %3927 = vmatpush2.msra.mxu0 0.0
    %3928 = vmatprep.subr.mxu0 0.0
    %3929 = vmatpush2.msra.mxu0 0.0
    %3930 = vmatprep.subr.mxu0 0.0
    %3931 = vmatpush2.msra.mxu0 0.0
    %3932 = vmatprep.subr.mxu0 0.0
    %3933 = vmatpush2.msra.mxu0 0.0
    %3934 = vmatprep.subr.mxu0 0.0
    %3935 = vmatpush2.msra.mxu0 0.0
    %3936 = vmatprep.subr.mxu0 0.0
    %3937 = vmatpush2.msra.mxu0 0.0
    %3938 = vmatprep.subr.mxu0 0.0
    %3939 = vmatpush2.msra.mxu0 0.0
    %3940 = vmatprep.subr.mxu0 0.0
    %3941 = vmatpush2.msra.mxu0 0.0
    %3942 = vmatprep.subr.mxu0 0.0
    %3943 = vmatpush2.msra.mxu0 0.0
    %3944 = vmatprep.subr.mxu0 0.0
    %3945 = vmatpush2.msra.mxu0 0.0
    %3946 = vmatprep.subr.mxu0 0.0
    %3947 = vmatpush2.msra.mxu0 0.0
    %3948 = vmatprep.subr.mxu0 0.0
    %3949 = vmatpush2.msra.mxu0 0.0
    %3950 = vmatprep.mubr.f32.mxu0 0.0
    %3951 = vmatmul.mubr.f32.gmra.mxu0 %v3884
    %v3952 = vpop.f32.mrf.mxu0
    %v3953 = vadd.f32 0.0, %v3952
    %v3954 = vpop.f32.mrf.mxu0
    %3955 = vdwg.mxu0
    %v3956 = vadd.f32 %v3833, %v3953
    %s3957 = scalar_lea.vmem %s8, 224
    %v3958 = vld [vmem:[%s3957] sm:$0xff]
    %v3959 = vld [vmem:[%s3957 + $0x8] sm:$0xff]
    %v3960 = vld [vmem:[%s3957 + $0x10] sm:$0xff]
    %v3961 = vld [vmem:[%s3957 + $0x18] sm:$0xff]
    %3962 = vrot.lane.b32.xlu0 %v3103, 114
    %v3963 = vpop.permute.xlu0 %3962
    %3964 = vrot.lane.b32.xlu0 %v3104, 114
    %v3965 = vpop.permute.xlu0 %3964
    %3966 = vrot.lane.b32.xlu0 %v3105, 114
    %v3967 = vpop.permute.xlu0 %3966
    %3968 = vrot.lane.b32.xlu0 %v3106, 114
    %v3969 = vpop.permute.xlu0 %3968
    %3974 = vxpose.xlu0.b32.start [1/16] %v3963, 128
    %3975 = vxpose.xlu0.b32.cont [2/16] %v3965, 128
    %3976 = vxpose.xlu0.b32.cont [3/16] %v3967, 128
    %3977 = vxpose.xlu0.b32.cont [4/16] %v3969, 128
    %3978 = vxpose.xlu0.b32.cont [5/16] 0.0, 128
    %3979 = vxpose.xlu0.b32.cont [6/16] 0.0, 128
    %3980 = vxpose.xlu0.b32.cont [7/16] 0.0, 128
    %3981 = vxpose.xlu0.b32.cont [8/16] 0.0, 128
    %3982 = vxpose.xlu0.b32.cont [9/16] 0.0, 128
    %3983 = vxpose.xlu0.b32.cont [10/16] 0.0, 128
    %3984 = vxpose.xlu0.b32.cont [11/16] 0.0, 128
    %3985 = vxpose.xlu0.b32.cont [12/16] 0.0, 128
    %3986 = vxpose.xlu0.b32.cont [13/16] 0.0, 128
    %3987 = vxpose.xlu0.b32.cont [14/16] 0.0, 128
    %3988 = vxpose.xlu0.b32.cont [15/16] 0.0, 128
    %3989 = vxpose.xlu0.b32.end [16/16] 0.0, 128
    %v3990 = vpop.trf.xlu0
    %v3991 = vpop.trf.xlu0
    %v3992 = vpop.trf.xlu0
    %v3993 = vpop.trf.xlu0
    %v3994 = vpop.trf.xlu0
    %v3995 = vpop.trf.xlu0
    %v3996 = vpop.trf.xlu0
    %v3997 = vpop.trf.xlu0
    %v3998 = vpop.trf.xlu0
    %v3999 = vpop.trf.xlu0
    %v4000 = vpop.trf.xlu0
    %v4001 = vpop.trf.xlu0
    %v4002 = vpop.trf.xlu0
    %v4003 = vpop.trf.xlu0
    %v4004 = vpop.trf.xlu0
    %v4005 = vpop.trf.xlu0
    %v4007 = vsel %vm211, %v3990, 0
    %4009 = vmatprep.subr.mxu0 0.0
    %4010 = vmatpush1.msra.mxu0 0.0
    %4011 = vmatprep.subr.mxu0 0.0
    %4012 = vmatpush1.msra.mxu0 0.0
    %4013 = vmatprep.subr.mxu0 0.0
    %4014 = vmatpush1.msra.mxu0 0.0
    %4015 = vmatprep.subr.mxu0 0.0
    %4016 = vmatpush1.msra.mxu0 0.0
    %4017 = vmatprep.subr.mxu0 0.0
    %4018 = vmatpush1.msra.mxu0 0.0
    %4019 = vmatprep.subr.mxu0 0.0
    %4020 = vmatpush1.msra.mxu0 0.0
    %4021 = vmatprep.subr.mxu0 0.0
    %4022 = vmatpush1.msra.mxu0 0.0
    %4023 = vmatprep.subr.mxu0 0.0
    %4024 = vmatpush1.msra.mxu0 0.0
    %4025 = vmatprep.subr.mxu0 0.0
    %4026 = vmatpush1.msra.mxu0 0.0
    %4027 = vmatprep.subr.mxu0 0.0
    %4028 = vmatpush1.msra.mxu0 0.0
    %4029 = vmatprep.subr.mxu0 0.0
    %4030 = vmatpush1.msra.mxu0 0.0
    %4031 = vmatprep.subr.mxu0 0.0
    %4032 = vmatpush1.msra.mxu0 0.0
    %4033 = vmatprep.subr.mxu0 0.0
    %4034 = vmatpush1.msra.mxu0 %v3961
    %4035 = vmatprep.subr.mxu0 0.0
    %4036 = vmatpush1.msra.mxu0 %v3960
    %4037 = vmatprep.subr.mxu0 0.0
    %4038 = vmatpush1.msra.mxu0 %v3959
    %4039 = vmatprep.subr.mxu0 0.0
    %4040 = vmatpush1.msra.mxu0 %v3958
    %4041 = vmatprep.subr.mxu0 0.0
    %4042 = vmatpush2.msra.mxu0 0.0
    %4043 = vmatprep.subr.mxu0 0.0
    %4044 = vmatpush2.msra.mxu0 0.0
    %4045 = vmatprep.subr.mxu0 0.0
    %4046 = vmatpush2.msra.mxu0 0.0
    %4047 = vmatprep.subr.mxu0 0.0
    %4048 = vmatpush2.msra.mxu0 0.0
    %4049 = vmatprep.subr.mxu0 0.0
    %4050 = vmatpush2.msra.mxu0 0.0
    %4051 = vmatprep.subr.mxu0 0.0
    %4052 = vmatpush2.msra.mxu0 0.0
    %4053 = vmatprep.subr.mxu0 0.0
    %4054 = vmatpush2.msra.mxu0 0.0
    %4055 = vmatprep.subr.mxu0 0.0
    %4056 = vmatpush2.msra.mxu0 0.0
    %4057 = vmatprep.subr.mxu0 0.0
    %4058 = vmatpush2.msra.mxu0 0.0
    %4059 = vmatprep.subr.mxu0 0.0
    %4060 = vmatpush2.msra.mxu0 0.0
    %4061 = vmatprep.subr.mxu0 0.0
    %4062 = vmatpush2.msra.mxu0 0.0
    %4063 = vmatprep.subr.mxu0 0.0
    %4064 = vmatpush2.msra.mxu0 0.0
    %4065 = vmatprep.subr.mxu0 0.0
    %4066 = vmatpush2.msra.mxu0 0.0
    %4067 = vmatprep.subr.mxu0 0.0
    %4068 = vmatpush2.msra.mxu0 0.0
    %4069 = vmatprep.subr.mxu0 0.0
    %4070 = vmatpush2.msra.mxu0 0.0
    %4071 = vmatprep.subr.mxu0 0.0
    %4072 = vmatpush2.msra.mxu0 0.0
    %4073 = vmatprep.mubr.f32.mxu0 0.0
    %4074 = vmatmul.mubr.f32.gmra.mxu0 %v4007
    %v4075 = vpop.f32.mrf.mxu0
    %v4076 = vadd.f32 0.0, %v4075
    %v4077 = vpop.f32.mrf.mxu0
    %4078 = vdwg.mxu0
    %v4079 = vadd.f32 %v3956, %v4076
    %v4080 = vld [vmem:[%s9] sm:$0x1]
    %v4082 = vlaneseq
    %v4083 = vshrl.u32 %v4082, 7
    %v4084 = vsub.s32 0, %v4083
    %v4085 = vrot.slane %v4080, %v4084
    %v4087 = vadd.f32 %v4079, %v4085
    %vm4088 = vcmask 123904
    %v4089 = vsel %vm4088, %v4087, -inf
    %4090 = vmax.xlane.f32.xlu0 %v4089
    %v4091 = vpop.xlane.xlu0 %4090
    %v4092 = vsub.f32 %v4087, %v4091
    %v4093 = vmul.f32 %v4092, 1.442695
    %v4094 = vpow.pop %v4093
    %v4095 = vsel %vm4088, %v4094, 0.0
    %4096 = vadd.xlane.f32.xlu0 %v4095
    %v4097 = vpop.xlane.xlu0 %4096
    %v4098 = vrcp.pop %v4097
    %v4099 = vmul.f32 %v4094, %v4098
    %4100 = vst.msk [vmem:[#allocation2] sm:$0x3] %vm4088, %v4099
    // Predicated region
    $region42: #{tpu_custom_call.1} parent=1 // pred_check
      _
    $region43: #{tpu_custom_call.1} parent=1 // pred_check_branch
      %4102 = sbr.rel (0) target = $region45
    $region44: #{tpu_custom_call.1} parent=1 // pred_region
      %s4104 = ssub.s32 32, 32
      %4105 = vsyncadd [#allocation3], %s4104
      %s4107 = sshll.u32 [#allocation2], 4
      %s4108 = int_to_ptr.vmem [resolvable:$true] %s4107
      %4110 = dma.vmem_to_hbm [thread:$0]  %s4108, 32, %s10, [#allocation3]
    $region45: #{tpu_custom_call.1} parent=1 // pred_fallthru
      _
    // Predicated region
    $region46: #{tpu_custom_call.1} parent=1 // pred_check
      _
    $region47: #{tpu_custom_call.1} parent=1 // pred_check_branch
      %4112 = sbr.rel (0) target = $region49
    $region48: #{tpu_custom_call.1} parent=1 // pred_region
      %4113 = dma.done [#allocation3], 32
    $region49: #{tpu_custom_call.1} parent=1 // pred_fallthru
      _
    %4114 = vsyncpa [#allocation3], 1

</llo_original>
